<compile_context>
chip_gen: v7x
topology: tpu7x:2x2x1
jax: 0.10.0
libtpu: 0.0.40
codegen_flags: <defaults>
</compile_context>

<pallas_src>
import jax
import jax.numpy as jnp
from jax import lax
from jax.experimental import pallas as pl
from jax.experimental.pallas import tpu as pltpu

NEG_SLOPE = 0.01   # nn.LeakyReLU default
GN_EPS = 1e-5      # pyg.nn.GraphNorm default eps


def _leaky(v):
    return jnp.where(v > 0, v, NEG_SLOPE * v)


def _graph_norm(v, w, b, a):
    # PyG GraphNorm with batch=None (all nodes of this forward call are one graph):
    #   out = (x - mean_scale*mean(x)) * (weight * rsqrt(var + eps)) + bias
    # One-pass fused statistics: the two sums co-issue on the VALU slots and
    # the (exact) identity var = E[v^2] - (2a - a^2)*mean^2 avoids a second
    # axis-0 reduce over the centered tile. Kept entirely in f32.
    inv_n = 1.0 / v.shape[0]
    s1 = jnp.sum(v, axis=0, keepdims=True)
    s2 = jnp.sum(v * v, axis=0, keepdims=True)
    mean = s1 * inv_n
    var = s2 * inv_n - (2.0 * a - a * a) * (mean * mean)
    scale = w * lax.rsqrt(var + GN_EPS)          # EUP rsqrt, weight fused in
    return (v - a * mean) * scale + b


def gin_kernel(x_ref, adjp_ref, pool_ref,
               w1_ref, b1_ref, w2_ref, b2_ref,
               gni_w_ref, gni_b_ref, gni_a_ref,
               gno_w_ref, gno_b_ref, gno_a_ref,
               wh1_ref, bh1_ref, wh2_ref, bh2_ref,
               out_ref):
    adjp = adjp_ref[...]                 # bf16 [N, N], residual already folded in
    h = x_ref[...]                       # bf16 [N, H]
    n_layers = w1_ref.shape[0]
    for i in range(n_layers):            # static (unrolled) layer loop
        # GINConv aggregation: adj_plus @ h == (1+eps)*x_i + sum_{j->i} x_j
        agg = jnp.dot(adjp, h, preferred_element_type=jnp.float32)
        # GINConv internal MLP: Linear -> GraphNorm -> LeakyReLU -> Linear
        z = jnp.dot(agg.astype(jnp.bfloat16), w1_ref[i],
                    preferred_element_type=jnp.float32) + b1_ref[i]
        z = _graph_norm(z, gni_w_ref[i], gni_b_ref[i], gni_a_ref[i])
        z = _leaky(z)
        z = jnp.dot(z.astype(jnp.bfloat16), w2_ref[i],
                    preferred_element_type=jnp.float32) + b2_ref[i]
        if i < n_layers - 1:
            # BasicGNN per-layer norm + act (skipped on the last layer)
            z = _graph_norm(z, gno_w_ref[i], gno_b_ref[i], gno_a_ref[i])
            z = _leaky(z)
        h = z.astype(jnp.bfloat16)
    # global_add_pool: sum node features per graph
    pooled = jnp.dot(pool_ref[...], h, preferred_element_type=jnp.float32)
    # head: Linear -> LeakyReLU -> Linear (output padded to 128 lanes)
    y = _leaky(jnp.dot(pooled.astype(jnp.bfloat16), wh1_ref[...],
                       preferred_element_type=jnp.float32) + bh1_ref[...])
    out_ref[...] = (jnp.dot(y.astype(jnp.bfloat16), wh2_ref[...],
                            preferred_element_type=jnp.float32) + bh2_ref[...])


def build_graph_operands(x, edge_index, batch, num_graphs, hidden):
    """Graph-structure operands for ONE forward call; cache when static."""
    n_nodes, n_feat = x.shape
    assert n_feat <= hidden, "num_node_features must be <= hidden_size"
    # dense adjacency adj[dst, src] with the GIN residual folded in: adj + (1+eps)*I
    # TODO(synk): folding assumes eps=0 / train_eps=False (PyG GINConv defaults).
    adj = jnp.zeros((n_nodes, n_nodes), jnp.float32)
    adj = adj.at[edge_index[1], edge_index[0]].add(1.0)
    adj_plus = (adj + jnp.eye(n_nodes, dtype=jnp.float32)).astype(jnp.bfloat16)
    # pooling matrix for global_add_pool, row count rounded up to a sublane multiple
    g_pad = ((num_graphs + 7) // 8) * 8
    pool = (batch[None, :] == jnp.arange(g_pad)[:, None]).astype(jnp.bfloat16)
    # pad node features to hidden width; layer-0 weight rows beyond n_feat are
    # zero so this is exactly the (n_feat -> hidden) Linear.
    x_pad = jnp.zeros((n_nodes, hidden), jnp.float32).at[:, :n_feat].set(
        x.astype(jnp.float32)).astype(jnp.bfloat16)
    return x_pad, adj_plus, pool


def prepare_params(params):
    """One-time cast of matmul weights to bf16 and lane-padding of the head output."""
    hidden = params["wh2"].shape[0]
    n_actions = params["wh2"].shape[-1]
    a_pad = max(128, ((n_actions + 127) // 128) * 128)
    wh2 = jnp.zeros((hidden, a_pad), jnp.float32).at[:, :n_actions].set(params["wh2"])
    bh2 = jnp.zeros((1, a_pad), jnp.float32).at[:, :n_actions].set(params["bh2"])
    dp = dict(params)
    dp["w1"] = params["w1"].astype(jnp.bfloat16)
    dp["w2"] = params["w2"].astype(jnp.bfloat16)
    dp["wh1"] = params["wh1"].astype(jnp.bfloat16)
    dp["wh2"] = wh2.astype(jnp.bfloat16)
    dp["bh2"] = bh2
    return dp


_WEIGHT_KEYS = ("w1", "b1", "w2", "b2",
                "gni_w", "gni_b", "gni_a",
                "gno_w", "gno_b", "gno_a",
                "wh1", "bh1", "wh2", "bh2")


def gin_network_forward(x_b, adj_b, pool_b, dp, num_graphs, n_actions):
    """x_b: [nb, N, H] bf16, adj_b: [nb, N, N] bf16, pool_b: [nb, G_pad, N] bf16."""
    nb, n_nodes, hidden = x_b.shape
    g_pad = pool_b.shape[1]
    a_pad = dp["wh2"].shape[-1]

    def batch_spec(d1, d2):
        # per-grid-step input: leading call axis squeezed out of the kernel Ref
        return pl.BlockSpec((None, d1, d2), lambda b: (b, 0, 0))

    def const_spec(arr):
        # whole array resident in VMEM; same block every step => DMA'd once
        nd = arr.ndim
        return pl.BlockSpec(arr.shape, lambda b, _nd=nd: (0,) * _nd)

    weights = tuple(dp[k] for k in _WEIGHT_KEYS)
    in_specs = ([batch_spec(n_nodes, hidden),      # x_pad
                 batch_spec(n_nodes, n_nodes),     # adj_plus
                 batch_spec(g_pad, n_nodes)]       # pool
                + [const_spec(w) for w in weights])
    out_spec = pl.BlockSpec((None, g_pad, a_pad), lambda b: (b, 0, 0))

    out = pl.pallas_call(
        gin_kernel,
        out_shape=jax.ShapeDtypeStruct((nb, g_pad, a_pad), jnp.float32),
        grid=(nb,),
        in_specs=in_specs,
        out_specs=out_spec,
        compiler_params=pltpu.CompilerParams(
            dimension_semantics=("parallel",),     # v7x: shard batches over 2 TCs
            vmem_limit_bytes=32 * 1024 * 1024),
    )(x_b, adj_b, pool_b, *weights)
    return out[:, :num_graphs, :n_actions]


def init_params(key, n_feat, hidden, n_actions, n_layers=3):
    ks = jax.random.split(key, 8)

    def rnd(k, shape, scale=0.1):
        return (scale * jax.random.normal(k, shape)).astype(jnp.float32)

    # layer-0 first Linear has in_features = n_feat; embed into a [hidden, hidden]
    # slab with zero rows so all layers stack to [n_layers, hidden, hidden].
    w1_0 = jnp.zeros((hidden, hidden), jnp.float32).at[:n_feat, :].set(
        rnd(ks[0], (n_feat, hidden)))
    w1 = jnp.concatenate([w1_0[None], rnd(ks[1], (n_layers - 1, hidden, hidden))], 0)

    # TODO(synk): torch orthogonal_ init of the head (layer_init) replaced by a
    # deterministic scaled-normal init; affects values only, not forward semantics.
    return dict(
        w1=w1,
        b1=rnd(ks[2], (n_layers, 1, hidden)),
        w2=rnd(ks[3], (n_layers, hidden, hidden)),
        b2=rnd(ks[4], (n_layers, 1, hidden)),
        # GraphNorm inside each GINConv MLP (PyG init: weight=1, bias=0, mean_scale=1)
        gni_w=jnp.ones((n_layers, 1, hidden), jnp.float32),
        gni_b=jnp.zeros((n_layers, 1, hidden), jnp.float32),
        gni_a=jnp.ones((n_layers, 1, hidden), jnp.float32),
        # outer (BasicGNN) GraphNorm, applied after layers 0..n_layers-2
        gno_w=jnp.ones((n_layers - 1, 1, hidden), jnp.float32),
        gno_b=jnp.zeros((n_layers - 1, 1, hidden), jnp.float32),
        gno_a=jnp.ones((n_layers - 1, 1, hidden), jnp.float32),
        wh1=rnd(ks[5], (hidden, hidden)),
        bh1=jnp.zeros((1, hidden), jnp.float32),
        wh2=rnd(ks[6], (hidden, n_actions)),
        bh2=jnp.zeros((1, n_actions), jnp.float32),
    )


if __name__ == "__main__":
    key = jax.random.PRNGKey(0)
    num_node_features = 8
    hidden_size = 128          # module default -> lane-dense matmuls
    n_actions = 8
    n_layers = 3
    nodes_per_graph = 8
    num_graphs = 16            # 16 graphs x 8 nodes = 128 node rows per call
    n_nodes = nodes_per_graph * num_graphs
    edges_per_graph = 20
    num_batches = 4            # independent forward calls processed in one grid

    k_x, k_e, k_p = jax.random.split(key, 3)
    params = init_params(k_p, num_node_features, hidden_size, n_actions, n_layers)
    dev_params = prepare_params(params)       # one-time bf16 cast + lane padding

    batch_vec = jnp.repeat(jnp.arange(num_graphs), nodes_per_graph)

    # Graph-structure operands built ONCE outside the jitted hot path (cacheable
    # when the graph structure is static); the jitted forward only runs the kernel.
    xs, adjs, pools = [], [], []
    for call in range(num_batches):
        kb = jax.random.fold_in(k_x, call)
        x = jax.random.normal(kb, (n_nodes, num_node_features), jnp.float32)
        src_list, dst_list = [], []
        for g in range(num_graphs):
            kg = jax.random.fold_in(jax.random.fold_in(k_e, call), g)
            s = jax.random.randint(jax.random.fold_in(kg, 0), (edges_per_graph,),
                                   0, nodes_per_graph) + g * nodes_per_graph
            d = jax.random.randint(jax.random.fold_in(kg, 1), (edges_per_graph,),
                                   0, nodes_per_graph) + g * nodes_per_graph
            src_list.append(s)
            dst_list.append(d)
        edge_index = jnp.stack(
            [jnp.concatenate(src_list), jnp.concatenate(dst_list)], axis=0)
        x_pad, adj_plus, pool = build_graph_operands(
            x, edge_index, batch_vec, num_graphs, hidden_size)
        xs.append(x_pad)
        adjs.append(adj_plus)
        pools.append(pool)

    x_b = jnp.stack(xs)        # [nb, 128, 128] bf16
    adj_b = jnp.stack(adjs)    # [nb, 128, 128] bf16
    pool_b = jnp.stack(pools)  # [nb, 16, 128]  bf16

    @jax.jit
    def forward(x_b, adj_b, pool_b, dp):
        return gin_network_forward(x_b, adj_b, pool_b, dp, num_graphs, n_actions)

    out = jax.block_until_ready(forward(x_b, adj_b, pool_b, dev_params))
    assert out.shape == (num_batches, num_graphs, n_actions)
    assert bool(jnp.all(jnp.isfinite(out)))
    print("KERNEL_OK")
</pallas_src>

<mosaic_0001>
module attributes {stable_mosaic.version = 11 : i64} {
  func.func @gin_kernel(%arg0: i32, %arg1: memref<1x128x128xbf16, #tpu.memory_space<vmem>>, %arg2: memref<1x128x128xbf16, #tpu.memory_space<vmem>>, %arg3: memref<1x16x128xbf16, #tpu.memory_space<vmem>>, %arg4: memref<3x128x128xbf16, #tpu.memory_space<vmem>>, %arg5: memref<3x1x128xf32, #tpu.memory_space<vmem>>, %arg6: memref<3x128x128xbf16, #tpu.memory_space<vmem>>, %arg7: memref<3x1x128xf32, #tpu.memory_space<vmem>>, %arg8: memref<3x1x128xf32, #tpu.memory_space<vmem>>, %arg9: memref<3x1x128xf32, #tpu.memory_space<vmem>>, %arg10: memref<3x1x128xf32, #tpu.memory_space<vmem>>, %arg11: memref<2x1x128xf32, #tpu.memory_space<vmem>>, %arg12: memref<2x1x128xf32, #tpu.memory_space<vmem>>, %arg13: memref<2x1x128xf32, #tpu.memory_space<vmem>>, %arg14: memref<128x128xbf16, #tpu.memory_space<vmem>>, %arg15: memref<1x128xf32, #tpu.memory_space<vmem>>, %arg16: memref<128x128xbf16, #tpu.memory_space<vmem>>, %arg17: memref<1x128xf32, #tpu.memory_space<vmem>>, %arg18: memref<1x16x128xf32, #tpu.memory_space<vmem>>) attributes {dimension_semantics = [#tpu.dimension_semantics<parallel>], iteration_bounds = array<i64: 4>, scalar_prefetch = 0 : i64, scratch_operands = 0 : i64, tpu.core_type = #tpu.core_type<tc>, window_params = [{transform_indices = @transform_0, window_bounds = array<i64: 1, 128, 128>}, {transform_indices = @transform_1, window_bounds = array<i64: 1, 128, 128>}, {transform_indices = @transform_2, window_bounds = array<i64: 1, 16, 128>}, {pipeline_mode = #tpu.pipeline_mode<synchronous>, transform_indices = @transform_3, window_bounds = array<i64: 3, 128, 128>}, {pipeline_mode = #tpu.pipeline_mode<synchronous>, transform_indices = @transform_4, window_bounds = array<i64: 3, 1, 128>}, {pipeline_mode = #tpu.pipeline_mode<synchronous>, transform_indices = @transform_5, window_bounds = array<i64: 3, 128, 128>}, {pipeline_mode = #tpu.pipeline_mode<synchronous>, transform_indices = @transform_6, window_bounds = array<i64: 3, 1, 128>}, {pipeline_mode = #tpu.pipeline_mode<synchronous>, transform_indices = @transform_7, window_bounds = array<i64: 3, 1, 128>}, {pipeline_mode = #tpu.pipeline_mode<synchronous>, transform_indices = @transform_8, window_bounds = array<i64: 3, 1, 128>}, {pipeline_mode = #tpu.pipeline_mode<synchronous>, transform_indices = @transform_9, window_bounds = array<i64: 3, 1, 128>}, {pipeline_mode = #tpu.pipeline_mode<synchronous>, transform_indices = @transform_10, window_bounds = array<i64: 2, 1, 128>}, {pipeline_mode = #tpu.pipeline_mode<synchronous>, transform_indices = @transform_11, window_bounds = array<i64: 2, 1, 128>}, {pipeline_mode = #tpu.pipeline_mode<synchronous>, transform_indices = @transform_12, window_bounds = array<i64: 2, 1, 128>}, {pipeline_mode = #tpu.pipeline_mode<synchronous>, transform_indices = @transform_13, window_bounds = array<i64: 128, 128>}, {pipeline_mode = #tpu.pipeline_mode<synchronous>, transform_indices = @transform_14, window_bounds = array<i64: 1, 128>}, {pipeline_mode = #tpu.pipeline_mode<synchronous>, transform_indices = @transform_15, window_bounds = array<i64: 128, 128>}, {pipeline_mode = #tpu.pipeline_mode<synchronous>, transform_indices = @transform_16, window_bounds = array<i64: 1, 128>}, {transform_indices = @transform_17, window_bounds = array<i64: 1, 16, 128>}]} {
    %c0 = arith.constant 0 : index
    %c0_0 = arith.constant 0 : index
    %c0_1 = arith.constant 0 : index
    %0 = vector.load %arg2[%c0, %c0_0, %c0_1] : memref<1x128x128xbf16, #tpu.memory_space<vmem>>, vector<1x128x128xbf16>
    %1 = vector.shape_cast %0 : vector<1x128x128xbf16> to vector<128x128xbf16>
    %c0_2 = arith.constant 0 : index
    %c0_3 = arith.constant 0 : index
    %c0_4 = arith.constant 0 : index
    %2 = vector.load %arg1[%c0_2, %c0_3, %c0_4] : memref<1x128x128xbf16, #tpu.memory_space<vmem>>, vector<1x128x128xbf16>
    %3 = vector.shape_cast %2 : vector<1x128x128xbf16> to vector<128x128xbf16>
    %cst = arith.constant dense<0.000000e+00> : vector<128x128xf32>
    %4 = tpu.matmul %1, %3, %cst {dimension_numbers = #tpu.dot_dimension_numbers<[1], [0], [0], [1], [0, 0, 1, 1], [], []>} : vector<128x128xbf16>, vector<128x128xbf16>, vector<128x128xf32> -> vector<128x128xf32>
    %5 = arith.truncf %4 : vector<128x128xf32> to vector<128x128xbf16>
    %c0_5 = arith.constant 0 : index
    %c0_6 = arith.constant 0 : index
    %c0_7 = arith.constant 0 : index
    %6 = vector.load %arg4[%c0_5, %c0_6, %c0_7] : memref<3x128x128xbf16, #tpu.memory_space<vmem>>, vector<1x128x128xbf16>
    %7 = vector.shape_cast %6 : vector<1x128x128xbf16> to vector<128x128xbf16>
    %cst_8 = arith.constant dense<0.000000e+00> : vector<128x128xf32>
    %8 = tpu.matmul %5, %7, %cst_8 {dimension_numbers = #tpu.dot_dimension_numbers<[1], [0], [0], [1], [0, 0, 1, 1], [], []>} : vector<128x128xbf16>, vector<128x128xbf16>, vector<128x128xf32> -> vector<128x128xf32>
    %c0_9 = arith.constant 0 : index
    %c0_10 = arith.constant 0 : index
    %c0_11 = arith.constant 0 : index
    %9 = vector.load %arg5[%c0_9, %c0_10, %c0_11] : memref<3x1x128xf32, #tpu.memory_space<vmem>>, vector<1x1x128xf32>
    %10 = vector.shape_cast %9 : vector<1x1x128xf32> to vector<1x128xf32>
    %11 = vector.broadcast %10 : vector<1x128xf32> to vector<128x128xf32>
    %12 = arith.addf %8, %11 : vector<128x128xf32>
    %c0_12 = arith.constant 0 : index
    %c0_13 = arith.constant 0 : index
    %c0_14 = arith.constant 0 : index
    %13 = vector.load %arg8[%c0_12, %c0_13, %c0_14] : memref<3x1x128xf32, #tpu.memory_space<vmem>>, vector<1x1x128xf32>
    %14 = vector.shape_cast %13 : vector<1x1x128xf32> to vector<1x128xf32>
    %c0_15 = arith.constant 0 : index
    %c0_16 = arith.constant 0 : index
    %c0_17 = arith.constant 0 : index
    %15 = vector.load %arg9[%c0_15, %c0_16, %c0_17] : memref<3x1x128xf32, #tpu.memory_space<vmem>>, vector<1x1x128xf32>
    %16 = vector.shape_cast %15 : vector<1x1x128xf32> to vector<1x128xf32>
    %c0_18 = arith.constant 0 : index
    %c0_19 = arith.constant 0 : index
    %c0_20 = arith.constant 0 : index
    %17 = vector.load %arg10[%c0_18, %c0_19, %c0_20] : memref<3x1x128xf32, #tpu.memory_space<vmem>>, vector<1x1x128xf32>
    %18 = vector.shape_cast %17 : vector<1x1x128xf32> to vector<1x128xf32>
    %cst_21 = arith.constant dense<0.000000e+00> : vector<128xf32>
    %19 = vector.multi_reduction <add>, %12, %cst_21 [0] : vector<128x128xf32> to vector<128xf32>
    %20 = vector.shape_cast %19 : vector<128xf32> to vector<1x128xf32>
    %21 = arith.mulf %12, %12 : vector<128x128xf32>
    %cst_22 = arith.constant dense<0.000000e+00> : vector<128xf32>
    %22 = vector.multi_reduction <add>, %21, %cst_22 [0] : vector<128x128xf32> to vector<128xf32>
    %23 = vector.shape_cast %22 : vector<128xf32> to vector<1x128xf32>
    %cst_23 = arith.constant 7.812500e-03 : f32
    %24 = vector.broadcast %cst_23 : f32 to vector<1x128xf32>
    %25 = arith.mulf %20, %24 : vector<1x128xf32>
    %cst_24 = arith.constant 7.812500e-03 : f32
    %26 = vector.broadcast %cst_24 : f32 to vector<1x128xf32>
    %27 = arith.mulf %23, %26 : vector<1x128xf32>
    %cst_25 = arith.constant 2.000000e+00 : f32
    %28 = vector.broadcast %cst_25 : f32 to vector<1x128xf32>
    %29 = arith.mulf %28, %18 : vector<1x128xf32>
    %30 = arith.mulf %18, %18 : vector<1x128xf32>
    %31 = arith.subf %29, %30 : vector<1x128xf32>
    %32 = arith.mulf %25, %25 : vector<1x128xf32>
    %33 = arith.mulf %31, %32 : vector<1x128xf32>
    %34 = arith.subf %27, %33 : vector<1x128xf32>
    %cst_26 = arith.constant 9.99999974E-6 : f32
    %35 = vector.broadcast %cst_26 : f32 to vector<1x128xf32>
    %36 = arith.addf %34, %35 : vector<1x128xf32>
    %37 = math.rsqrt %36 : vector<1x128xf32>
    %38 = arith.mulf %14, %37 : vector<1x128xf32>
    %39 = arith.mulf %18, %25 : vector<1x128xf32>
    %40 = vector.broadcast %39 : vector<1x128xf32> to vector<128x128xf32>
    %41 = arith.subf %12, %40 : vector<128x128xf32>
    %42 = vector.broadcast %38 : vector<1x128xf32> to vector<128x128xf32>
    %43 = arith.mulf %41, %42 : vector<128x128xf32>
    %44 = vector.broadcast %16 : vector<1x128xf32> to vector<128x128xf32>
    %45 = arith.addf %43, %44 : vector<128x128xf32>
    %cst_27 = arith.constant 0.000000e+00 : f32
    %46 = vector.broadcast %cst_27 : f32 to vector<128x128xf32>
    %47 = arith.cmpf ogt, %45, %46 : vector<128x128xf32>
    %cst_28 = arith.constant 0.00999999977 : f32
    %48 = vector.broadcast %cst_28 : f32 to vector<128x128xf32>
    %49 = arith.mulf %48, %45 : vector<128x128xf32>
    %50 = arith.select %47, %45, %49 : vector<128x128xi1>, vector<128x128xf32>
    %51 = arith.truncf %50 : vector<128x128xf32> to vector<128x128xbf16>
    %c0_29 = arith.constant 0 : index
    %c0_30 = arith.constant 0 : index
    %c0_31 = arith.constant 0 : index
    %52 = vector.load %arg6[%c0_29, %c0_30, %c0_31] : memref<3x128x128xbf16, #tpu.memory_space<vmem>>, vector<1x128x128xbf16>
    %53 = vector.shape_cast %52 : vector<1x128x128xbf16> to vector<128x128xbf16>
    %cst_32 = arith.constant dense<0.000000e+00> : vector<128x128xf32>
    %54 = tpu.matmul %51, %53, %cst_32 {dimension_numbers = #tpu.dot_dimension_numbers<[1], [0], [0], [1], [0, 0, 1, 1], [], []>} : vector<128x128xbf16>, vector<128x128xbf16>, vector<128x128xf32> -> vector<128x128xf32>
    %c0_33 = arith.constant 0 : index
    %c0_34 = arith.constant 0 : index
    %c0_35 = arith.constant 0 : index
    %55 = vector.load %arg7[%c0_33, %c0_34, %c0_35] : memref<3x1x128xf32, #tpu.memory_space<vmem>>, vector<1x1x128xf32>
    %56 = vector.shape_cast %55 : vector<1x1x128xf32> to vector<1x128xf32>
    %57 = vector.broadcast %56 : vector<1x128xf32> to vector<128x128xf32>
    %58 = arith.addf %54, %57 : vector<128x128xf32>
    %c0_36 = arith.constant 0 : index
    %c0_37 = arith.constant 0 : index
    %c0_38 = arith.constant 0 : index
    %59 = vector.load %arg11[%c0_36, %c0_37, %c0_38] : memref<2x1x128xf32, #tpu.memory_space<vmem>>, vector<1x1x128xf32>
    %60 = vector.shape_cast %59 : vector<1x1x128xf32> to vector<1x128xf32>
    %c0_39 = arith.constant 0 : index
    %c0_40 = arith.constant 0 : index
    %c0_41 = arith.constant 0 : index
    %61 = vector.load %arg12[%c0_39, %c0_40, %c0_41] : memref<2x1x128xf32, #tpu.memory_space<vmem>>, vector<1x1x128xf32>
    %62 = vector.shape_cast %61 : vector<1x1x128xf32> to vector<1x128xf32>
    %c0_42 = arith.constant 0 : index
    %c0_43 = arith.constant 0 : index
    %c0_44 = arith.constant 0 : index
    %63 = vector.load %arg13[%c0_42, %c0_43, %c0_44] : memref<2x1x128xf32, #tpu.memory_space<vmem>>, vector<1x1x128xf32>
    %64 = vector.shape_cast %63 : vector<1x1x128xf32> to vector<1x128xf32>
    %cst_45 = arith.constant dense<0.000000e+00> : vector<128xf32>
    %65 = vector.multi_reduction <add>, %58, %cst_45 [0] : vector<128x128xf32> to vector<128xf32>
    %66 = vector.shape_cast %65 : vector<128xf32> to vector<1x128xf32>
    %67 = arith.mulf %58, %58 : vector<128x128xf32>
    %cst_46 = arith.constant dense<0.000000e+00> : vector<128xf32>
    %68 = vector.multi_reduction <add>, %67, %cst_46 [0] : vector<128x128xf32> to vector<128xf32>
    %69 = vector.shape_cast %68 : vector<128xf32> to vector<1x128xf32>
    %cst_47 = arith.constant 7.812500e-03 : f32
    %70 = vector.broadcast %cst_47 : f32 to vector<1x128xf32>
    %71 = arith.mulf %66, %70 : vector<1x128xf32>
    %cst_48 = arith.constant 7.812500e-03 : f32
    %72 = vector.broadcast %cst_48 : f32 to vector<1x128xf32>
    %73 = arith.mulf %69, %72 : vector<1x128xf32>
    %cst_49 = arith.constant 2.000000e+00 : f32
    %74 = vector.broadcast %cst_49 : f32 to vector<1x128xf32>
    %75 = arith.mulf %74, %64 : vector<1x128xf32>
    %76 = arith.mulf %64, %64 : vector<1x128xf32>
    %77 = arith.subf %75, %76 : vector<1x128xf32>
    %78 = arith.mulf %71, %71 : vector<1x128xf32>
    %79 = arith.mulf %77, %78 : vector<1x128xf32>
    %80 = arith.subf %73, %79 : vector<1x128xf32>
    %cst_50 = arith.constant 9.99999974E-6 : f32
    %81 = vector.broadcast %cst_50 : f32 to vector<1x128xf32>
    %82 = arith.addf %80, %81 : vector<1x128xf32>
    %83 = math.rsqrt %82 : vector<1x128xf32>
    %84 = arith.mulf %60, %83 : vector<1x128xf32>
    %85 = arith.mulf %64, %71 : vector<1x128xf32>
    %86 = vector.broadcast %85 : vector<1x128xf32> to vector<128x128xf32>
    %87 = arith.subf %58, %86 : vector<128x128xf32>
    %88 = vector.broadcast %84 : vector<1x128xf32> to vector<128x128xf32>
    %89 = arith.mulf %87, %88 : vector<128x128xf32>
    %90 = vector.broadcast %62 : vector<1x128xf32> to vector<128x128xf32>
    %91 = arith.addf %89, %90 : vector<128x128xf32>
    %cst_51 = arith.constant 0.000000e+00 : f32
    %92 = vector.broadcast %cst_51 : f32 to vector<128x128xf32>
    %93 = arith.cmpf ogt, %91, %92 : vector<128x128xf32>
    %cst_52 = arith.constant 0.00999999977 : f32
    %94 = vector.broadcast %cst_52 : f32 to vector<128x128xf32>
    %95 = arith.mulf %94, %91 : vector<128x128xf32>
    %96 = arith.select %93, %91, %95 : vector<128x128xi1>, vector<128x128xf32>
    %97 = arith.truncf %96 : vector<128x128xf32> to vector<128x128xbf16>
    %cst_53 = arith.constant dense<0.000000e+00> : vector<128x128xf32>
    %98 = tpu.matmul %1, %97, %cst_53 {dimension_numbers = #tpu.dot_dimension_numbers<[1], [0], [0], [1], [0, 0, 1, 1], [], []>} : vector<128x128xbf16>, vector<128x128xbf16>, vector<128x128xf32> -> vector<128x128xf32>
    %99 = arith.truncf %98 : vector<128x128xf32> to vector<128x128xbf16>
    %c1 = arith.constant 1 : index
    %c0_54 = arith.constant 0 : index
    %c0_55 = arith.constant 0 : index
    %100 = vector.load %arg4[%c1, %c0_54, %c0_55] : memref<3x128x128xbf16, #tpu.memory_space<vmem>>, vector<1x128x128xbf16>
    %101 = vector.shape_cast %100 : vector<1x128x128xbf16> to vector<128x128xbf16>
    %cst_56 = arith.constant dense<0.000000e+00> : vector<128x128xf32>
    %102 = tpu.matmul %99, %101, %cst_56 {dimension_numbers = #tpu.dot_dimension_numbers<[1], [0], [0], [1], [0, 0, 1, 1], [], []>} : vector<128x128xbf16>, vector<128x128xbf16>, vector<128x128xf32> -> vector<128x128xf32>
    %c1_57 = arith.constant 1 : index
    %c0_58 = arith.constant 0 : index
    %c0_59 = arith.constant 0 : index
    %103 = vector.load %arg5[%c1_57, %c0_58, %c0_59] : memref<3x1x128xf32, #tpu.memory_space<vmem>>, vector<1x1x128xf32>
    %104 = vector.shape_cast %103 : vector<1x1x128xf32> to vector<1x128xf32>
    %105 = vector.broadcast %104 : vector<1x128xf32> to vector<128x128xf32>
    %106 = arith.addf %102, %105 : vector<128x128xf32>
    %c1_60 = arith.constant 1 : index
    %c0_61 = arith.constant 0 : index
    %c0_62 = arith.constant 0 : index
    %107 = vector.load %arg8[%c1_60, %c0_61, %c0_62] : memref<3x1x128xf32, #tpu.memory_space<vmem>>, vector<1x1x128xf32>
    %108 = vector.shape_cast %107 : vector<1x1x128xf32> to vector<1x128xf32>
    %c1_63 = arith.constant 1 : index
    %c0_64 = arith.constant 0 : index
    %c0_65 = arith.constant 0 : index
    %109 = vector.load %arg9[%c1_63, %c0_64, %c0_65] : memref<3x1x128xf32, #tpu.memory_space<vmem>>, vector<1x1x128xf32>
    %110 = vector.shape_cast %109 : vector<1x1x128xf32> to vector<1x128xf32>
    %c1_66 = arith.constant 1 : index
    %c0_67 = arith.constant 0 : index
    %c0_68 = arith.constant 0 : index
    %111 = vector.load %arg10[%c1_66, %c0_67, %c0_68] : memref<3x1x128xf32, #tpu.memory_space<vmem>>, vector<1x1x128xf32>
    %112 = vector.shape_cast %111 : vector<1x1x128xf32> to vector<1x128xf32>
    %cst_69 = arith.constant dense<0.000000e+00> : vector<128xf32>
    %113 = vector.multi_reduction <add>, %106, %cst_69 [0] : vector<128x128xf32> to vector<128xf32>
    %114 = vector.shape_cast %113 : vector<128xf32> to vector<1x128xf32>
    %115 = arith.mulf %106, %106 : vector<128x128xf32>
    %cst_70 = arith.constant dense<0.000000e+00> : vector<128xf32>
    %116 = vector.multi_reduction <add>, %115, %cst_70 [0] : vector<128x128xf32> to vector<128xf32>
    %117 = vector.shape_cast %116 : vector<128xf32> to vector<1x128xf32>
    %cst_71 = arith.constant 7.812500e-03 : f32
    %118 = vector.broadcast %cst_71 : f32 to vector<1x128xf32>
    %119 = arith.mulf %114, %118 : vector<1x128xf32>
    %cst_72 = arith.constant 7.812500e-03 : f32
    %120 = vector.broadcast %cst_72 : f32 to vector<1x128xf32>
    %121 = arith.mulf %117, %120 : vector<1x128xf32>
    %cst_73 = arith.constant 2.000000e+00 : f32
    %122 = vector.broadcast %cst_73 : f32 to vector<1x128xf32>
    %123 = arith.mulf %122, %112 : vector<1x128xf32>
    %124 = arith.mulf %112, %112 : vector<1x128xf32>
    %125 = arith.subf %123, %124 : vector<1x128xf32>
    %126 = arith.mulf %119, %119 : vector<1x128xf32>
    %127 = arith.mulf %125, %126 : vector<1x128xf32>
    %128 = arith.subf %121, %127 : vector<1x128xf32>
    %cst_74 = arith.constant 9.99999974E-6 : f32
    %129 = vector.broadcast %cst_74 : f32 to vector<1x128xf32>
    %130 = arith.addf %128, %129 : vector<1x128xf32>
    %131 = math.rsqrt %130 : vector<1x128xf32>
    %132 = arith.mulf %108, %131 : vector<1x128xf32>
    %133 = arith.mulf %112, %119 : vector<1x128xf32>
    %134 = vector.broadcast %133 : vector<1x128xf32> to vector<128x128xf32>
    %135 = arith.subf %106, %134 : vector<128x128xf32>
    %136 = vector.broadcast %132 : vector<1x128xf32> to vector<128x128xf32>
    %137 = arith.mulf %135, %136 : vector<128x128xf32>
    %138 = vector.broadcast %110 : vector<1x128xf32> to vector<128x128xf32>
    %139 = arith.addf %137, %138 : vector<128x128xf32>
    %cst_75 = arith.constant 0.000000e+00 : f32
    %140 = vector.broadcast %cst_75 : f32 to vector<128x128xf32>
    %141 = arith.cmpf ogt, %139, %140 : vector<128x128xf32>
    %cst_76 = arith.constant 0.00999999977 : f32
    %142 = vector.broadcast %cst_76 : f32 to vector<128x128xf32>
    %143 = arith.mulf %142, %139 : vector<128x128xf32>
    %144 = arith.select %141, %139, %143 : vector<128x128xi1>, vector<128x128xf32>
    %145 = arith.truncf %144 : vector<128x128xf32> to vector<128x128xbf16>
    %c1_77 = arith.constant 1 : index
    %c0_78 = arith.constant 0 : index
    %c0_79 = arith.constant 0 : index
    %146 = vector.load %arg6[%c1_77, %c0_78, %c0_79] : memref<3x128x128xbf16, #tpu.memory_space<vmem>>, vector<1x128x128xbf16>
    %147 = vector.shape_cast %146 : vector<1x128x128xbf16> to vector<128x128xbf16>
    %cst_80 = arith.constant dense<0.000000e+00> : vector<128x128xf32>
    %148 = tpu.matmul %145, %147, %cst_80 {dimension_numbers = #tpu.dot_dimension_numbers<[1], [0], [0], [1], [0, 0, 1, 1], [], []>} : vector<128x128xbf16>, vector<128x128xbf16>, vector<128x128xf32> -> vector<128x128xf32>
    %c1_81 = arith.constant 1 : index
    %c0_82 = arith.constant 0 : index
    %c0_83 = arith.constant 0 : index
    %149 = vector.load %arg7[%c1_81, %c0_82, %c0_83] : memref<3x1x128xf32, #tpu.memory_space<vmem>>, vector<1x1x128xf32>
    %150 = vector.shape_cast %149 : vector<1x1x128xf32> to vector<1x128xf32>
    %151 = vector.broadcast %150 : vector<1x128xf32> to vector<128x128xf32>
    %152 = arith.addf %148, %151 : vector<128x128xf32>
    %c1_84 = arith.constant 1 : index
    %c0_85 = arith.constant 0 : index
    %c0_86 = arith.constant 0 : index
    %153 = vector.load %arg11[%c1_84, %c0_85, %c0_86] : memref<2x1x128xf32, #tpu.memory_space<vmem>>, vector<1x1x128xf32>
    %154 = vector.shape_cast %153 : vector<1x1x128xf32> to vector<1x128xf32>
    %c1_87 = arith.constant 1 : index
    %c0_88 = arith.constant 0 : index
    %c0_89 = arith.constant 0 : index
    %155 = vector.load %arg12[%c1_87, %c0_88, %c0_89] : memref<2x1x128xf32, #tpu.memory_space<vmem>>, vector<1x1x128xf32>
    %156 = vector.shape_cast %155 : vector<1x1x128xf32> to vector<1x128xf32>
    %c1_90 = arith.constant 1 : index
    %c0_91 = arith.constant 0 : index
    %c0_92 = arith.constant 0 : index
    %157 = vector.load %arg13[%c1_90, %c0_91, %c0_92] : memref<2x1x128xf32, #tpu.memory_space<vmem>>, vector<1x1x128xf32>
    %158 = vector.shape_cast %157 : vector<1x1x128xf32> to vector<1x128xf32>
    %cst_93 = arith.constant dense<0.000000e+00> : vector<128xf32>
    %159 = vector.multi_reduction <add>, %152, %cst_93 [0] : vector<128x128xf32> to vector<128xf32>
    %160 = vector.shape_cast %159 : vector<128xf32> to vector<1x128xf32>
    %161 = arith.mulf %152, %152 : vector<128x128xf32>
    %cst_94 = arith.constant dense<0.000000e+00> : vector<128xf32>
    %162 = vector.multi_reduction <add>, %161, %cst_94 [0] : vector<128x128xf32> to vector<128xf32>
    %163 = vector.shape_cast %162 : vector<128xf32> to vector<1x128xf32>
    %cst_95 = arith.constant 7.812500e-03 : f32
    %164 = vector.broadcast %cst_95 : f32 to vector<1x128xf32>
    %165 = arith.mulf %160, %164 : vector<1x128xf32>
    %cst_96 = arith.constant 7.812500e-03 : f32
    %166 = vector.broadcast %cst_96 : f32 to vector<1x128xf32>
    %167 = arith.mulf %163, %166 : vector<1x128xf32>
    %cst_97 = arith.constant 2.000000e+00 : f32
    %168 = vector.broadcast %cst_97 : f32 to vector<1x128xf32>
    %169 = arith.mulf %168, %158 : vector<1x128xf32>
    %170 = arith.mulf %158, %158 : vector<1x128xf32>
    %171 = arith.subf %169, %170 : vector<1x128xf32>
    %172 = arith.mulf %165, %165 : vector<1x128xf32>
    %173 = arith.mulf %171, %172 : vector<1x128xf32>
    %174 = arith.subf %167, %173 : vector<1x128xf32>
    %cst_98 = arith.constant 9.99999974E-6 : f32
    %175 = vector.broadcast %cst_98 : f32 to vector<1x128xf32>
    %176 = arith.addf %174, %175 : vector<1x128xf32>
    %177 = math.rsqrt %176 : vector<1x128xf32>
    %178 = arith.mulf %154, %177 : vector<1x128xf32>
    %179 = arith.mulf %158, %165 : vector<1x128xf32>
    %180 = vector.broadcast %179 : vector<1x128xf32> to vector<128x128xf32>
    %181 = arith.subf %152, %180 : vector<128x128xf32>
    %182 = vector.broadcast %178 : vector<1x128xf32> to vector<128x128xf32>
    %183 = arith.mulf %181, %182 : vector<128x128xf32>
    %184 = vector.broadcast %156 : vector<1x128xf32> to vector<128x128xf32>
    %185 = arith.addf %183, %184 : vector<128x128xf32>
    %cst_99 = arith.constant 0.000000e+00 : f32
    %186 = vector.broadcast %cst_99 : f32 to vector<128x128xf32>
    %187 = arith.cmpf ogt, %185, %186 : vector<128x128xf32>
    %cst_100 = arith.constant 0.00999999977 : f32
    %188 = vector.broadcast %cst_100 : f32 to vector<128x128xf32>
    %189 = arith.mulf %188, %185 : vector<128x128xf32>
    %190 = arith.select %187, %185, %189 : vector<128x128xi1>, vector<128x128xf32>
    %191 = arith.truncf %190 : vector<128x128xf32> to vector<128x128xbf16>
    %cst_101 = arith.constant dense<0.000000e+00> : vector<128x128xf32>
    %192 = tpu.matmul %1, %191, %cst_101 {dimension_numbers = #tpu.dot_dimension_numbers<[1], [0], [0], [1], [0, 0, 1, 1], [], []>} : vector<128x128xbf16>, vector<128x128xbf16>, vector<128x128xf32> -> vector<128x128xf32>
    %193 = arith.truncf %192 : vector<128x128xf32> to vector<128x128xbf16>
    %c2 = arith.constant 2 : index
    %c0_102 = arith.constant 0 : index
    %c0_103 = arith.constant 0 : index
    %194 = vector.load %arg4[%c2, %c0_102, %c0_103] : memref<3x128x128xbf16, #tpu.memory_space<vmem>>, vector<1x128x128xbf16>
    %195 = vector.shape_cast %194 : vector<1x128x128xbf16> to vector<128x128xbf16>
    %cst_104 = arith.constant dense<0.000000e+00> : vector<128x128xf32>
    %196 = tpu.matmul %193, %195, %cst_104 {dimension_numbers = #tpu.dot_dimension_numbers<[1], [0], [0], [1], [0, 0, 1, 1], [], []>} : vector<128x128xbf16>, vector<128x128xbf16>, vector<128x128xf32> -> vector<128x128xf32>
    %c2_105 = arith.constant 2 : index
    %c0_106 = arith.constant 0 : index
    %c0_107 = arith.constant 0 : index
    %197 = vector.load %arg5[%c2_105, %c0_106, %c0_107] : memref<3x1x128xf32, #tpu.memory_space<vmem>>, vector<1x1x128xf32>
    %198 = vector.shape_cast %197 : vector<1x1x128xf32> to vector<1x128xf32>
    %199 = vector.broadcast %198 : vector<1x128xf32> to vector<128x128xf32>
    %200 = arith.addf %196, %199 : vector<128x128xf32>
    %c2_108 = arith.constant 2 : index
    %c0_109 = arith.constant 0 : index
    %c0_110 = arith.constant 0 : index
    %201 = vector.load %arg8[%c2_108, %c0_109, %c0_110] : memref<3x1x128xf32, #tpu.memory_space<vmem>>, vector<1x1x128xf32>
    %202 = vector.shape_cast %201 : vector<1x1x128xf32> to vector<1x128xf32>
    %c2_111 = arith.constant 2 : index
    %c0_112 = arith.constant 0 : index
    %c0_113 = arith.constant 0 : index
    %203 = vector.load %arg9[%c2_111, %c0_112, %c0_113] : memref<3x1x128xf32, #tpu.memory_space<vmem>>, vector<1x1x128xf32>
    %204 = vector.shape_cast %203 : vector<1x1x128xf32> to vector<1x128xf32>
    %c2_114 = arith.constant 2 : index
    %c0_115 = arith.constant 0 : index
    %c0_116 = arith.constant 0 : index
    %205 = vector.load %arg10[%c2_114, %c0_115, %c0_116] : memref<3x1x128xf32, #tpu.memory_space<vmem>>, vector<1x1x128xf32>
    %206 = vector.shape_cast %205 : vector<1x1x128xf32> to vector<1x128xf32>
    %cst_117 = arith.constant dense<0.000000e+00> : vector<128xf32>
    %207 = vector.multi_reduction <add>, %200, %cst_117 [0] : vector<128x128xf32> to vector<128xf32>
    %208 = vector.shape_cast %207 : vector<128xf32> to vector<1x128xf32>
    %209 = arith.mulf %200, %200 : vector<128x128xf32>
    %cst_118 = arith.constant dense<0.000000e+00> : vector<128xf32>
    %210 = vector.multi_reduction <add>, %209, %cst_118 [0] : vector<128x128xf32> to vector<128xf32>
    %211 = vector.shape_cast %210 : vector<128xf32> to vector<1x128xf32>
    %cst_119 = arith.constant 7.812500e-03 : f32
    %212 = vector.broadcast %cst_119 : f32 to vector<1x128xf32>
    %213 = arith.mulf %208, %212 : vector<1x128xf32>
    %cst_120 = arith.constant 7.812500e-03 : f32
    %214 = vector.broadcast %cst_120 : f32 to vector<1x128xf32>
    %215 = arith.mulf %211, %214 : vector<1x128xf32>
    %cst_121 = arith.constant 2.000000e+00 : f32
    %216 = vector.broadcast %cst_121 : f32 to vector<1x128xf32>
    %217 = arith.mulf %216, %206 : vector<1x128xf32>
    %218 = arith.mulf %206, %206 : vector<1x128xf32>
    %219 = arith.subf %217, %218 : vector<1x128xf32>
    %220 = arith.mulf %213, %213 : vector<1x128xf32>
    %221 = arith.mulf %219, %220 : vector<1x128xf32>
    %222 = arith.subf %215, %221 : vector<1x128xf32>
    %cst_122 = arith.constant 9.99999974E-6 : f32
    %223 = vector.broadcast %cst_122 : f32 to vector<1x128xf32>
    %224 = arith.addf %222, %223 : vector<1x128xf32>
    %225 = math.rsqrt %224 : vector<1x128xf32>
    %226 = arith.mulf %202, %225 : vector<1x128xf32>
    %227 = arith.mulf %206, %213 : vector<1x128xf32>
    %228 = vector.broadcast %227 : vector<1x128xf32> to vector<128x128xf32>
    %229 = arith.subf %200, %228 : vector<128x128xf32>
    %230 = vector.broadcast %226 : vector<1x128xf32> to vector<128x128xf32>
    %231 = arith.mulf %229, %230 : vector<128x128xf32>
    %232 = vector.broadcast %204 : vector<1x128xf32> to vector<128x128xf32>
    %233 = arith.addf %231, %232 : vector<128x128xf32>
    %cst_123 = arith.constant 0.000000e+00 : f32
    %234 = vector.broadcast %cst_123 : f32 to vector<128x128xf32>
    %235 = arith.cmpf ogt, %233, %234 : vector<128x128xf32>
    %cst_124 = arith.constant 0.00999999977 : f32
    %236 = vector.broadcast %cst_124 : f32 to vector<128x128xf32>
    %237 = arith.mulf %236, %233 : vector<128x128xf32>
    %238 = arith.select %235, %233, %237 : vector<128x128xi1>, vector<128x128xf32>
    %239 = arith.truncf %238 : vector<128x128xf32> to vector<128x128xbf16>
    %c2_125 = arith.constant 2 : index
    %c0_126 = arith.constant 0 : index
    %c0_127 = arith.constant 0 : index
    %240 = vector.load %arg6[%c2_125, %c0_126, %c0_127] : memref<3x128x128xbf16, #tpu.memory_space<vmem>>, vector<1x128x128xbf16>
    %241 = vector.shape_cast %240 : vector<1x128x128xbf16> to vector<128x128xbf16>
    %cst_128 = arith.constant dense<0.000000e+00> : vector<128x128xf32>
    %242 = tpu.matmul %239, %241, %cst_128 {dimension_numbers = #tpu.dot_dimension_numbers<[1], [0], [0], [1], [0, 0, 1, 1], [], []>} : vector<128x128xbf16>, vector<128x128xbf16>, vector<128x128xf32> -> vector<128x128xf32>
    %c2_129 = arith.constant 2 : index
    %c0_130 = arith.constant 0 : index
    %c0_131 = arith.constant 0 : index
    %243 = vector.load %arg7[%c2_129, %c0_130, %c0_131] : memref<3x1x128xf32, #tpu.memory_space<vmem>>, vector<1x1x128xf32>
    %244 = vector.shape_cast %243 : vector<1x1x128xf32> to vector<1x128xf32>
    %245 = vector.broadcast %244 : vector<1x128xf32> to vector<128x128xf32>
    %246 = arith.addf %242, %245 : vector<128x128xf32>
    %247 = arith.truncf %246 : vector<128x128xf32> to vector<128x128xbf16>
    %c0_132 = arith.constant 0 : index
    %c0_133 = arith.constant 0 : index
    %c0_134 = arith.constant 0 : index
    %248 = vector.load %arg3[%c0_132, %c0_133, %c0_134] : memref<1x16x128xbf16, #tpu.memory_space<vmem>>, vector<1x16x128xbf16>
    %249 = vector.shape_cast %248 : vector<1x16x128xbf16> to vector<16x128xbf16>
    %cst_135 = arith.constant dense<0.000000e+00> : vector<16x128xf32>
    %250 = tpu.matmul %249, %247, %cst_135 {dimension_numbers = #tpu.dot_dimension_numbers<[1], [0], [0], [1], [0, 0, 1, 1], [], []>} : vector<16x128xbf16>, vector<128x128xbf16>, vector<16x128xf32> -> vector<16x128xf32>
    %251 = arith.truncf %250 : vector<16x128xf32> to vector<16x128xbf16>
    %c0_136 = arith.constant 0 : index
    %c0_137 = arith.constant 0 : index
    %252 = vector.load %arg14[%c0_136, %c0_137] : memref<128x128xbf16, #tpu.memory_space<vmem>>, vector<128x128xbf16>
    %cst_138 = arith.constant dense<0.000000e+00> : vector<16x128xf32>
    %253 = tpu.matmul %251, %252, %cst_138 {dimension_numbers = #tpu.dot_dimension_numbers<[1], [0], [0], [1], [0, 0, 1, 1], [], []>} : vector<16x128xbf16>, vector<128x128xbf16>, vector<16x128xf32> -> vector<16x128xf32>
    %c0_139 = arith.constant 0 : index
    %c0_140 = arith.constant 0 : index
    %254 = vector.load %arg15[%c0_139, %c0_140] : memref<1x128xf32, #tpu.memory_space<vmem>>, vector<1x128xf32>
    %255 = vector.broadcast %254 : vector<1x128xf32> to vector<16x128xf32>
    %256 = arith.addf %253, %255 : vector<16x128xf32>
    %cst_141 = arith.constant 0.000000e+00 : f32
    %257 = vector.broadcast %cst_141 : f32 to vector<16x128xf32>
    %258 = arith.cmpf ogt, %256, %257 : vector<16x128xf32>
    %cst_142 = arith.constant 0.00999999977 : f32
    %259 = vector.broadcast %cst_142 : f32 to vector<16x128xf32>
    %260 = arith.mulf %259, %256 : vector<16x128xf32>
    %261 = arith.select %258, %256, %260 : vector<16x128xi1>, vector<16x128xf32>
    %262 = arith.truncf %261 : vector<16x128xf32> to vector<16x128xbf16>
    %c0_143 = arith.constant 0 : index
    %c0_144 = arith.constant 0 : index
    %263 = vector.load %arg16[%c0_143, %c0_144] : memref<128x128xbf16, #tpu.memory_space<vmem>>, vector<128x128xbf16>
    %cst_145 = arith.constant dense<0.000000e+00> : vector<16x128xf32>
    %264 = tpu.matmul %262, %263, %cst_145 {dimension_numbers = #tpu.dot_dimension_numbers<[1], [0], [0], [1], [0, 0, 1, 1], [], []>} : vector<16x128xbf16>, vector<128x128xbf16>, vector<16x128xf32> -> vector<16x128xf32>
    %c0_146 = arith.constant 0 : index
    %c0_147 = arith.constant 0 : index
    %265 = vector.load %arg17[%c0_146, %c0_147] : memref<1x128xf32, #tpu.memory_space<vmem>>, vector<1x128xf32>
    %266 = vector.broadcast %265 : vector<1x128xf32> to vector<16x128xf32>
    %267 = arith.addf %264, %266 : vector<16x128xf32>
    %c0_148 = arith.constant 0 : index
    %c0_149 = arith.constant 0 : index
    %c0_150 = arith.constant 0 : index
    %268 = vector.load %arg18[%c0_148, %c0_149, %c0_150] : memref<1x16x128xf32, #tpu.memory_space<vmem>>, vector<1x16x128xf32>
    %269 = vector.shape_cast %268 : vector<1x16x128xf32> to vector<16x128xf32>
    %270 = vector.shape_cast %267 : vector<16x128xf32> to vector<1x16x128xf32>
    tpu.vector_store %arg18[%c0_148, %c0_149, %c0_150], %270 {strides = array<i32>} : memref<1x16x128xf32, #tpu.memory_space<vmem>>, vector<1x16x128xf32>,
    return
  }
  func.func @transform_0(%arg0: i32) -> (i32, i32, i32) {
    %c0_i32 = arith.constant 0 : i32
    %c0_i32_0 = arith.constant 0 : i32
    %c0_i32_1 = arith.constant 0 : i32
    return %arg0, %c0_i32, %c0_i32_0 : i32, i32, i32
  }
  func.func @transform_1(%arg0: i32) -> (i32, i32, i32) {
    %c0_i32 = arith.constant 0 : i32
    %c0_i32_0 = arith.constant 0 : i32
    %c0_i32_1 = arith.constant 0 : i32
    return %arg0, %c0_i32, %c0_i32_0 : i32, i32, i32
  }
  func.func @transform_2(%arg0: i32) -> (i32, i32, i32) {
    %c0_i32 = arith.constant 0 : i32
    %c0_i32_0 = arith.constant 0 : i32
    %c0_i32_1 = arith.constant 0 : i32
    return %arg0, %c0_i32, %c0_i32_0 : i32, i32, i32
  }
  func.func @transform_3(%arg0: i32) -> (i32, i32, i32) {
    %c0_i32 = arith.constant 0 : i32
    %c0_i32_0 = arith.constant 0 : i32
    %c0_i32_1 = arith.constant 0 : i32
    %c0_i32_2 = arith.constant 0 : i32
    return %c0_i32, %c0_i32_0, %c0_i32_1 : i32, i32, i32
  }
  func.func @transform_4(%arg0: i32) -> (i32, i32, i32) {
    %c0_i32 = arith.constant 0 : i32
    %c0_i32_0 = arith.constant 0 : i32
    %c0_i32_1 = arith.constant 0 : i32
    %c0_i32_2 = arith.constant 0 : i32
    return %c0_i32, %c0_i32_0, %c0_i32_1 : i32, i32, i32
  }
  func.func @transform_5(%arg0: i32) -> (i32, i32, i32) {
    %c0_i32 = arith.constant 0 : i32
    %c0_i32_0 = arith.constant 0 : i32
    %c0_i32_1 = arith.constant 0 : i32
    %c0_i32_2 = arith.constant 0 : i32
    return %c0_i32, %c0_i32_0, %c0_i32_1 : i32, i32, i32
  }
  func.func @transform_6(%arg0: i32) -> (i32, i32, i32) {
    %c0_i32 = arith.constant 0 : i32
    %c0_i32_0 = arith.constant 0 : i32
    %c0_i32_1 = arith.constant 0 : i32
    %c0_i32_2 = arith.constant 0 : i32
    return %c0_i32, %c0_i32_0, %c0_i32_1 : i32, i32, i32
  }
  func.func @transform_7(%arg0: i32) -> (i32, i32, i32) {
    %c0_i32 = arith.constant 0 : i32
    %c0_i32_0 = arith.constant 0 : i32
    %c0_i32_1 = arith.constant 0 : i32
    %c0_i32_2 = arith.constant 0 : i32
    return %c0_i32, %c0_i32_0, %c0_i32_1 : i32, i32, i32
  }
  func.func @transform_8(%arg0: i32) -> (i32, i32, i32) {
    %c0_i32 = arith.constant 0 : i32
    %c0_i32_0 = arith.constant 0 : i32
    %c0_i32_1 = arith.constant 0 : i32
    %c0_i32_2 = arith.constant 0 : i32
    return %c0_i32, %c0_i32_0, %c0_i32_1 : i32, i32, i32
  }
  func.func @transform_9(%arg0: i32) -> (i32, i32, i32) {
    %c0_i32 = arith.constant 0 : i32
    %c0_i32_0 = arith.constant 0 : i32
    %c0_i32_1 = arith.constant 0 : i32
    %c0_i32_2 = arith.constant 0 : i32
    return %c0_i32, %c0_i32_0, %c0_i32_1 : i32, i32, i32
  }
  func.func @transform_10(%arg0: i32) -> (i32, i32, i32) {
    %c0_i32 = arith.constant 0 : i32
    %c0_i32_0 = arith.constant 0 : i32
    %c0_i32_1 = arith.constant 0 : i32
    %c0_i32_2 = arith.constant 0 : i32
    return %c0_i32, %c0_i32_0, %c0_i32_1 : i32, i32, i32
  }
  func.func @transform_11(%arg0: i32) -> (i32, i32, i32) {
    %c0_i32 = arith.constant 0 : i32
    %c0_i32_0 = arith.constant 0 : i32
    %c0_i32_1 = arith.constant 0 : i32
    %c0_i32_2 = arith.constant 0 : i32
    return %c0_i32, %c0_i32_0, %c0_i32_1 : i32, i32, i32
  }
  func.func @transform_12(%arg0: i32) -> (i32, i32, i32) {
    %c0_i32 = arith.constant 0 : i32
    %c0_i32_0 = arith.constant 0 : i32
    %c0_i32_1 = arith.constant 0 : i32
    %c0_i32_2 = arith.constant 0 : i32
    return %c0_i32, %c0_i32_0, %c0_i32_1 : i32, i32, i32
  }
  func.func @transform_13(%arg0: i32) -> (i32, i32) {
    %c0_i32 = arith.constant 0 : i32
    %c0_i32_0 = arith.constant 0 : i32
    %c0_i32_1 = arith.constant 0 : i32
    return %c0_i32, %c0_i32_0 : i32, i32
  }
  func.func @transform_14(%arg0: i32) -> (i32, i32) {
    %c0_i32 = arith.constant 0 : i32
    %c0_i32_0 = arith.constant 0 : i32
    %c0_i32_1 = arith.constant 0 : i32
    return %c0_i32, %c0_i32_0 : i32, i32
  }
  func.func @transform_15(%arg0: i32) -> (i32, i32) {
    %c0_i32 = arith.constant 0 : i32
    %c0_i32_0 = arith.constant 0 : i32
    %c0_i32_1 = arith.constant 0 : i32
    return %c0_i32, %c0_i32_0 : i32, i32
  }
  func.func @transform_16(%arg0: i32) -> (i32, i32) {
    %c0_i32 = arith.constant 0 : i32
    %c0_i32_0 = arith.constant 0 : i32
    %c0_i32_1 = arith.constant 0 : i32
    return %c0_i32, %c0_i32_0 : i32, i32
  }
  func.func @transform_17(%arg0: i32) -> (i32, i32, i32) {
    %c0_i32 = arith.constant 0 : i32
    %c0_i32_0 = arith.constant 0 : i32
    %c0_i32_1 = arith.constant 0 : i32
    return %arg0, %c0_i32, %c0_i32_0 : i32, i32, i32
  }
}

</mosaic_0001>

<llo_original>
// kernel: forward.1
$region0: #{forward.1}
  #allocation0 [shape = 'u32[]', space=smem, size = 0x4, offset = 0x4, fixed_abs, tag = 'smem constant byte address 0x4 - core index']
  #allocation1 [shape = 'u32[144,128]{1,0:T(1,128)}', space=vmem, size = 0x12000, scoped, tag = 'internal scratch']
  %s0 = inlined_call_operand.hbm [shape: bf16[4,128,128], index: 0, kind: input, shape index: {}]
  %s1 = inlined_call_operand.hbm [shape: bf16[4,128,128], index: 1, kind: input, shape index: {}]
  %s2 = inlined_call_operand.hbm [shape: bf16[4,16,128], index: 2, kind: input, shape index: {}]
  %s3 = inlined_call_operand.hbm [shape: bf16[3,128,128], index: 3, kind: input, shape index: {}]
  %s4 = inlined_call_operand.vmem [shape: f32[3,1,128], index: 4, kind: input, shape index: {}]
  %s5 = inlined_call_operand.hbm [shape: bf16[3,128,128], index: 5, kind: input, shape index: {}]
  %s6 = inlined_call_operand.vmem [shape: f32[3,1,128], index: 6, kind: input, shape index: {}]
  %s7 = inlined_call_operand.vmem [shape: f32[3,1,128], index: 7, kind: input, shape index: {}]
  %s8 = inlined_call_operand.vmem [shape: f32[3,1,128], index: 8, kind: input, shape index: {}]
  %s9 = inlined_call_operand.vmem [shape: f32[3,1,128], index: 9, kind: input, shape index: {}]
  %s10 = inlined_call_operand.vmem [shape: f32[2,1,128], index: 10, kind: input, shape index: {}]
  %s11 = inlined_call_operand.vmem [shape: f32[2,1,128], index: 11, kind: input, shape index: {}]
  %s12 = inlined_call_operand.vmem [shape: f32[2,1,128], index: 12, kind: input, shape index: {}]
  %s13 = inlined_call_operand.hbm [shape: bf16[128,128], index: 13, kind: input, shape index: {}]
  %s14 = inlined_call_operand.vmem [shape: f32[1,128], index: 14, kind: input, shape index: {}]
  %s15 = inlined_call_operand.hbm [shape: bf16[128,128], index: 15, kind: input, shape index: {}]
  %s16 = inlined_call_operand.hbm [shape: f32[1,128], index: 16, kind: input, shape index: {}]
  %s17 = inlined_call_operand.vmem [shape: f32[4,16,128], index: 17, kind: output, shape index: {}]
  %s18 = sld [smem:[#allocation0]]
  $region133: #{forward.1} parent=0
    _
  %s20 = ssub.s32 1, %s18
  %s21 = scalar_select 0, %s20, %s18
  $region1: #{forward.1} parent=0
    #allocation2 [shape = 'u8[65536]{0}', space=vmem, size = 0x10000, scoped, tag = 'input window, operand 0']
    #allocation3 [shape = 's32[2]{0}', space=sflag, size = 0x8, scoped, tag = 'scoped memory for forward.1']
    #allocation4 [shape = 'u8[65536]{0}', space=vmem, size = 0x10000, scoped, tag = 'input window, operand 1']
    #allocation5 [shape = 's32[2]{0}', space=sflag, size = 0x8, scoped, tag = 'scoped memory for forward.1']
    #allocation6 [shape = 'u8[8192]{0}', space=vmem, size = 0x2000, scoped, tag = 'input window, operand 2']
    #allocation7 [shape = 'u8[98304]{0}', space=vmem, size = 0x18000, scoped, tag = 'input window, operand 3, single buffered']
    #allocation8 [shape = 's32[1]{0}', space=sflag, size = 0x4, scoped, tag = 'scoped memory for forward.1']
    #allocation9 [shape = 'u8[98304]{0}', space=vmem, size = 0x18000, scoped, tag = 'input window, operand 5, single buffered']
    #allocation10 [shape = 'u8[32768]{0}', space=vmem, size = 0x8000, scoped, tag = 'input window, operand 13, single buffered']
    #allocation11 [shape = 's32[1]{0}', space=sflag, size = 0x4, scoped, tag = 'scoped memory for forward.1']
    #allocation12 [shape = 'u8[32768]{0}', space=vmem, size = 0x8000, scoped, tag = 'input window, operand 15, single buffered']
    #allocation13 [shape = 'u8[512]{0}', space=vmem, size = 0x400, scoped, tag = 'input window, operand 16, single buffered']
    #allocation14 [shape = 's32[1]{0}', space=sflag, size = 0x4, scoped, tag = 'scoped memory for forward.1']
    %22 = vsyncpa [#allocation3], 0
    %s23 = scalar_lea.sflag [#allocation3], 1
    %24 = vsyncpa %s23, 0
    %25 = vsyncpa [#allocation5], 0
    %s26 = scalar_lea.sflag [#allocation5], 1
    %27 = vsyncpa %s26, 0
    %28 = vsyncpa [#allocation8], 0
    %29 = vsyncpa [#allocation11], 0
    %30 = vsyncpa [#allocation14], 0
    loop: start=0, step=1, limit=6
    $region2: #{forward.1} parent=1 // loop_pre_header
      _
    $region3: #{forward.1} parent=1 // loop_header
      %s32 = sphi 0, %s36
      %p33 = scmp.ge.s32.totalorder %s32, 6
      %s42 = sphi 0, %s44
      %s45 = sphi 0, %s42
      %s46 = sphi 0, %s45
      %s62 = sphi 0, %s46
      %s68 = sphi 0, %s70
      %s71 = sphi 0, %s68
      %s72 = sphi 0, %s71
      %s88 = sphi 0, %s72
      %s94 = sphi 0, %s96
      %s97 = sphi 0, %s94
      %s98 = sphi 0, %s97
      %s114 = sphi 0, %s98
      %s118 = sphi 0, %s118
      %s120 = sphi 0, %s118
      %s121 = sphi 0, %s120
      %s135 = sphi 0, %s121
      %s139 = sphi 0, %s139
      %s141 = sphi 0, %s139
      %s142 = sphi 0, %s141
      %s156 = sphi 0, %s142
      %s160 = sphi 0, %s160
      %s162 = sphi 0, %s160
      %s163 = sphi 0, %s162
      %s177 = sphi 0, %s163
      %s181 = sphi 0, %s181
      %s183 = sphi 0, %s181
      %s184 = sphi 0, %s183
      %s198 = sphi 0, %s184
      %s202 = sphi 0, %s202
      %s204 = sphi 0, %s202
      %s205 = sphi 0, %s204
      %s219 = sphi 0, %s205
      %s223 = sphi 0, %s223
      %s225 = sphi 0, %s223
      %s226 = sphi 0, %s225
      %s240 = sphi 0, %s226
      %s244 = sphi 0, %s244
      %s246 = sphi 0, %s244
      %s247 = sphi 0, %s246
      %s261 = sphi 0, %s247
      %s265 = sphi 0, %s265
      %s267 = sphi 0, %s265
      %s268 = sphi 0, %s267
      %s282 = sphi 0, %s268
      %s286 = sphi 0, %s286
      %s288 = sphi 0, %s286
      %s289 = sphi 0, %s288
      %s303 = sphi 0, %s289
      %s307 = sphi 0, %s307
      %s309 = sphi 0, %s307
      %s310 = sphi 0, %s309
      %s324 = sphi 0, %s310
      %s328 = sphi 0, %s328
      %s330 = sphi 0, %s328
      %s331 = sphi 0, %s330
      %s345 = sphi 0, %s331
      %s349 = sphi 0, %s349
      %s351 = sphi 0, %s349
      %s352 = sphi 0, %s351
      %s366 = sphi 0, %s352
      %s370 = sphi 0, %s370
      %s372 = sphi 0, %s370
      %s373 = sphi 0, %s372
      %s387 = sphi 0, %s373
      %s391 = sphi 0, %s391
      %s393 = sphi 0, %s391
      %s394 = sphi 0, %s393
      %s408 = sphi 0, %s394
      %s414 = sphi 0, %s416
      %s417 = sphi 0, %s414
      %s418 = sphi 0, %s417
      %s434 = sphi 0, %s418
    $region4: #{forward.1} parent=1 // loop_header_branch
      %35 = sbr.rel (%p33) target = $region8
    $region5: #{forward.1} parent=1 // loop_body
      %s37 = ssub.s32 %s32, 1
      %s38 = ssub.s32 %s32, 2
      %s39 = sadd.s32 %s32, 1
      %s40 = ssub.s32 %s32, %s39
      %p41 = scmp.eq.s32.totalorder %s40, 0
      %s43 = sadd.s32 %s42, 1
      %s44 = scalar_select %p41, %s42, %s43
      %p47 = pneg %p41
      %p48 = scmp.eq.s32.totalorder %s32, 3
      %p49 = por %p47, %p48
      %p50 = scmp.ne.s32.totalorder %s42, %s45
      %p51 = scmp.eq.s32.totalorder %s32, 0
      %p52 = por %p50, %p51
      %p53 = scmp.ne.s32.totalorder %s42, %s45
      %p54 = scmp.eq.s32.totalorder %s37, 3
      %p55 = por %p53, %p54
      %p56 = scmp.ne.s32.totalorder %s45, %s46
      %p57 = scmp.eq.s32.totalorder %s37, 0
      %p58 = por %p56, %p57
      %p59 = scmp.ne.s32.totalorder %s45, %s46
      %p60 = scmp.eq.s32.totalorder %s38, 3
      %p61 = por %p59, %p60
      %p63 = scmp.ne.s32.totalorder %s46, %s62
      %p64 = scmp.eq.s32.totalorder %s38, 0
      %p65 = por %p63, %p64
      %s66 = ssub.s32 %s32, %s39
      %p67 = scmp.eq.s32.totalorder %s66, 0
      %s69 = sadd.s32 %s68, 1
      %s70 = scalar_select %p67, %s68, %s69
      %p73 = pneg %p67
      %p74 = scmp.eq.s32.totalorder %s32, 3
      %p75 = por %p73, %p74
      %p76 = scmp.ne.s32.totalorder %s68, %s71
      %p77 = scmp.eq.s32.totalorder %s32, 0
      %p78 = por %p76, %p77
      %p79 = scmp.ne.s32.totalorder %s68, %s71
      %p80 = scmp.eq.s32.totalorder %s37, 3
      %p81 = por %p79, %p80
      %p82 = scmp.ne.s32.totalorder %s71, %s72
      %p83 = scmp.eq.s32.totalorder %s37, 0
      %p84 = por %p82, %p83
      %p85 = scmp.ne.s32.totalorder %s71, %s72
      %p86 = scmp.eq.s32.totalorder %s38, 3
      %p87 = por %p85, %p86
      %p89 = scmp.ne.s32.totalorder %s72, %s88
      %p90 = scmp.eq.s32.totalorder %s38, 0
      %p91 = por %p89, %p90
      %s92 = ssub.s32 %s32, %s39
      %p93 = scmp.eq.s32.totalorder %s92, 0
      %s95 = sadd.s32 %s94, 1
      %s96 = scalar_select %p93, %s94, %s95
      %p99 = pneg %p93
      %p100 = scmp.eq.s32.totalorder %s32, 3
      %p101 = por %p99, %p100
      %p102 = scmp.ne.s32.totalorder %s94, %s97
      %p103 = scmp.eq.s32.totalorder %s32, 0
      %p104 = por %p102, %p103
      %p105 = scmp.ne.s32.totalorder %s94, %s97
      %p106 = scmp.eq.s32.totalorder %s37, 3
      %p107 = por %p105, %p106
      %p108 = scmp.ne.s32.totalorder %s97, %s98
      %p109 = scmp.eq.s32.totalorder %s37, 0
      %p110 = por %p108, %p109
      %p111 = scmp.ne.s32.totalorder %s97, %s98
      %p112 = scmp.eq.s32.totalorder %s38, 3
      %p113 = por %p111, %p112
      %p115 = scmp.ne.s32.totalorder %s98, %s114
      %p116 = scmp.eq.s32.totalorder %s38, 0
      %p117 = por %p115, %p116
      %s119 = sadd.s32 %s118, 1
      %p122 = scmp.eq.s32.totalorder %s32, 3
      %p123 = scmp.ne.s32.totalorder %s118, %s120
      %p124 = scmp.eq.s32.totalorder %s32, 0
      %p125 = por %p123, %p124
      %p126 = scmp.ne.s32.totalorder %s118, %s120
      %p127 = scmp.eq.s32.totalorder %s37, 3
      %p128 = por %p126, %p127
      %p129 = scmp.ne.s32.totalorder %s120, %s121
      %p130 = scmp.eq.s32.totalorder %s37, 0
      %p131 = por %p129, %p130
      %p132 = scmp.ne.s32.totalorder %s120, %s121
      %p133 = scmp.eq.s32.totalorder %s38, 3
      %p134 = por %p132, %p133
      %p136 = scmp.ne.s32.totalorder %s121, %s135
      %p137 = scmp.eq.s32.totalorder %s38, 0
      %p138 = por %p136, %p137
      %s140 = sadd.s32 %s139, 1
      %p143 = scmp.eq.s32.totalorder %s32, 3
      %p144 = scmp.ne.s32.totalorder %s139, %s141
      %p145 = scmp.eq.s32.totalorder %s32, 0
      %p146 = por %p144, %p145
      %p147 = scmp.ne.s32.totalorder %s139, %s141
      %p148 = scmp.eq.s32.totalorder %s37, 3
      %p149 = por %p147, %p148
      %p150 = scmp.ne.s32.totalorder %s141, %s142
      %p151 = scmp.eq.s32.totalorder %s37, 0
      %p152 = por %p150, %p151
      %p153 = scmp.ne.s32.totalorder %s141, %s142
      %p154 = scmp.eq.s32.totalorder %s38, 3
      %p155 = por %p153, %p154
      %p157 = scmp.ne.s32.totalorder %s142, %s156
      %p158 = scmp.eq.s32.totalorder %s38, 0
      %p159 = por %p157, %p158
      %s161 = sadd.s32 %s160, 1
      %p164 = scmp.eq.s32.totalorder %s32, 3
      %p165 = scmp.ne.s32.totalorder %s160, %s162
      %p166 = scmp.eq.s32.totalorder %s32, 0
      %p167 = por %p165, %p166
      %p168 = scmp.ne.s32.totalorder %s160, %s162
      %p169 = scmp.eq.s32.totalorder %s37, 3
      %p170 = por %p168, %p169
      %p171 = scmp.ne.s32.totalorder %s162, %s163
      %p172 = scmp.eq.s32.totalorder %s37, 0
      %p173 = por %p171, %p172
      %p174 = scmp.ne.s32.totalorder %s162, %s163
      %p175 = scmp.eq.s32.totalorder %s38, 3
      %p176 = por %p174, %p175
      %p178 = scmp.ne.s32.totalorder %s163, %s177
      %p179 = scmp.eq.s32.totalorder %s38, 0
      %p180 = por %p178, %p179
      %s182 = sadd.s32 %s181, 1
      %p185 = scmp.eq.s32.totalorder %s32, 3
      %p186 = scmp.ne.s32.totalorder %s181, %s183
      %p187 = scmp.eq.s32.totalorder %s32, 0
      %p188 = por %p186, %p187
      %p189 = scmp.ne.s32.totalorder %s181, %s183
      %p190 = scmp.eq.s32.totalorder %s37, 3
      %p191 = por %p189, %p190
      %p192 = scmp.ne.s32.totalorder %s183, %s184
      %p193 = scmp.eq.s32.totalorder %s37, 0
      %p194 = por %p192, %p193
      %p195 = scmp.ne.s32.totalorder %s183, %s184
      %p196 = scmp.eq.s32.totalorder %s38, 3
      %p197 = por %p195, %p196
      %p199 = scmp.ne.s32.totalorder %s184, %s198
      %p200 = scmp.eq.s32.totalorder %s38, 0
      %p201 = por %p199, %p200
      %s203 = sadd.s32 %s202, 1
      %p206 = scmp.eq.s32.totalorder %s32, 3
      %p207 = scmp.ne.s32.totalorder %s202, %s204
      %p208 = scmp.eq.s32.totalorder %s32, 0
      %p209 = por %p207, %p208
      %p210 = scmp.ne.s32.totalorder %s202, %s204
      %p211 = scmp.eq.s32.totalorder %s37, 3
      %p212 = por %p210, %p211
      %p213 = scmp.ne.s32.totalorder %s204, %s205
      %p214 = scmp.eq.s32.totalorder %s37, 0
      %p215 = por %p213, %p214
      %p216 = scmp.ne.s32.totalorder %s204, %s205
      %p217 = scmp.eq.s32.totalorder %s38, 3
      %p218 = por %p216, %p217
      %p220 = scmp.ne.s32.totalorder %s205, %s219
      %p221 = scmp.eq.s32.totalorder %s38, 0
      %p222 = por %p220, %p221
      %s224 = sadd.s32 %s223, 1
      %p227 = scmp.eq.s32.totalorder %s32, 3
      %p228 = scmp.ne.s32.totalorder %s223, %s225
      %p229 = scmp.eq.s32.totalorder %s32, 0
      %p230 = por %p228, %p229
      %p231 = scmp.ne.s32.totalorder %s223, %s225
      %p232 = scmp.eq.s32.totalorder %s37, 3
      %p233 = por %p231, %p232
      %p234 = scmp.ne.s32.totalorder %s225, %s226
      %p235 = scmp.eq.s32.totalorder %s37, 0
      %p236 = por %p234, %p235
      %p237 = scmp.ne.s32.totalorder %s225, %s226
      %p238 = scmp.eq.s32.totalorder %s38, 3
      %p239 = por %p237, %p238
      %p241 = scmp.ne.s32.totalorder %s226, %s240
      %p242 = scmp.eq.s32.totalorder %s38, 0
      %p243 = por %p241, %p242
      %s245 = sadd.s32 %s244, 1
      %p248 = scmp.eq.s32.totalorder %s32, 3
      %p249 = scmp.ne.s32.totalorder %s244, %s246
      %p250 = scmp.eq.s32.totalorder %s32, 0
      %p251 = por %p249, %p250
      %p252 = scmp.ne.s32.totalorder %s244, %s246
      %p253 = scmp.eq.s32.totalorder %s37, 3
      %p254 = por %p252, %p253
      %p255 = scmp.ne.s32.totalorder %s246, %s247
      %p256 = scmp.eq.s32.totalorder %s37, 0
      %p257 = por %p255, %p256
      %p258 = scmp.ne.s32.totalorder %s246, %s247
      %p259 = scmp.eq.s32.totalorder %s38, 3
      %p260 = por %p258, %p259
      %p262 = scmp.ne.s32.totalorder %s247, %s261
      %p263 = scmp.eq.s32.totalorder %s38, 0
      %p264 = por %p262, %p263
      %s266 = sadd.s32 %s265, 1
      %p269 = scmp.eq.s32.totalorder %s32, 3
      %p270 = scmp.ne.s32.totalorder %s265, %s267
      %p271 = scmp.eq.s32.totalorder %s32, 0
      %p272 = por %p270, %p271
      %p273 = scmp.ne.s32.totalorder %s265, %s267
      %p274 = scmp.eq.s32.totalorder %s37, 3
      %p275 = por %p273, %p274
      %p276 = scmp.ne.s32.totalorder %s267, %s268
      %p277 = scmp.eq.s32.totalorder %s37, 0
      %p278 = por %p276, %p277
      %p279 = scmp.ne.s32.totalorder %s267, %s268
      %p280 = scmp.eq.s32.totalorder %s38, 3
      %p281 = por %p279, %p280
      %p283 = scmp.ne.s32.totalorder %s268, %s282
      %p284 = scmp.eq.s32.totalorder %s38, 0
      %p285 = por %p283, %p284
      %s287 = sadd.s32 %s286, 1
      %p290 = scmp.eq.s32.totalorder %s32, 3
      %p291 = scmp.ne.s32.totalorder %s286, %s288
      %p292 = scmp.eq.s32.totalorder %s32, 0
      %p293 = por %p291, %p292
      %p294 = scmp.ne.s32.totalorder %s286, %s288
      %p295 = scmp.eq.s32.totalorder %s37, 3
      %p296 = por %p294, %p295
      %p297 = scmp.ne.s32.totalorder %s288, %s289
      %p298 = scmp.eq.s32.totalorder %s37, 0
      %p299 = por %p297, %p298
      %p300 = scmp.ne.s32.totalorder %s288, %s289
      %p301 = scmp.eq.s32.totalorder %s38, 3
      %p302 = por %p300, %p301
      %p304 = scmp.ne.s32.totalorder %s289, %s303
      %p305 = scmp.eq.s32.totalorder %s38, 0
      %p306 = por %p304, %p305
      %s308 = sadd.s32 %s307, 1
      %p311 = scmp.eq.s32.totalorder %s32, 3
      %p312 = scmp.ne.s32.totalorder %s307, %s309
      %p313 = scmp.eq.s32.totalorder %s32, 0
      %p314 = por %p312, %p313
      %p315 = scmp.ne.s32.totalorder %s307, %s309
      %p316 = scmp.eq.s32.totalorder %s37, 3
      %p317 = por %p315, %p316
      %p318 = scmp.ne.s32.totalorder %s309, %s310
      %p319 = scmp.eq.s32.totalorder %s37, 0
      %p320 = por %p318, %p319
      %p321 = scmp.ne.s32.totalorder %s309, %s310
      %p322 = scmp.eq.s32.totalorder %s38, 3
      %p323 = por %p321, %p322
      %p325 = scmp.ne.s32.totalorder %s310, %s324
      %p326 = scmp.eq.s32.totalorder %s38, 0
      %p327 = por %p325, %p326
      %s329 = sadd.s32 %s328, 1
      %p332 = scmp.eq.s32.totalorder %s32, 3
      %p333 = scmp.ne.s32.totalorder %s328, %s330
      %p334 = scmp.eq.s32.totalorder %s32, 0
      %p335 = por %p333, %p334
      %p336 = scmp.ne.s32.totalorder %s328, %s330
      %p337 = scmp.eq.s32.totalorder %s37, 3
      %p338 = por %p336, %p337
      %p339 = scmp.ne.s32.totalorder %s330, %s331
      %p340 = scmp.eq.s32.totalorder %s37, 0
      %p341 = por %p339, %p340
      %p342 = scmp.ne.s32.totalorder %s330, %s331
      %p343 = scmp.eq.s32.totalorder %s38, 3
      %p344 = por %p342, %p343
      %p346 = scmp.ne.s32.totalorder %s331, %s345
      %p347 = scmp.eq.s32.totalorder %s38, 0
      %p348 = por %p346, %p347
      %s350 = sadd.s32 %s349, 1
      %p353 = scmp.eq.s32.totalorder %s32, 3
      %p354 = scmp.ne.s32.totalorder %s349, %s351
      %p355 = scmp.eq.s32.totalorder %s32, 0
      %p356 = por %p354, %p355
      %p357 = scmp.ne.s32.totalorder %s349, %s351
      %p358 = scmp.eq.s32.totalorder %s37, 3
      %p359 = por %p357, %p358
      %p360 = scmp.ne.s32.totalorder %s351, %s352
      %p361 = scmp.eq.s32.totalorder %s37, 0
      %p362 = por %p360, %p361
      %p363 = scmp.ne.s32.totalorder %s351, %s352
      %p364 = scmp.eq.s32.totalorder %s38, 3
      %p365 = por %p363, %p364
      %p367 = scmp.ne.s32.totalorder %s352, %s366
      %p368 = scmp.eq.s32.totalorder %s38, 0
      %p369 = por %p367, %p368
      %s371 = sadd.s32 %s370, 1
      %p374 = scmp.eq.s32.totalorder %s32, 3
      %p375 = scmp.ne.s32.totalorder %s370, %s372
      %p376 = scmp.eq.s32.totalorder %s32, 0
      %p377 = por %p375, %p376
      %p378 = scmp.ne.s32.totalorder %s370, %s372
      %p379 = scmp.eq.s32.totalorder %s37, 3
      %p380 = por %p378, %p379
      %p381 = scmp.ne.s32.totalorder %s372, %s373
      %p382 = scmp.eq.s32.totalorder %s37, 0
      %p383 = por %p381, %p382
      %p384 = scmp.ne.s32.totalorder %s372, %s373
      %p385 = scmp.eq.s32.totalorder %s38, 3
      %p386 = por %p384, %p385
      %p388 = scmp.ne.s32.totalorder %s373, %s387
      %p389 = scmp.eq.s32.totalorder %s38, 0
      %p390 = por %p388, %p389
      %s392 = sadd.s32 %s391, 1
      %p395 = scmp.eq.s32.totalorder %s32, 3
      %p396 = scmp.ne.s32.totalorder %s391, %s393
      %p397 = scmp.eq.s32.totalorder %s32, 0
      %p398 = por %p396, %p397
      %p399 = scmp.ne.s32.totalorder %s391, %s393
      %p400 = scmp.eq.s32.totalorder %s37, 3
      %p401 = por %p399, %p400
      %p402 = scmp.ne.s32.totalorder %s393, %s394
      %p403 = scmp.eq.s32.totalorder %s37, 0
      %p404 = por %p402, %p403
      %p405 = scmp.ne.s32.totalorder %s393, %s394
      %p406 = scmp.eq.s32.totalorder %s38, 3
      %p407 = por %p405, %p406
      %p409 = scmp.ne.s32.totalorder %s394, %s408
      %p410 = scmp.eq.s32.totalorder %s38, 0
      %p411 = por %p409, %p410
      %s412 = ssub.s32 %s32, %s39
      %p413 = scmp.eq.s32.totalorder %s412, 0
      %s415 = sadd.s32 %s414, 1
      %s416 = scalar_select %p413, %s414, %s415
      %p419 = pneg %p413
      %p420 = scmp.eq.s32.totalorder %s32, 3
      %p421 = por %p419, %p420
      %p422 = scmp.ne.s32.totalorder %s414, %s417
      %p423 = scmp.eq.s32.totalorder %s32, 0
      %p424 = por %p422, %p423
      %p425 = scmp.ne.s32.totalorder %s414, %s417
      %p426 = scmp.eq.s32.totalorder %s37, 3
      %p427 = por %p425, %p426
      %p428 = scmp.ne.s32.totalorder %s417, %s418
      %p429 = scmp.eq.s32.totalorder %s37, 0
      %p430 = por %p428, %p429
      %p431 = scmp.ne.s32.totalorder %s417, %s418
      %p432 = scmp.eq.s32.totalorder %s38, 3
      %p433 = por %p431, %p432
      %p435 = scmp.ne.s32.totalorder %s418, %s434
      %p436 = scmp.eq.s32.totalorder %s38, 0
      %p437 = por %p435, %p436
      %p438 = scmp.le.s32.totalorder 1, %s32
      %p439 = scmp.lt.s32.totalorder %s32, 5
      %p440 = pnand %p438, %p439
      %p441 = pneg %p440
      // Predicated region
      $region9: #{forward.1} parent=5 // pred_check
        _
      $region10: #{forward.1} parent=5 // pred_check_branch
        %443 = sbr.rel (%p440) target = $region12
      $region11: #{forward.1} parent=5 // pred_region
        %s444 = ssub.s32 %s32, 1
        // Predicated region
        $region13: #{forward.1} parent=11 // pred_check
          %p445 = pneg %p131
        $region14: #{forward.1} parent=11 // pred_check_branch
          %447 = sbr.rel (%p445) target = $region16
        $region15: #{forward.1} parent=11 // pred_region
          %s449 = ssub.s32 3072, 3072
          %450 = vsyncadd [#allocation8], %s449
          %s451 = sshll.u32 [#allocation7], 4
          %s452 = int_to_ptr.vmem [resolvable:$true] %s451
          %457 = dma.hbm_to_vmem [thread:$0]  %s3, 3072, %s452, [#allocation8], 64, 64, 4
        $region16: #{forward.1} parent=11 // pred_fallthru
          _
        // Predicated region
        $region17: #{forward.1} parent=11 // pred_check
          %p458 = pneg %p152
        $region18: #{forward.1} parent=11 // pred_check_branch
          %460 = sbr.rel (%p458) target = $region20
        $region19: #{forward.1} parent=11 // pred_region
          _
        $region20: #{forward.1} parent=11 // pred_fallthru
          _
        // Predicated region
        $region21: #{forward.1} parent=11 // pred_check
          %p461 = pneg %p173
        $region22: #{forward.1} parent=11 // pred_check_branch
          %463 = sbr.rel (%p461) target = $region24
        $region23: #{forward.1} parent=11 // pred_region
          %s465 = ssub.s32 3072, 3072
          %466 = vsyncadd [#allocation8], %s465
          %s467 = sshll.u32 [#allocation9], 4
          %s468 = int_to_ptr.vmem [resolvable:$true] %s467
          %473 = dma.hbm_to_vmem [thread:$0]  %s5, 3072, %s468, [#allocation8], 64, 64, 4
        $region24: #{forward.1} parent=11 // pred_fallthru
          _
        // Predicated region
        $region25: #{forward.1} parent=11 // pred_check
          %p474 = pneg %p194
        $region26: #{forward.1} parent=11 // pred_check_branch
          %476 = sbr.rel (%p474) target = $region28
        $region27: #{forward.1} parent=11 // pred_region
          _
        $region28: #{forward.1} parent=11 // pred_fallthru
          _
        // Predicated region
        $region29: #{forward.1} parent=11 // pred_check
          %p477 = pneg %p215
        $region30: #{forward.1} parent=11 // pred_check_branch
          %479 = sbr.rel (%p477) target = $region32
        $region31: #{forward.1} parent=11 // pred_region
          _
        $region32: #{forward.1} parent=11 // pred_fallthru
          _
        // Predicated region
        $region33: #{forward.1} parent=11 // pred_check
          %p480 = pneg %p236
        $region34: #{forward.1} parent=11 // pred_check_branch
          %482 = sbr.rel (%p480) target = $region36
        $region35: #{forward.1} parent=11 // pred_region
          _
        $region36: #{forward.1} parent=11 // pred_fallthru
          _
        // Predicated region
        $region37: #{forward.1} parent=11 // pred_check
          %p483 = pneg %p257
        $region38: #{forward.1} parent=11 // pred_check_branch
          %485 = sbr.rel (%p483) target = $region40
        $region39: #{forward.1} parent=11 // pred_region
          _
        $region40: #{forward.1} parent=11 // pred_fallthru
          _
        // Predicated region
        $region41: #{forward.1} parent=11 // pred_check
          %p486 = pneg %p278
        $region42: #{forward.1} parent=11 // pred_check_branch
          %488 = sbr.rel (%p486) target = $region44
        $region43: #{forward.1} parent=11 // pred_region
          _
        $region44: #{forward.1} parent=11 // pred_fallthru
          _
        // Predicated region
        $region45: #{forward.1} parent=11 // pred_check
          %p489 = pneg %p299
        $region46: #{forward.1} parent=11 // pred_check_branch
          %491 = sbr.rel (%p489) target = $region48
        $region47: #{forward.1} parent=11 // pred_region
          _
        $region48: #{forward.1} parent=11 // pred_fallthru
          _
        // Predicated region
        $region49: #{forward.1} parent=11 // pred_check
          %p492 = pneg %p320
        $region50: #{forward.1} parent=11 // pred_check_branch
          %494 = sbr.rel (%p492) target = $region52
        $region51: #{forward.1} parent=11 // pred_region
          _
        $region52: #{forward.1} parent=11 // pred_fallthru
          _
        // Predicated region
        $region53: #{forward.1} parent=11 // pred_check
          %p495 = pneg %p341
        $region54: #{forward.1} parent=11 // pred_check_branch
          %497 = sbr.rel (%p495) target = $region56
        $region55: #{forward.1} parent=11 // pred_region
          %s499 = ssub.s32 1024, 1024
          %500 = vsyncadd [#allocation11], %s499
          %s501 = sshll.u32 [#allocation10], 4
          %s502 = int_to_ptr.vmem [resolvable:$true] %s501
          %507 = dma.hbm_to_vmem [thread:$0]  %s13, 1024, %s502, [#allocation11], 64, 64, 4
        $region56: #{forward.1} parent=11 // pred_fallthru
          _
        // Predicated region
        $region57: #{forward.1} parent=11 // pred_check
          %p508 = pneg %p362
        $region58: #{forward.1} parent=11 // pred_check_branch
          %510 = sbr.rel (%p508) target = $region60
        $region59: #{forward.1} parent=11 // pred_region
          _
        $region60: #{forward.1} parent=11 // pred_fallthru
          _
        // Predicated region
        $region61: #{forward.1} parent=11 // pred_check
          %p511 = pneg %p383
        $region62: #{forward.1} parent=11 // pred_check_branch
          %513 = sbr.rel (%p511) target = $region64
        $region63: #{forward.1} parent=11 // pred_region
          %s515 = ssub.s32 1024, 1024
          %516 = vsyncadd [#allocation11], %s515
          %s517 = sshll.u32 [#allocation12], 4
          %s518 = int_to_ptr.vmem [resolvable:$true] %s517
          %523 = dma.hbm_to_vmem [thread:$0]  %s15, 1024, %s518, [#allocation11], 64, 64, 4
        $region64: #{forward.1} parent=11 // pred_fallthru
          _
        // Predicated region
        $region65: #{forward.1} parent=11 // pred_check
          %p524 = pneg %p404
        $region66: #{forward.1} parent=11 // pred_check_branch
          %526 = sbr.rel (%p524) target = $region68
        $region67: #{forward.1} parent=11 // pred_region
          %s528 = ssub.s32 16, 16
          %529 = vsyncadd [#allocation14], %s528
          %s531 = sshll.u32 [#allocation13], 4
          %s532 = int_to_ptr.vmem [resolvable:$true] %s531
          %534 = dma.hbm_to_vmem [thread:$0]  %s16, 16, %s532, [#allocation14]
        $region68: #{forward.1} parent=11 // pred_fallthru
          _
      $region12: #{forward.1} parent=5 // pred_fallthru
        _
      %p535 = scmp.lt.s32.totalorder %s32, 4
      // Predicated region
      $region69: #{forward.1} parent=5 // pred_check
        %p536 = pneg %p535
      $region70: #{forward.1} parent=5 // pred_check_branch
        %538 = sbr.rel (%p536) target = $region72
      $region71: #{forward.1} parent=5 // pred_region
        // Predicated region
        $region73: #{forward.1} parent=71 // pred_check
          %p539 = pneg %p52
        $region74: #{forward.1} parent=71 // pred_check_branch
          %541 = sbr.rel (%p539) target = $region76
        $region75: #{forward.1} parent=71 // pred_region
          %s542 = sand.u32 %s42, 1
          %s543 = scalar_lea.sflag [#allocation3], %s542
          %s544 = sand.u32 %s42, 1
          %s545 = smul.addr %s544, 64
          %s546 = scalar_lea.vmem [#allocation2], %s545
          %s548 = ssub.s32 1024, 1024
          %549 = vsyncadd %s543, %s548
          %s550 = smul.addr %s32, 16
          %s551 = smul.addr %s550, 64
          %s552 = scalar_lea.hbm %s0, %s551
          %s553 = sshll.u32 %s546, 4
          %s554 = int_to_ptr.vmem [resolvable:$true] %s553
          %559 = dma.hbm_to_vmem [thread:$0]  %s552, 1024, %s554, %s543, 64, 64, 4
        $region76: #{forward.1} parent=71 // pred_fallthru
          _
        // Predicated region
        $region77: #{forward.1} parent=71 // pred_check
          %p560 = pneg %p78
        $region78: #{forward.1} parent=71 // pred_check_branch
          %562 = sbr.rel (%p560) target = $region80
        $region79: #{forward.1} parent=71 // pred_region
          %s563 = sand.u32 %s32, 1
          %s564 = scalar_lea.sflag [#allocation5], %s563
          %s565 = sand.u32 %s68, 1
          %s566 = smul.addr %s565, 64
          %s567 = scalar_lea.vmem [#allocation4], %s566
          %s569 = ssub.s32 1024, 1024
          %570 = vsyncadd %s564, %s569
          %s571 = smul.addr %s32, 16
          %s572 = smul.addr %s571, 64
          %s573 = scalar_lea.hbm %s1, %s572
          %s574 = sshll.u32 %s567, 4
          %s575 = int_to_ptr.vmem [resolvable:$true] %s574
          %580 = dma.hbm_to_vmem [thread:$0]  %s573, 1024, %s575, %s564, 64, 64, 4
        $region80: #{forward.1} parent=71 // pred_fallthru
          _
        // Predicated region
        $region81: #{forward.1} parent=71 // pred_check
          %p581 = pneg %p104
        $region82: #{forward.1} parent=71 // pred_check_branch
          %583 = sbr.rel (%p581) target = $region84
        $region83: #{forward.1} parent=71 // pred_region
          %s584 = sand.u32 %s32, 1
          %s585 = scalar_lea.sflag [#allocation5], %s584
          %s586 = sand.u32 %s94, 1
          %s587 = smul.addr %s586, 8
          %s588 = scalar_lea.vmem [#allocation6], %s587
          %s590 = ssub.s32 128, 128
          %591 = vsyncadd %s585, %s590
          %s592 = smul.addr %s32, 2
          %s593 = smul.addr %s592, 64
          %s594 = scalar_lea.hbm %s2, %s593
          %s595 = sshll.u32 %s588, 4
          %s596 = int_to_ptr.vmem [resolvable:$true] %s595
          %601 = dma.hbm_to_vmem [thread:$0]  %s594, 128, %s596, %s585, 64, 64, 4
        $region84: #{forward.1} parent=71 // pred_fallthru
          _
      $region72: #{forward.1} parent=5 // pred_fallthru
        _
      %p602 = scmp.le.s32.totalorder 1, %s32
      %p603 = scmp.lt.s32.totalorder %s32, 5
      %p604 = pnand %p602, %p603
      %p605 = pneg %p604
      // Predicated region
      $region85: #{forward.1} parent=5 // pred_check
        _
      $region86: #{forward.1} parent=5 // pred_check_branch
        %607 = sbr.rel (%p604) target = $region88
      $region87: #{forward.1} parent=5 // pred_region
        %s608 = ssub.s32 %s32, 1
        %s609 = sand.u32 %s45, 1
        %s610 = scalar_lea.sflag [#allocation3], %s609
        %s611 = sand.u32 %s45, 1
        %s612 = smul.addr %s611, 64
        %s613 = scalar_lea.vmem [#allocation2], %s612
        // Predicated region
        $region89: #{forward.1} parent=87 // pred_check
          %p614 = pneg %p58
        $region90: #{forward.1} parent=87 // pred_check_branch
          %616 = sbr.rel (%p614) target = $region92
        $region91: #{forward.1} parent=87 // pred_region
          %617 = dma.done %s610, 1024
        $region92: #{forward.1} parent=87 // pred_fallthru
          _
        %s618 = sand.u32 %s37, 1
        %s619 = scalar_lea.sflag [#allocation5], %s618
        %s620 = sand.u32 %s71, 1
        %s621 = smul.addr %s620, 64
        %s622 = scalar_lea.vmem [#allocation4], %s621
        // Predicated region
        $region93: #{forward.1} parent=87 // pred_check
          %p623 = pneg %p84
        $region94: #{forward.1} parent=87 // pred_check_branch
          %625 = sbr.rel (%p623) target = $region96
        $region95: #{forward.1} parent=87 // pred_region
          %626 = dma.done %s619, 1024
        $region96: #{forward.1} parent=87 // pred_fallthru
          _
        %s627 = sand.u32 %s37, 1
        %s628 = scalar_lea.sflag [#allocation5], %s627
        %s629 = sand.u32 %s97, 1
        %s630 = smul.addr %s629, 8
        %s631 = scalar_lea.vmem [#allocation6], %s630
        // Predicated region
        $region97: #{forward.1} parent=87 // pred_check
          %p632 = pneg %p110
        $region98: #{forward.1} parent=87 // pred_check_branch
          %634 = sbr.rel (%p632) target = $region100
        $region99: #{forward.1} parent=87 // pred_region
          %635 = dma.done %s628, 128
        $region100: #{forward.1} parent=87 // pred_fallthru
          _
        // Predicated region
        $region101: #{forward.1} parent=87 // pred_check
          %p636 = pneg %p131
        $region102: #{forward.1} parent=87 // pred_check_branch
          %638 = sbr.rel (%p636) target = $region104
        $region103: #{forward.1} parent=87 // pred_region
          %639 = dma.done [#allocation8], 3072
        $region104: #{forward.1} parent=87 // pred_fallthru
          _
        // Predicated region
        $region105: #{forward.1} parent=87 // pred_check
          %p640 = pneg %p173
        $region106: #{forward.1} parent=87 // pred_check_branch
          %642 = sbr.rel (%p640) target = $region108
        $region107: #{forward.1} parent=87 // pred_region
          %643 = dma.done [#allocation8], 3072
        $region108: #{forward.1} parent=87 // pred_fallthru
          _
        // Predicated region
        $region109: #{forward.1} parent=87 // pred_check
          %p644 = pneg %p341
        $region110: #{forward.1} parent=87 // pred_check_branch
          %646 = sbr.rel (%p644) target = $region112
        $region111: #{forward.1} parent=87 // pred_region
          %647 = dma.done [#allocation11], 1024
        $region112: #{forward.1} parent=87 // pred_fallthru
          _
        // Predicated region
        $region113: #{forward.1} parent=87 // pred_check
          %p648 = pneg %p383
        $region114: #{forward.1} parent=87 // pred_check_branch
          %650 = sbr.rel (%p648) target = $region116
        $region115: #{forward.1} parent=87 // pred_region
          %651 = dma.done [#allocation11], 1024
        $region116: #{forward.1} parent=87 // pred_fallthru
          _
        // Predicated region
        $region117: #{forward.1} parent=87 // pred_check
          %p652 = pneg %p404
        $region118: #{forward.1} parent=87 // pred_check_branch
          %654 = sbr.rel (%p652) target = $region120
        $region119: #{forward.1} parent=87 // pred_region
          %655 = dma.done [#allocation14], 16
        $region120: #{forward.1} parent=87 // pred_fallthru
          _
        %s656 = sand.u32 %s45, 1
        %s657 = scalar_lea.sflag [#allocation3], %s656
        %s658 = sand.u32 %s45, 1
        %s659 = smul.addr %s658, 64
        %s660 = scalar_lea.vmem [#allocation2], %s659
        %p661 = pneg %p58
        %p662 = pneg %p55
        %s663 = sand.u32 %s37, 1
        %s664 = scalar_lea.sflag [#allocation5], %s663
        %s665 = sand.u32 %s71, 1
        %s666 = smul.addr %s665, 64
        %s667 = scalar_lea.vmem [#allocation4], %s666
        %p668 = pneg %p84
        %p669 = pneg %p81
        %s670 = sand.u32 %s37, 1
        %s671 = scalar_lea.sflag [#allocation5], %s670
        %s672 = sand.u32 %s97, 1
        %s673 = smul.addr %s672, 8
        %s674 = scalar_lea.vmem [#allocation6], %s673
        %p675 = pneg %p110
        %p676 = pneg %p107
        %p677 = pneg %p131
        %p678 = pneg %p128
        %p679 = pneg %p152
        %p680 = pneg %p149
        %p681 = pneg %p173
        %p682 = pneg %p170
        %p683 = pneg %p194
        %p684 = pneg %p191
        %p685 = pneg %p215
        %p686 = pneg %p212
        %p687 = pneg %p236
        %p688 = pneg %p233
        %p689 = pneg %p257
        %p690 = pneg %p254
        %p691 = pneg %p278
        %p692 = pneg %p275
        %p693 = pneg %p299
        %p694 = pneg %p296
        %p695 = pneg %p320
        %p696 = pneg %p317
        %p697 = pneg %p341
        %p698 = pneg %p338
        %p699 = pneg %p362
        %p700 = pneg %p359
        %p701 = pneg %p383
        %p702 = pneg %p380
        %p703 = pneg %p404
        %p704 = pneg %p401
        %p705 = pneg %p430
        %p706 = pneg %p427
        %p707 = scmp.lt.s32.totalorder %s37, 3
        %s708 = scalar_select %p707, %s37, 3
        %s709 = smul.addr %s708, 2
        %s710 = smul.addr %s709, 8
        %s711 = scalar_lea.vmem %s17, %s710
        %p712 = scmp.lt.s32.totalorder %s37, 3
        %s713 = scalar_select %p712, %s37, 3
        %s714 = smul.addr %s713, 2
        %s715 = smul.addr %s714, 8
        %s716 = scalar_lea.vmem %s17, %s715
        %v718 = vld [vmem:[%s622] sm:$0xf]
        %v719 = vld [vmem:[%s622 + $0x4] sm:$0xf]
        %v720 = vld [vmem:[%s622 + $0x8] sm:$0xf]
        %v721 = vld [vmem:[%s622 + $0xc] sm:$0xf]
        %v722 = vld [vmem:[%s622 + $0x10] sm:$0xf]
        %v723 = vld [vmem:[%s622 + $0x14] sm:$0xf]
        %v724 = vld [vmem:[%s622 + $0x18] sm:$0xf]
        %v725 = vld [vmem:[%s622 + $0x1c] sm:$0xf]
        %v726 = vld [vmem:[%s622 + $0x20] sm:$0xf]
        %v727 = vld [vmem:[%s622 + $0x24] sm:$0xf]
        %v728 = vld [vmem:[%s622 + $0x28] sm:$0xf]
        %v729 = vld [vmem:[%s622 + $0x2c] sm:$0xf]
        %v730 = vld [vmem:[%s622 + $0x30] sm:$0xf]
        %v731 = vld [vmem:[%s622 + $0x34] sm:$0xf]
        %v732 = vld [vmem:[%s622 + $0x38] sm:$0xf]
        %v733 = vld [vmem:[%s622 + $0x3c] sm:$0xf]
        %v734 = vld [vmem:[%s613] sm:$0xf]
        %v735 = vld [vmem:[%s613 + $0x4] sm:$0xf]
        %v736 = vld [vmem:[%s613 + $0x8] sm:$0xf]
        %v737 = vld [vmem:[%s613 + $0xc] sm:$0xf]
        %v738 = vld [vmem:[%s613 + $0x10] sm:$0xf]
        %v739 = vld [vmem:[%s613 + $0x14] sm:$0xf]
        %v740 = vld [vmem:[%s613 + $0x18] sm:$0xf]
        %v741 = vld [vmem:[%s613 + $0x1c] sm:$0xf]
        %v742 = vld [vmem:[%s613 + $0x20] sm:$0xf]
        %v743 = vld [vmem:[%s613 + $0x24] sm:$0xf]
        %v744 = vld [vmem:[%s613 + $0x28] sm:$0xf]
        %v745 = vld [vmem:[%s613 + $0x2c] sm:$0xf]
        %v746 = vld [vmem:[%s613 + $0x30] sm:$0xf]
        %v747 = vld [vmem:[%s613 + $0x34] sm:$0xf]
        %v748 = vld [vmem:[%s613 + $0x38] sm:$0xf]
        %v749 = vld [vmem:[%s613 + $0x3c] sm:$0xf]
        %v766 = vunpack.c.l.b16 %v718
        %v767 = vunpack.c.l.b16 %v719
        %v768 = vunpack.c.l.b16 %v720
        %v769 = vunpack.c.l.b16 %v721
        %v770 = vunpack.c.l.b16 %v722
        %v771 = vunpack.c.l.b16 %v723
        %v772 = vunpack.c.l.b16 %v724
        %v773 = vunpack.c.l.b16 %v725
        %v774 = vunpack.c.l.b16 %v726
        %v775 = vunpack.c.l.b16 %v727
        %v776 = vunpack.c.l.b16 %v728
        %v777 = vunpack.c.l.b16 %v729
        %v778 = vunpack.c.l.b16 %v730
        %v779 = vunpack.c.l.b16 %v731
        %v780 = vunpack.c.l.b16 %v732
        %v781 = vunpack.c.l.b16 %v733
        %v782 = vpack.c.b16 %v767, %v766
        %v783 = vpack.c.b16 %v769, %v768
        %v784 = vpack.c.b16 %v771, %v770
        %v785 = vpack.c.b16 %v773, %v772
        %v786 = vpack.c.b16 %v775, %v774
        %v787 = vpack.c.b16 %v777, %v776
        %v788 = vpack.c.b16 %v779, %v778
        %v789 = vpack.c.b16 %v781, %v780
        %v814 = vunpack.c.l.b16 %v734
        %v815 = vunpack.c.l.b16 %v735
        %v816 = vunpack.c.l.b16 %v736
        %v817 = vunpack.c.l.b16 %v737
        %v818 = vunpack.c.l.b16 %v738
        %v819 = vunpack.c.l.b16 %v739
        %v820 = vunpack.c.l.b16 %v740
        %v821 = vunpack.c.l.b16 %v741
        %v822 = vunpack.c.l.b16 %v742
        %v823 = vunpack.c.l.b16 %v743
        %v824 = vunpack.c.l.b16 %v744
        %v825 = vunpack.c.l.b16 %v745
        %v826 = vunpack.c.l.b16 %v746
        %v827 = vunpack.c.l.b16 %v747
        %v828 = vunpack.c.l.b16 %v748
        %v829 = vunpack.c.l.b16 %v749
        %v830 = vpack.c.b16 %v815, %v814
        %v831 = vpack.c.b16 %v817, %v816
        %v832 = vpack.c.b16 %v819, %v818
        %v833 = vpack.c.b16 %v821, %v820
        %v834 = vpack.c.b16 %v823, %v822
        %v835 = vpack.c.b16 %v825, %v824
        %v836 = vpack.c.b16 %v827, %v826
        %v837 = vpack.c.b16 %v829, %v828
        %846 = vmatprep.subr.bf16.mxu0 0
        %847 = vmatpush1.bf16.msra.mxu0 %v830
        %848 = vmatprep.subr.bf16.mxu0 0
        %849 = vmatpush1.bf16.msra.mxu0 %v831
        %850 = vmatprep.subr.bf16.mxu0 0
        %851 = vmatpush1.bf16.msra.mxu0 %v832
        %852 = vmatprep.subr.bf16.mxu0 0
        %853 = vmatpush1.bf16.msra.mxu0 %v833
        %854 = vmatprep.subr.bf16.mxu0 0
        %855 = vmatpush1.bf16.msra.mxu0 %v834
        %856 = vmatprep.subr.bf16.mxu0 0
        %857 = vmatpush1.bf16.msra.mxu0 %v835
        %858 = vmatprep.subr.bf16.mxu0 0
        %859 = vmatpush1.bf16.msra.mxu0 %v836
        %860 = vmatprep.subr.bf16.mxu0 0
        %861 = vmatpush1.bf16.msra.mxu0 %v837
        %862 = vmatprep.subr.bf16.mxu0 0
        %863 = vmatpush1.bf16.msra.mxu0 0
        %864 = vmatprep.subr.bf16.mxu0 0
        %865 = vmatpush1.bf16.msra.mxu0 0
        %866 = vmatprep.subr.bf16.mxu0 0
        %867 = vmatpush1.bf16.msra.mxu0 0
        %868 = vmatprep.subr.bf16.mxu0 0
        %869 = vmatpush1.bf16.msra.mxu0 0
        %870 = vmatprep.subr.bf16.mxu0 0
        %871 = vmatpush1.bf16.msra.mxu0 0
        %872 = vmatprep.subr.bf16.mxu0 0
        %873 = vmatpush1.bf16.msra.mxu0 0
        %874 = vmatprep.subr.bf16.mxu0 0
        %875 = vmatpush1.bf16.msra.mxu0 0
        %876 = vmatprep.subr.bf16.mxu0 0
        %877 = vmatpush1.bf16.msra.mxu0 0
        %878 = vmatprep.mubr.bf16.mxu0 0
        %879 = vmatmul.mubr.bf16.gmra.mrb[0].mxu0 %v782
        %v880 = vpop.f32.mrb[0].mxu0
        %v881 = vadd.f32 0.0, %v880
        %v882 = vpop.f32.mrb[0].mxu0
        %v883 = vpop.f32.mrb[0].mxu0
        %v884 = vadd.f32 0.0, %v883
        %v885 = vpop.f32.mrb[0].mxu0
        %886 = vmatprep.mubr.bf16.mxu0 0
        %887 = vmatmul.mubr.bf16.gmra.mrb[0].mxu0 %v783
        %v888 = vpop.f32.mrb[0].mxu0
        %v889 = vadd.f32 0.0, %v888
        %v890 = vpop.f32.mrb[0].mxu0
        %v891 = vpop.f32.mrb[0].mxu0
        %v892 = vadd.f32 0.0, %v891
        %v893 = vpop.f32.mrb[0].mxu0
        %894 = vmatprep.mubr.bf16.mxu0 0
        %895 = vmatmul.mubr.bf16.gmra.mrb[0].mxu0 %v784
        %v896 = vpop.f32.mrb[0].mxu0
        %v897 = vadd.f32 0.0, %v896
        %v898 = vpop.f32.mrb[0].mxu0
        %v899 = vpop.f32.mrb[0].mxu0
        %v900 = vadd.f32 0.0, %v899
        %v901 = vpop.f32.mrb[0].mxu0
        %902 = vmatprep.mubr.bf16.mxu0 0
        %903 = vmatmul.mubr.bf16.gmra.mrb[0].mxu0 %v785
        %v904 = vpop.f32.mrb[0].mxu0
        %v905 = vadd.f32 0.0, %v904
        %v906 = vpop.f32.mrb[0].mxu0
        %v907 = vpop.f32.mrb[0].mxu0
        %v908 = vadd.f32 0.0, %v907
        %v909 = vpop.f32.mrb[0].mxu0
        %910 = vmatprep.mubr.bf16.mxu0 0
        %911 = vmatmul.mubr.bf16.gmra.mrb[0].mxu0 %v786
        %v912 = vpop.f32.mrb[0].mxu0
        %v913 = vadd.f32 0.0, %v912
        %v914 = vpop.f32.mrb[0].mxu0
        %v915 = vpop.f32.mrb[0].mxu0
        %v916 = vadd.f32 0.0, %v915
        %v917 = vpop.f32.mrb[0].mxu0
        %918 = vmatprep.mubr.bf16.mxu0 0
        %919 = vmatmul.mubr.bf16.gmra.mrb[0].mxu0 %v787
        %v920 = vpop.f32.mrb[0].mxu0
        %v921 = vadd.f32 0.0, %v920
        %v922 = vpop.f32.mrb[0].mxu0
        %v923 = vpop.f32.mrb[0].mxu0
        %v924 = vadd.f32 0.0, %v923
        %v925 = vpop.f32.mrb[0].mxu0
        %926 = vmatprep.mubr.bf16.mxu0 0
        %927 = vmatmul.mubr.bf16.gmra.mrb[0].mxu0 %v788
        %v928 = vpop.f32.mrb[0].mxu0
        %v929 = vadd.f32 0.0, %v928
        %v930 = vpop.f32.mrb[0].mxu0
        %v931 = vpop.f32.mrb[0].mxu0
        %v932 = vadd.f32 0.0, %v931
        %v933 = vpop.f32.mrb[0].mxu0
        %934 = vmatprep.mubr.bf16.mxu0 0
        %935 = vmatmul.mubr.bf16.gmra.mrb[0].mxu0 %v789
        %v936 = vpop.f32.mrb[0].mxu0
        %v937 = vadd.f32 0.0, %v936
        %v938 = vpop.f32.mrb[0].mxu0
        %v939 = vpop.f32.mrb[0].mxu0
        %v940 = vadd.f32 0.0, %v939
        %v941 = vpop.f32.mrb[0].mxu0
        %942 = vdwg.mxu0
        %v943 = vpack.c.bf16 %v884, %v881
        %v944 = vpack.c.bf16 %v892, %v889
        %v945 = vpack.c.bf16 %v900, %v897
        %v946 = vpack.c.bf16 %v908, %v905
        %v947 = vpack.c.bf16 %v916, %v913
        %v948 = vpack.c.bf16 %v924, %v921
        %v949 = vpack.c.bf16 %v932, %v929
        %v950 = vpack.c.bf16 %v940, %v937
        %v951 = vld [vmem:[#allocation7] sm:$0xf]
        %v952 = vld [vmem:[#allocation7 + $0x4] sm:$0xf]
        %v953 = vld [vmem:[#allocation7 + $0x8] sm:$0xf]
        %v954 = vld [vmem:[#allocation7 + $0xc] sm:$0xf]
        %v955 = vld [vmem:[#allocation7 + $0x10] sm:$0xf]
        %v956 = vld [vmem:[#allocation7 + $0x14] sm:$0xf]
        %v957 = vld [vmem:[#allocation7 + $0x18] sm:$0xf]
        %v958 = vld [vmem:[#allocation7 + $0x1c] sm:$0xf]
        %v959 = vld [vmem:[#allocation7 + $0x20] sm:$0xf]
        %v960 = vld [vmem:[#allocation7 + $0x24] sm:$0xf]
        %v961 = vld [vmem:[#allocation7 + $0x28] sm:$0xf]
        %v962 = vld [vmem:[#allocation7 + $0x2c] sm:$0xf]
        %v963 = vld [vmem:[#allocation7 + $0x30] sm:$0xf]
        %v964 = vld [vmem:[#allocation7 + $0x34] sm:$0xf]
        %v965 = vld [vmem:[#allocation7 + $0x38] sm:$0xf]
        %v966 = vld [vmem:[#allocation7 + $0x3c] sm:$0xf]
        %v967 = vld [vmem:[%s4] sm:$0x1]
        %v969 = vlaneseq
        %v970 = vshrl.u32 %v969, 7
        %v971 = vsub.s32 0, %v970
        %v972 = vrot.slane %v967, %v971
        %v990 = vunpack.c.l.b16 %v951
        %v991 = vunpack.c.l.b16 %v952
        %v992 = vunpack.c.l.b16 %v953
        %v993 = vunpack.c.l.b16 %v954
        %v994 = vunpack.c.l.b16 %v955
        %v995 = vunpack.c.l.b16 %v956
        %v996 = vunpack.c.l.b16 %v957
        %v997 = vunpack.c.l.b16 %v958
        %v998 = vunpack.c.l.b16 %v959
        %v999 = vunpack.c.l.b16 %v960
        %v1000 = vunpack.c.l.b16 %v961
        %v1001 = vunpack.c.l.b16 %v962
        %v1002 = vunpack.c.l.b16 %v963
        %v1003 = vunpack.c.l.b16 %v964
        %v1004 = vunpack.c.l.b16 %v965
        %v1005 = vunpack.c.l.b16 %v966
        %v1006 = vpack.c.b16 %v991, %v990
        %v1007 = vpack.c.b16 %v993, %v992
        %v1008 = vpack.c.b16 %v995, %v994
        %v1009 = vpack.c.b16 %v997, %v996
        %v1010 = vpack.c.b16 %v999, %v998
        %v1011 = vpack.c.b16 %v1001, %v1000
        %v1012 = vpack.c.b16 %v1003, %v1002
        %v1013 = vpack.c.b16 %v1005, %v1004
        %1022 = vmatprep.subr.bf16.mxu0 0
        %1023 = vmatpush1.bf16.msra.mxu0 %v1006
        %1024 = vmatprep.subr.bf16.mxu0 0
        %1025 = vmatpush1.bf16.msra.mxu0 %v1007
        %1026 = vmatprep.subr.bf16.mxu0 0
        %1027 = vmatpush1.bf16.msra.mxu0 %v1008
        %1028 = vmatprep.subr.bf16.mxu0 0
        %1029 = vmatpush1.bf16.msra.mxu0 %v1009
        %1030 = vmatprep.subr.bf16.mxu0 0
        %1031 = vmatpush1.bf16.msra.mxu0 %v1010
        %1032 = vmatprep.subr.bf16.mxu0 0
        %1033 = vmatpush1.bf16.msra.mxu0 %v1011
        %1034 = vmatprep.subr.bf16.mxu0 0
        %1035 = vmatpush1.bf16.msra.mxu0 %v1012
        %1036 = vmatprep.subr.bf16.mxu0 0
        %1037 = vmatpush1.bf16.msra.mxu0 %v1013
        %1038 = vmatprep.subr.bf16.mxu0 0
        %1039 = vmatpush1.bf16.msra.mxu0 0
        %1040 = vmatprep.subr.bf16.mxu0 0
        %1041 = vmatpush1.bf16.msra.mxu0 0
        %1042 = vmatprep.subr.bf16.mxu0 0
        %1043 = vmatpush1.bf16.msra.mxu0 0
        %1044 = vmatprep.subr.bf16.mxu0 0
        %1045 = vmatpush1.bf16.msra.mxu0 0
        %1046 = vmatprep.subr.bf16.mxu0 0
        %1047 = vmatpush1.bf16.msra.mxu0 0
        %1048 = vmatprep.subr.bf16.mxu0 0
        %1049 = vmatpush1.bf16.msra.mxu0 0
        %1050 = vmatprep.subr.bf16.mxu0 0
        %1051 = vmatpush1.bf16.msra.mxu0 0
        %1052 = vmatprep.subr.bf16.mxu0 0
        %1053 = vmatpush1.bf16.msra.mxu0 0
        %1054 = vmatprep.mubr.bf16.mxu0 0
        %1055 = vmatmul.mubr.bf16.gmra.mrb[0].mxu0 %v943
        %v1056 = vpop.f32.mrb[0].mxu0
        %v1057 = vadd.f32 %v972, %v1056
        %v1058 = vpop.f32.mrb[0].mxu0
        %v1059 = vpop.f32.mrb[0].mxu0
        %v1060 = vadd.f32 %v972, %v1059
        %v1061 = vpop.f32.mrb[0].mxu0
        %1062 = vmatprep.mubr.bf16.mxu0 0
        %1063 = vmatmul.mubr.bf16.gmra.mrb[0].mxu0 %v944
        %v1064 = vpop.f32.mrb[0].mxu0
        %v1065 = vadd.f32 %v972, %v1064
        %v1066 = vpop.f32.mrb[0].mxu0
        %v1067 = vpop.f32.mrb[0].mxu0
        %v1068 = vadd.f32 %v972, %v1067
        %v1069 = vpop.f32.mrb[0].mxu0
        %1070 = vmatprep.mubr.bf16.mxu0 0
        %1071 = vmatmul.mubr.bf16.gmra.mrb[0].mxu0 %v945
        %v1072 = vpop.f32.mrb[0].mxu0
        %v1073 = vadd.f32 %v972, %v1072
        %v1074 = vpop.f32.mrb[0].mxu0
        %v1075 = vpop.f32.mrb[0].mxu0
        %v1076 = vadd.f32 %v972, %v1075
        %v1077 = vpop.f32.mrb[0].mxu0
        %1078 = vmatprep.mubr.bf16.mxu0 0
        %1079 = vmatmul.mubr.bf16.gmra.mrb[0].mxu0 %v946
        %v1080 = vpop.f32.mrb[0].mxu0
        %v1081 = vadd.f32 %v972, %v1080
        %v1082 = vpop.f32.mrb[0].mxu0
        %v1083 = vpop.f32.mrb[0].mxu0
        %v1084 = vadd.f32 %v972, %v1083
        %v1085 = vpop.f32.mrb[0].mxu0
        %1086 = vmatprep.mubr.bf16.mxu0 0
        %1087 = vmatmul.mubr.bf16.gmra.mrb[0].mxu0 %v947
        %v1088 = vpop.f32.mrb[0].mxu0
        %v1089 = vadd.f32 %v972, %v1088
        %v1090 = vpop.f32.mrb[0].mxu0
        %v1091 = vpop.f32.mrb[0].mxu0
        %v1092 = vadd.f32 %v972, %v1091
        %v1093 = vpop.f32.mrb[0].mxu0
        %1094 = vmatprep.mubr.bf16.mxu0 0
        %1095 = vmatmul.mubr.bf16.gmra.mrb[0].mxu0 %v948
        %v1096 = vpop.f32.mrb[0].mxu0
        %v1097 = vadd.f32 %v972, %v1096
        %v1098 = vpop.f32.mrb[0].mxu0
        %v1099 = vpop.f32.mrb[0].mxu0
        %v1100 = vadd.f32 %v972, %v1099
        %v1101 = vpop.f32.mrb[0].mxu0
        %1102 = vmatprep.mubr.bf16.mxu0 0
        %1103 = vmatmul.mubr.bf16.gmra.mrb[0].mxu0 %v949
        %v1104 = vpop.f32.mrb[0].mxu0
        %v1105 = vadd.f32 %v972, %v1104
        %v1106 = vpop.f32.mrb[0].mxu0
        %v1107 = vpop.f32.mrb[0].mxu0
        %v1108 = vadd.f32 %v972, %v1107
        %v1109 = vpop.f32.mrb[0].mxu0
        %1110 = vmatprep.mubr.bf16.mxu0 0
        %1111 = vmatmul.mubr.bf16.gmra.mrb[0].mxu0 %v950
        %v1112 = vpop.f32.mrb[0].mxu0
        %v1113 = vadd.f32 %v972, %v1112
        %v1114 = vpop.f32.mrb[0].mxu0
        %v1115 = vpop.f32.mrb[0].mxu0
        %v1116 = vadd.f32 %v972, %v1115
        %v1117 = vpop.f32.mrb[0].mxu0
        %1118 = vdwg.mxu0
        %v1119 = vld [vmem:[%s7] sm:$0x1]
        %v1120 = vld [vmem:[%s8] sm:$0x1]
        %v1121 = vld [vmem:[%s9] sm:$0x1]
        %v1122 = vadd.f32 %v1057, %v1060
        %v1123 = vadd.f32 %v1122, %v1065
        %v1124 = vadd.f32 %v1123, %v1068
        %v1125 = vadd.f32 %v1124, %v1073
        %v1126 = vadd.f32 %v1125, %v1076
        %v1127 = vadd.f32 %v1126, %v1081
        %v1128 = vadd.f32 %v1127, %v1084
        %v1129 = vadd.f32 %v1128, %v1089
        %v1130 = vadd.f32 %v1129, %v1092
        %v1131 = vadd.f32 %v1130, %v1097
        %v1132 = vadd.f32 %v1131, %v1100
        %v1133 = vadd.f32 %v1132, %v1105
        %v1134 = vadd.f32 %v1133, %v1108
        %v1135 = vadd.f32 %v1134, %v1113
        %v1136 = vadd.f32 %v1135, %v1116
        %v1137 = vrot.slane %v1136, 4
        %v1138 = vadd.f32 %v1136, %v1137
        %v1139 = vrot.slane %v1138, 2
        %v1140 = vadd.f32 %v1138, %v1139
        %v1141 = vrot.slane %v1140, 1
        %v1142 = vadd.f32 %v1140, %v1141
        %v1143 = vmul.f32 %v1057, %v1057
        %v1144 = vmul.f32 %v1060, %v1060
        %v1145 = vmul.f32 %v1065, %v1065
        %v1146 = vmul.f32 %v1068, %v1068
        %v1147 = vmul.f32 %v1073, %v1073
        %v1148 = vmul.f32 %v1076, %v1076
        %v1149 = vmul.f32 %v1081, %v1081
        %v1150 = vmul.f32 %v1084, %v1084
        %v1151 = vmul.f32 %v1089, %v1089
        %v1152 = vmul.f32 %v1092, %v1092
        %v1153 = vmul.f32 %v1097, %v1097
        %v1154 = vmul.f32 %v1100, %v1100
        %v1155 = vmul.f32 %v1105, %v1105
        %v1156 = vmul.f32 %v1108, %v1108
        %v1157 = vmul.f32 %v1113, %v1113
        %v1158 = vmul.f32 %v1116, %v1116
        %v1159 = vadd.f32 %v1143, %v1144
        %v1160 = vadd.f32 %v1159, %v1145
        %v1161 = vadd.f32 %v1160, %v1146
        %v1162 = vadd.f32 %v1161, %v1147
        %v1163 = vadd.f32 %v1162, %v1148
        %v1164 = vadd.f32 %v1163, %v1149
        %v1165 = vadd.f32 %v1164, %v1150
        %v1166 = vadd.f32 %v1165, %v1151
        %v1167 = vadd.f32 %v1166, %v1152
        %v1168 = vadd.f32 %v1167, %v1153
        %v1169 = vadd.f32 %v1168, %v1154
        %v1170 = vadd.f32 %v1169, %v1155
        %v1171 = vadd.f32 %v1170, %v1156
        %v1172 = vadd.f32 %v1171, %v1157
        %v1173 = vadd.f32 %v1172, %v1158
        %v1174 = vrot.slane %v1173, 4
        %v1175 = vadd.f32 %v1173, %v1174
        %v1176 = vrot.slane %v1175, 2
        %v1177 = vadd.f32 %v1175, %v1176
        %v1178 = vrot.slane %v1177, 1
        %v1179 = vadd.f32 %v1177, %v1178
        %v1180 = vmul.f32 %v1142, 0.0078125
        %v1181 = vmul.f32 %v1179, 0.0078125
        %v1182 = vmul.f32 %v1121, 2.0
        %v1183 = vmul.f32 %v1121, %v1121
        %v1184 = vsub.f32 %v1182, %v1183
        %v1185 = vmul.f32 %v1180, %v1180
        %v1186 = vmul.f32 %v1184, %v1185
        %v1187 = vsub.f32 %v1181, %v1186
        %v1188 = vadd.f32 %v1187, 1e-05
        %v1189 = vrsqrt.pop %v1188
        %v1190 = vmul.f32 %v1119, %v1189
        %v1191 = vmul.f32 %v1121, %v1180
        %v1193 = vlaneseq
        %v1194 = vshrl.u32 %v1193, 7
        %v1195 = vsub.s32 0, %v1194
        %v1196 = vrot.slane %v1191, %v1195
        %v1198 = vsub.f32 %v1057, %v1196
        %v1199 = vsub.f32 %v1060, %v1196
        %v1200 = vsub.f32 %v1065, %v1196
        %v1201 = vsub.f32 %v1068, %v1196
        %v1202 = vsub.f32 %v1073, %v1196
        %v1203 = vsub.f32 %v1076, %v1196
        %v1204 = vsub.f32 %v1081, %v1196
        %v1205 = vsub.f32 %v1084, %v1196
        %v1206 = vsub.f32 %v1089, %v1196
        %v1207 = vsub.f32 %v1092, %v1196
        %v1208 = vsub.f32 %v1097, %v1196
        %v1209 = vsub.f32 %v1100, %v1196
        %v1210 = vsub.f32 %v1105, %v1196
        %v1211 = vsub.f32 %v1108, %v1196
        %v1212 = vsub.f32 %v1113, %v1196
        %v1213 = vsub.f32 %v1116, %v1196
        %v1215 = vlaneseq
        %v1216 = vshrl.u32 %v1215, 7
        %v1217 = vsub.s32 0, %v1216
        %v1218 = vrot.slane %v1190, %v1217
        %v1220 = vmul.f32 %v1198, %v1218
        %v1221 = vmul.f32 %v1199, %v1218
        %v1222 = vmul.f32 %v1200, %v1218
        %v1223 = vmul.f32 %v1201, %v1218
        %v1224 = vmul.f32 %v1202, %v1218
        %v1225 = vmul.f32 %v1203, %v1218
        %v1226 = vmul.f32 %v1204, %v1218
        %v1227 = vmul.f32 %v1205, %v1218
        %v1228 = vmul.f32 %v1206, %v1218
        %v1229 = vmul.f32 %v1207, %v1218
        %v1230 = vmul.f32 %v1208, %v1218
        %v1231 = vmul.f32 %v1209, %v1218
        %v1232 = vmul.f32 %v1210, %v1218
        %v1233 = vmul.f32 %v1211, %v1218
        %v1234 = vmul.f32 %v1212, %v1218
        %v1235 = vmul.f32 %v1213, %v1218
        %v1237 = vlaneseq
        %v1238 = vshrl.u32 %v1237, 7
        %v1239 = vsub.s32 0, %v1238
        %v1240 = vrot.slane %v1120, %v1239
        %v1242 = vadd.f32 %v1220, %v1240
        %v1243 = vadd.f32 %v1221, %v1240
        %v1244 = vadd.f32 %v1222, %v1240
        %v1245 = vadd.f32 %v1223, %v1240
        %v1246 = vadd.f32 %v1224, %v1240
        %v1247 = vadd.f32 %v1225, %v1240
        %v1248 = vadd.f32 %v1226, %v1240
        %v1249 = vadd.f32 %v1227, %v1240
        %v1250 = vadd.f32 %v1228, %v1240
        %v1251 = vadd.f32 %v1229, %v1240
        %v1252 = vadd.f32 %v1230, %v1240
        %v1253 = vadd.f32 %v1231, %v1240
        %v1254 = vadd.f32 %v1232, %v1240
        %v1255 = vadd.f32 %v1233, %v1240
        %v1256 = vadd.f32 %v1234, %v1240
        %v1257 = vadd.f32 %v1235, %v1240
        %vm1258 = vcmp.gt.f32.partialorder %v1242, 0.0
        %vm1259 = vcmp.gt.f32.partialorder %v1243, 0.0
        %vm1260 = vcmp.gt.f32.partialorder %v1244, 0.0
        %vm1261 = vcmp.gt.f32.partialorder %v1245, 0.0
        %vm1262 = vcmp.gt.f32.partialorder %v1246, 0.0
        %vm1263 = vcmp.gt.f32.partialorder %v1247, 0.0
        %vm1264 = vcmp.gt.f32.partialorder %v1248, 0.0
        %vm1265 = vcmp.gt.f32.partialorder %v1249, 0.0
        %vm1266 = vcmp.gt.f32.partialorder %v1250, 0.0
        %vm1267 = vcmp.gt.f32.partialorder %v1251, 0.0
        %vm1268 = vcmp.gt.f32.partialorder %v1252, 0.0
        %vm1269 = vcmp.gt.f32.partialorder %v1253, 0.0
        %vm1270 = vcmp.gt.f32.partialorder %v1254, 0.0
        %vm1271 = vcmp.gt.f32.partialorder %v1255, 0.0
        %vm1272 = vcmp.gt.f32.partialorder %v1256, 0.0
        %vm1273 = vcmp.gt.f32.partialorder %v1257, 0.0
        %v1274 = vmul.f32 %v1242, 0.01
        %v1275 = vmul.f32 %v1243, 0.01
        %v1276 = vmul.f32 %v1244, 0.01
        %v1277 = vmul.f32 %v1245, 0.01
        %v1278 = vmul.f32 %v1246, 0.01
        %v1279 = vmul.f32 %v1247, 0.01
        %v1280 = vmul.f32 %v1248, 0.01
        %v1281 = vmul.f32 %v1249, 0.01
        %v1282 = vmul.f32 %v1250, 0.01
        %v1283 = vmul.f32 %v1251, 0.01
        %v1284 = vmul.f32 %v1252, 0.01
        %v1285 = vmul.f32 %v1253, 0.01
        %v1286 = vmul.f32 %v1254, 0.01
        %v1287 = vmul.f32 %v1255, 0.01
        %v1288 = vmul.f32 %v1256, 0.01
        %v1289 = vmul.f32 %v1257, 0.01
        %v1290 = vsel %vm1258, %v1242, %v1274
        %v1291 = vsel %vm1259, %v1243, %v1275
        %v1292 = vsel %vm1260, %v1244, %v1276
        %v1293 = vsel %vm1261, %v1245, %v1277
        %v1294 = vsel %vm1262, %v1246, %v1278
        %v1295 = vsel %vm1263, %v1247, %v1279
        %v1296 = vsel %vm1264, %v1248, %v1280
        %v1297 = vsel %vm1265, %v1249, %v1281
        %v1298 = vsel %vm1266, %v1250, %v1282
        %v1299 = vsel %vm1267, %v1251, %v1283
        %v1300 = vsel %vm1268, %v1252, %v1284
        %v1301 = vsel %vm1269, %v1253, %v1285
        %v1302 = vsel %vm1270, %v1254, %v1286
        %v1303 = vsel %vm1271, %v1255, %v1287
        %v1304 = vsel %vm1272, %v1256, %v1288
        %v1305 = vsel %vm1273, %v1257, %v1289
        %v1306 = vpack.c.bf16 %v1291, %v1290
        %v1307 = vpack.c.bf16 %v1293, %v1292
        %v1308 = vpack.c.bf16 %v1295, %v1294
        %v1309 = vpack.c.bf16 %v1297, %v1296
        %v1310 = vpack.c.bf16 %v1299, %v1298
        %v1311 = vpack.c.bf16 %v1301, %v1300
        %v1312 = vpack.c.bf16 %v1303, %v1302
        %v1313 = vpack.c.bf16 %v1305, %v1304
        %v1314 = vld [vmem:[#allocation9] sm:$0xf]
        %v1315 = vld [vmem:[#allocation9 + $0x4] sm:$0xf]
        %v1316 = vld [vmem:[#allocation9 + $0x8] sm:$0xf]
        %v1317 = vld [vmem:[#allocation9 + $0xc] sm:$0xf]
        %v1318 = vld [vmem:[#allocation9 + $0x10] sm:$0xf]
        %v1319 = vld [vmem:[#allocation9 + $0x14] sm:$0xf]
        %v1320 = vld [vmem:[#allocation9 + $0x18] sm:$0xf]
        %v1321 = vld [vmem:[#allocation9 + $0x1c] sm:$0xf]
        %v1322 = vld [vmem:[#allocation9 + $0x20] sm:$0xf]
        %v1323 = vld [vmem:[#allocation9 + $0x24] sm:$0xf]
        %v1324 = vld [vmem:[#allocation9 + $0x28] sm:$0xf]
        %v1325 = vld [vmem:[#allocation9 + $0x2c] sm:$0xf]
        %v1326 = vld [vmem:[#allocation9 + $0x30] sm:$0xf]
        %v1327 = vld [vmem:[#allocation9 + $0x34] sm:$0xf]
        %v1328 = vld [vmem:[#allocation9 + $0x38] sm:$0xf]
        %v1329 = vld [vmem:[#allocation9 + $0x3c] sm:$0xf]
        %v1330 = vld [vmem:[%s6] sm:$0x1]
        %v1332 = vlaneseq
        %v1333 = vshrl.u32 %v1332, 7
        %v1334 = vsub.s32 0, %v1333
        %v1335 = vrot.slane %v1330, %v1334
        %v1353 = vunpack.c.l.b16 %v1314
        %v1354 = vunpack.c.l.b16 %v1315
        %v1355 = vunpack.c.l.b16 %v1316
        %v1356 = vunpack.c.l.b16 %v1317
        %v1357 = vunpack.c.l.b16 %v1318
        %v1358 = vunpack.c.l.b16 %v1319
        %v1359 = vunpack.c.l.b16 %v1320
        %v1360 = vunpack.c.l.b16 %v1321
        %v1361 = vunpack.c.l.b16 %v1322
        %v1362 = vunpack.c.l.b16 %v1323
        %v1363 = vunpack.c.l.b16 %v1324
        %v1364 = vunpack.c.l.b16 %v1325
        %v1365 = vunpack.c.l.b16 %v1326
        %v1366 = vunpack.c.l.b16 %v1327
        %v1367 = vunpack.c.l.b16 %v1328
        %v1368 = vunpack.c.l.b16 %v1329
        %v1369 = vpack.c.b16 %v1354, %v1353
        %v1370 = vpack.c.b16 %v1356, %v1355
        %v1371 = vpack.c.b16 %v1358, %v1357
        %v1372 = vpack.c.b16 %v1360, %v1359
        %v1373 = vpack.c.b16 %v1362, %v1361
        %v1374 = vpack.c.b16 %v1364, %v1363
        %v1375 = vpack.c.b16 %v1366, %v1365
        %v1376 = vpack.c.b16 %v1368, %v1367
        %1385 = vmatprep.subr.bf16.mxu0 0
        %1386 = vmatpush1.bf16.msra.mxu0 %v1369
        %1387 = vmatprep.subr.bf16.mxu0 0
        %1388 = vmatpush1.bf16.msra.mxu0 %v1370
        %1389 = vmatprep.subr.bf16.mxu0 0
        %1390 = vmatpush1.bf16.msra.mxu0 %v1371
        %1391 = vmatprep.subr.bf16.mxu0 0
        %1392 = vmatpush1.bf16.msra.mxu0 %v1372
        %1393 = vmatprep.subr.bf16.mxu0 0
        %1394 = vmatpush1.bf16.msra.mxu0 %v1373
        %1395 = vmatprep.subr.bf16.mxu0 0
        %1396 = vmatpush1.bf16.msra.mxu0 %v1374
        %1397 = vmatprep.subr.bf16.mxu0 0
        %1398 = vmatpush1.bf16.msra.mxu0 %v1375
        %1399 = vmatprep.subr.bf16.mxu0 0
        %1400 = vmatpush1.bf16.msra.mxu0 %v1376
        %1401 = vmatprep.subr.bf16.mxu0 0
        %1402 = vmatpush1.bf16.msra.mxu0 0
        %1403 = vmatprep.subr.bf16.mxu0 0
        %1404 = vmatpush1.bf16.msra.mxu0 0
        %1405 = vmatprep.subr.bf16.mxu0 0
        %1406 = vmatpush1.bf16.msra.mxu0 0
        %1407 = vmatprep.subr.bf16.mxu0 0
        %1408 = vmatpush1.bf16.msra.mxu0 0
        %1409 = vmatprep.subr.bf16.mxu0 0
        %1410 = vmatpush1.bf16.msra.mxu0 0
        %1411 = vmatprep.subr.bf16.mxu0 0
        %1412 = vmatpush1.bf16.msra.mxu0 0
        %1413 = vmatprep.subr.bf16.mxu0 0
        %1414 = vmatpush1.bf16.msra.mxu0 0
        %1415 = vmatprep.subr.bf16.mxu0 0
        %1416 = vmatpush1.bf16.msra.mxu0 0
        %1417 = vmatprep.mubr.bf16.mxu0 0
        %1418 = vmatmul.mubr.bf16.gmra.mrb[0].mxu0 %v1306
        %v1419 = vpop.f32.mrb[0].mxu0
        %v1420 = vadd.f32 %v1335, %v1419
        %v1421 = vpop.f32.mrb[0].mxu0
        %v1422 = vpop.f32.mrb[0].mxu0
        %v1423 = vadd.f32 %v1335, %v1422
        %v1424 = vpop.f32.mrb[0].mxu0
        %1425 = vmatprep.mubr.bf16.mxu0 0
        %1426 = vmatmul.mubr.bf16.gmra.mrb[0].mxu0 %v1307
        %v1427 = vpop.f32.mrb[0].mxu0
        %v1428 = vadd.f32 %v1335, %v1427
        %v1429 = vpop.f32.mrb[0].mxu0
        %v1430 = vpop.f32.mrb[0].mxu0
        %v1431 = vadd.f32 %v1335, %v1430
        %v1432 = vpop.f32.mrb[0].mxu0
        %1433 = vmatprep.mubr.bf16.mxu0 0
        %1434 = vmatmul.mubr.bf16.gmra.mrb[0].mxu0 %v1308
        %v1435 = vpop.f32.mrb[0].mxu0
        %v1436 = vadd.f32 %v1335, %v1435
        %v1437 = vpop.f32.mrb[0].mxu0
        %v1438 = vpop.f32.mrb[0].mxu0
        %v1439 = vadd.f32 %v1335, %v1438
        %v1440 = vpop.f32.mrb[0].mxu0
        %1441 = vmatprep.mubr.bf16.mxu0 0
        %1442 = vmatmul.mubr.bf16.gmra.mrb[0].mxu0 %v1309
        %v1443 = vpop.f32.mrb[0].mxu0
        %v1444 = vadd.f32 %v1335, %v1443
        %v1445 = vpop.f32.mrb[0].mxu0
        %v1446 = vpop.f32.mrb[0].mxu0
        %v1447 = vadd.f32 %v1335, %v1446
        %v1448 = vpop.f32.mrb[0].mxu0
        %1449 = vmatprep.mubr.bf16.mxu0 0
        %1450 = vmatmul.mubr.bf16.gmra.mrb[0].mxu0 %v1310
        %v1451 = vpop.f32.mrb[0].mxu0
        %v1452 = vadd.f32 %v1335, %v1451
        %v1453 = vpop.f32.mrb[0].mxu0
        %v1454 = vpop.f32.mrb[0].mxu0
        %v1455 = vadd.f32 %v1335, %v1454
        %v1456 = vpop.f32.mrb[0].mxu0
        %1457 = vmatprep.mubr.bf16.mxu0 0
        %1458 = vmatmul.mubr.bf16.gmra.mrb[0].mxu0 %v1311
        %v1459 = vpop.f32.mrb[0].mxu0
        %v1460 = vadd.f32 %v1335, %v1459
        %v1461 = vpop.f32.mrb[0].mxu0
        %v1462 = vpop.f32.mrb[0].mxu0
        %v1463 = vadd.f32 %v1335, %v1462
        %v1464 = vpop.f32.mrb[0].mxu0
        %1465 = vmatprep.mubr.bf16.mxu0 0
        %1466 = vmatmul.mubr.bf16.gmra.mrb[0].mxu0 %v1312
        %v1467 = vpop.f32.mrb[0].mxu0
        %v1468 = vadd.f32 %v1335, %v1467
        %v1469 = vpop.f32.mrb[0].mxu0
        %v1470 = vpop.f32.mrb[0].mxu0
        %v1471 = vadd.f32 %v1335, %v1470
        %v1472 = vpop.f32.mrb[0].mxu0
        %1473 = vmatprep.mubr.bf16.mxu0 0
        %1474 = vmatmul.mubr.bf16.gmra.mrb[0].mxu0 %v1313
        %v1475 = vpop.f32.mrb[0].mxu0
        %v1476 = vadd.f32 %v1335, %v1475
        %v1477 = vpop.f32.mrb[0].mxu0
        %v1478 = vpop.f32.mrb[0].mxu0
        %v1479 = vadd.f32 %v1335, %v1478
        %v1480 = vpop.f32.mrb[0].mxu0
        %1481 = vdwg.mxu0
        %v1482 = vld [vmem:[%s10] sm:$0x1]
        %v1483 = vld [vmem:[%s11] sm:$0x1]
        %v1484 = vld [vmem:[%s12] sm:$0x1]
        %v1485 = vadd.f32 %v1420, %v1423
        %v1486 = vadd.f32 %v1485, %v1428
        %v1487 = vadd.f32 %v1486, %v1431
        %v1488 = vadd.f32 %v1487, %v1436
        %v1489 = vadd.f32 %v1488, %v1439
        %v1490 = vadd.f32 %v1489, %v1444
        %v1491 = vadd.f32 %v1490, %v1447
        %v1492 = vadd.f32 %v1491, %v1452
        %v1493 = vadd.f32 %v1492, %v1455
        %v1494 = vadd.f32 %v1493, %v1460
        %v1495 = vadd.f32 %v1494, %v1463
        %v1496 = vadd.f32 %v1495, %v1468
        %v1497 = vadd.f32 %v1496, %v1471
        %v1498 = vadd.f32 %v1497, %v1476
        %v1499 = vadd.f32 %v1498, %v1479
        %v1500 = vrot.slane %v1499, 4
        %v1501 = vadd.f32 %v1499, %v1500
        %v1502 = vrot.slane %v1501, 2
        %v1503 = vadd.f32 %v1501, %v1502
        %v1504 = vrot.slane %v1503, 1
        %v1505 = vadd.f32 %v1503, %v1504
        %v1506 = vmul.f32 %v1420, %v1420
        %v1507 = vmul.f32 %v1423, %v1423
        %v1508 = vmul.f32 %v1428, %v1428
        %v1509 = vmul.f32 %v1431, %v1431
        %v1510 = vmul.f32 %v1436, %v1436
        %v1511 = vmul.f32 %v1439, %v1439
        %v1512 = vmul.f32 %v1444, %v1444
        %v1513 = vmul.f32 %v1447, %v1447
        %v1514 = vmul.f32 %v1452, %v1452
        %v1515 = vmul.f32 %v1455, %v1455
        %v1516 = vmul.f32 %v1460, %v1460
        %v1517 = vmul.f32 %v1463, %v1463
        %v1518 = vmul.f32 %v1468, %v1468
        %v1519 = vmul.f32 %v1471, %v1471
        %v1520 = vmul.f32 %v1476, %v1476
        %v1521 = vmul.f32 %v1479, %v1479
        %v1522 = vadd.f32 %v1506, %v1507
        %v1523 = vadd.f32 %v1522, %v1508
        %v1524 = vadd.f32 %v1523, %v1509
        %v1525 = vadd.f32 %v1524, %v1510
        %v1526 = vadd.f32 %v1525, %v1511
        %v1527 = vadd.f32 %v1526, %v1512
        %v1528 = vadd.f32 %v1527, %v1513
        %v1529 = vadd.f32 %v1528, %v1514
        %v1530 = vadd.f32 %v1529, %v1515
        %v1531 = vadd.f32 %v1530, %v1516
        %v1532 = vadd.f32 %v1531, %v1517
        %v1533 = vadd.f32 %v1532, %v1518
        %v1534 = vadd.f32 %v1533, %v1519
        %v1535 = vadd.f32 %v1534, %v1520
        %v1536 = vadd.f32 %v1535, %v1521
        %v1537 = vrot.slane %v1536, 4
        %v1538 = vadd.f32 %v1536, %v1537
        %v1539 = vrot.slane %v1538, 2
        %v1540 = vadd.f32 %v1538, %v1539
        %v1541 = vrot.slane %v1540, 1
        %v1542 = vadd.f32 %v1540, %v1541
        %v1543 = vmul.f32 %v1505, 0.0078125
        %v1544 = vmul.f32 %v1542, 0.0078125
        %v1545 = vmul.f32 %v1484, 2.0
        %v1546 = vmul.f32 %v1484, %v1484
        %v1547 = vsub.f32 %v1545, %v1546
        %v1548 = vmul.f32 %v1543, %v1543
        %v1549 = vmul.f32 %v1547, %v1548
        %v1550 = vsub.f32 %v1544, %v1549
        %v1551 = vadd.f32 %v1550, 1e-05
        %v1552 = vrsqrt.pop %v1551
        %v1553 = vmul.f32 %v1482, %v1552
        %v1554 = vmul.f32 %v1484, %v1543
        %v1556 = vlaneseq
        %v1557 = vshrl.u32 %v1556, 7
        %v1558 = vsub.s32 0, %v1557
        %v1559 = vrot.slane %v1554, %v1558
        %v1561 = vsub.f32 %v1420, %v1559
        %v1562 = vsub.f32 %v1423, %v1559
        %v1563 = vsub.f32 %v1428, %v1559
        %v1564 = vsub.f32 %v1431, %v1559
        %v1565 = vsub.f32 %v1436, %v1559
        %v1566 = vsub.f32 %v1439, %v1559
        %v1567 = vsub.f32 %v1444, %v1559
        %v1568 = vsub.f32 %v1447, %v1559
        %v1569 = vsub.f32 %v1452, %v1559
        %v1570 = vsub.f32 %v1455, %v1559
        %v1571 = vsub.f32 %v1460, %v1559
        %v1572 = vsub.f32 %v1463, %v1559
        %v1573 = vsub.f32 %v1468, %v1559
        %v1574 = vsub.f32 %v1471, %v1559
        %v1575 = vsub.f32 %v1476, %v1559
        %v1576 = vsub.f32 %v1479, %v1559
        %v1578 = vlaneseq
        %v1579 = vshrl.u32 %v1578, 7
        %v1580 = vsub.s32 0, %v1579
        %v1581 = vrot.slane %v1553, %v1580
        %v1583 = vmul.f32 %v1561, %v1581
        %v1584 = vmul.f32 %v1562, %v1581
        %v1585 = vmul.f32 %v1563, %v1581
        %v1586 = vmul.f32 %v1564, %v1581
        %v1587 = vmul.f32 %v1565, %v1581
        %v1588 = vmul.f32 %v1566, %v1581
        %v1589 = vmul.f32 %v1567, %v1581
        %v1590 = vmul.f32 %v1568, %v1581
        %v1591 = vmul.f32 %v1569, %v1581
        %v1592 = vmul.f32 %v1570, %v1581
        %v1593 = vmul.f32 %v1571, %v1581
        %v1594 = vmul.f32 %v1572, %v1581
        %v1595 = vmul.f32 %v1573, %v1581
        %v1596 = vmul.f32 %v1574, %v1581
        %v1597 = vmul.f32 %v1575, %v1581
        %v1598 = vmul.f32 %v1576, %v1581
        %v1600 = vlaneseq
        %v1601 = vshrl.u32 %v1600, 7
        %v1602 = vsub.s32 0, %v1601
        %v1603 = vrot.slane %v1483, %v1602
        %v1605 = vadd.f32 %v1583, %v1603
        %v1606 = vadd.f32 %v1584, %v1603
        %v1607 = vadd.f32 %v1585, %v1603
        %v1608 = vadd.f32 %v1586, %v1603
        %v1609 = vadd.f32 %v1587, %v1603
        %v1610 = vadd.f32 %v1588, %v1603
        %v1611 = vadd.f32 %v1589, %v1603
        %v1612 = vadd.f32 %v1590, %v1603
        %v1613 = vadd.f32 %v1591, %v1603
        %v1614 = vadd.f32 %v1592, %v1603
        %v1615 = vadd.f32 %v1593, %v1603
        %v1616 = vadd.f32 %v1594, %v1603
        %v1617 = vadd.f32 %v1595, %v1603
        %v1618 = vadd.f32 %v1596, %v1603
        %v1619 = vadd.f32 %v1597, %v1603
        %v1620 = vadd.f32 %v1598, %v1603
        %vm1621 = vcmp.gt.f32.partialorder %v1605, 0.0
        %vm1622 = vcmp.gt.f32.partialorder %v1606, 0.0
        %vm1623 = vcmp.gt.f32.partialorder %v1607, 0.0
        %vm1624 = vcmp.gt.f32.partialorder %v1608, 0.0
        %vm1625 = vcmp.gt.f32.partialorder %v1609, 0.0
        %vm1626 = vcmp.gt.f32.partialorder %v1610, 0.0
        %vm1627 = vcmp.gt.f32.partialorder %v1611, 0.0
        %vm1628 = vcmp.gt.f32.partialorder %v1612, 0.0
        %vm1629 = vcmp.gt.f32.partialorder %v1613, 0.0
        %vm1630 = vcmp.gt.f32.partialorder %v1614, 0.0
        %vm1631 = vcmp.gt.f32.partialorder %v1615, 0.0
        %vm1632 = vcmp.gt.f32.partialorder %v1616, 0.0
        %vm1633 = vcmp.gt.f32.partialorder %v1617, 0.0
        %vm1634 = vcmp.gt.f32.partialorder %v1618, 0.0
        %vm1635 = vcmp.gt.f32.partialorder %v1619, 0.0
        %vm1636 = vcmp.gt.f32.partialorder %v1620, 0.0
        %v1637 = vmul.f32 %v1605, 0.01
        %v1638 = vmul.f32 %v1606, 0.01
        %v1639 = vmul.f32 %v1607, 0.01
        %v1640 = vmul.f32 %v1608, 0.01
        %v1641 = vmul.f32 %v1609, 0.01
        %v1642 = vmul.f32 %v1610, 0.01
        %v1643 = vmul.f32 %v1611, 0.01
        %v1644 = vmul.f32 %v1612, 0.01
        %v1645 = vmul.f32 %v1613, 0.01
        %v1646 = vmul.f32 %v1614, 0.01
        %v1647 = vmul.f32 %v1615, 0.01
        %v1648 = vmul.f32 %v1616, 0.01
        %v1649 = vmul.f32 %v1617, 0.01
        %v1650 = vmul.f32 %v1618, 0.01
        %v1651 = vmul.f32 %v1619, 0.01
        %v1652 = vmul.f32 %v1620, 0.01
        %v1653 = vsel %vm1621, %v1605, %v1637
        %v1654 = vsel %vm1622, %v1606, %v1638
        %v1655 = vsel %vm1623, %v1607, %v1639
        %v1656 = vsel %vm1624, %v1608, %v1640
        %v1657 = vsel %vm1625, %v1609, %v1641
        %v1658 = vsel %vm1626, %v1610, %v1642
        %v1659 = vsel %vm1627, %v1611, %v1643
        %v1660 = vsel %vm1628, %v1612, %v1644
        %v1661 = vsel %vm1629, %v1613, %v1645
        %v1662 = vsel %vm1630, %v1614, %v1646
        %v1663 = vsel %vm1631, %v1615, %v1647
        %v1664 = vsel %vm1632, %v1616, %v1648
        %v1665 = vsel %vm1633, %v1617, %v1649
        %v1666 = vsel %vm1634, %v1618, %v1650
        %v1667 = vsel %vm1635, %v1619, %v1651
        %v1668 = vsel %vm1636, %v1620, %v1652
        %v1669 = vpack.c.bf16 %v1654, %v1653
        %v1670 = vpack.c.bf16 %v1656, %v1655
        %v1671 = vpack.c.bf16 %v1658, %v1657
        %v1672 = vpack.c.bf16 %v1660, %v1659
        %v1673 = vpack.c.bf16 %v1662, %v1661
        %v1674 = vpack.c.bf16 %v1664, %v1663
        %v1675 = vpack.c.bf16 %v1666, %v1665
        %v1676 = vpack.c.bf16 %v1668, %v1667
        %1677 = vmatprep.subr.bf16.mxu0 0
        %1678 = vmatpush1.bf16.msra.mxu0 %v1669
        %1679 = vmatprep.subr.bf16.mxu0 0
        %1680 = vmatpush1.bf16.msra.mxu0 %v1670
        %1681 = vmatprep.subr.bf16.mxu0 0
        %1682 = vmatpush1.bf16.msra.mxu0 %v1671
        %1683 = vmatprep.subr.bf16.mxu0 0
        %1684 = vmatpush1.bf16.msra.mxu0 %v1672
        %1685 = vmatprep.subr.bf16.mxu0 0
        %1686 = vmatpush1.bf16.msra.mxu0 %v1673
        %1687 = vmatprep.subr.bf16.mxu0 0
        %1688 = vmatpush1.bf16.msra.mxu0 %v1674
        %1689 = vmatprep.subr.bf16.mxu0 0
        %1690 = vmatpush1.bf16.msra.mxu0 %v1675
        %1691 = vmatprep.subr.bf16.mxu0 0
        %1692 = vmatpush1.bf16.msra.mxu0 %v1676
        %1693 = vmatprep.subr.bf16.mxu0 0
        %1694 = vmatpush1.bf16.msra.mxu0 0
        %1695 = vmatprep.subr.bf16.mxu0 0
        %1696 = vmatpush1.bf16.msra.mxu0 0
        %1697 = vmatprep.subr.bf16.mxu0 0
        %1698 = vmatpush1.bf16.msra.mxu0 0
        %1699 = vmatprep.subr.bf16.mxu0 0
        %1700 = vmatpush1.bf16.msra.mxu0 0
        %1701 = vmatprep.subr.bf16.mxu0 0
        %1702 = vmatpush1.bf16.msra.mxu0 0
        %1703 = vmatprep.subr.bf16.mxu0 0
        %1704 = vmatpush1.bf16.msra.mxu0 0
        %1705 = vmatprep.subr.bf16.mxu0 0
        %1706 = vmatpush1.bf16.msra.mxu0 0
        %1707 = vmatprep.subr.bf16.mxu0 0
        %1708 = vmatpush1.bf16.msra.mxu0 0
        %1709 = vmatprep.mubr.bf16.mxu0 0
        %1710 = vmatmul.mubr.bf16.gmra.mrb[0].mxu0 %v782
        %v1711 = vpop.f32.mrb[0].mxu0
        %v1712 = vadd.f32 0.0, %v1711
        %v1713 = vpop.f32.mrb[0].mxu0
        %v1714 = vpop.f32.mrb[0].mxu0
        %v1715 = vadd.f32 0.0, %v1714
        %v1716 = vpop.f32.mrb[0].mxu0
        %1717 = vmatprep.mubr.bf16.mxu0 0
        %1718 = vmatmul.mubr.bf16.gmra.mrb[0].mxu0 %v783
        %v1719 = vpop.f32.mrb[0].mxu0
        %v1720 = vadd.f32 0.0, %v1719
        %v1721 = vpop.f32.mrb[0].mxu0
        %v1722 = vpop.f32.mrb[0].mxu0
        %v1723 = vadd.f32 0.0, %v1722
        %v1724 = vpop.f32.mrb[0].mxu0
        %1725 = vmatprep.mubr.bf16.mxu0 0
        %1726 = vmatmul.mubr.bf16.gmra.mrb[0].mxu0 %v784
        %v1727 = vpop.f32.mrb[0].mxu0
        %v1728 = vadd.f32 0.0, %v1727
        %v1729 = vpop.f32.mrb[0].mxu0
        %v1730 = vpop.f32.mrb[0].mxu0
        %v1731 = vadd.f32 0.0, %v1730
        %v1732 = vpop.f32.mrb[0].mxu0
        %1733 = vmatprep.mubr.bf16.mxu0 0
        %1734 = vmatmul.mubr.bf16.gmra.mrb[0].mxu0 %v785
        %v1735 = vpop.f32.mrb[0].mxu0
        %v1736 = vadd.f32 0.0, %v1735
        %v1737 = vpop.f32.mrb[0].mxu0
        %v1738 = vpop.f32.mrb[0].mxu0
        %v1739 = vadd.f32 0.0, %v1738
        %v1740 = vpop.f32.mrb[0].mxu0
        %1741 = vmatprep.mubr.bf16.mxu0 0
        %1742 = vmatmul.mubr.bf16.gmra.mrb[0].mxu0 %v786
        %v1743 = vpop.f32.mrb[0].mxu0
        %v1744 = vadd.f32 0.0, %v1743
        %v1745 = vpop.f32.mrb[0].mxu0
        %v1746 = vpop.f32.mrb[0].mxu0
        %v1747 = vadd.f32 0.0, %v1746
        %v1748 = vpop.f32.mrb[0].mxu0
        %1749 = vmatprep.mubr.bf16.mxu0 0
        %1750 = vmatmul.mubr.bf16.gmra.mrb[0].mxu0 %v787
        %v1751 = vpop.f32.mrb[0].mxu0
        %v1752 = vadd.f32 0.0, %v1751
        %v1753 = vpop.f32.mrb[0].mxu0
        %v1754 = vpop.f32.mrb[0].mxu0
        %v1755 = vadd.f32 0.0, %v1754
        %v1756 = vpop.f32.mrb[0].mxu0
        %1757 = vmatprep.mubr.bf16.mxu0 0
        %1758 = vmatmul.mubr.bf16.gmra.mrb[0].mxu0 %v788
        %v1759 = vpop.f32.mrb[0].mxu0
        %v1760 = vadd.f32 0.0, %v1759
        %v1761 = vpop.f32.mrb[0].mxu0
        %v1762 = vpop.f32.mrb[0].mxu0
        %v1763 = vadd.f32 0.0, %v1762
        %v1764 = vpop.f32.mrb[0].mxu0
        %1765 = vmatprep.mubr.bf16.mxu0 0
        %1766 = vmatmul.mubr.bf16.gmra.mrb[0].mxu0 %v789
        %v1767 = vpop.f32.mrb[0].mxu0
        %v1768 = vadd.f32 0.0, %v1767
        %v1769 = vpop.f32.mrb[0].mxu0
        %v1770 = vpop.f32.mrb[0].mxu0
        %v1771 = vadd.f32 0.0, %v1770
        %v1772 = vpop.f32.mrb[0].mxu0
        %1773 = vdwg.mxu0
        %v1774 = vpack.c.bf16 %v1715, %v1712
        %v1775 = vpack.c.bf16 %v1723, %v1720
        %v1776 = vpack.c.bf16 %v1731, %v1728
        %v1777 = vpack.c.bf16 %v1739, %v1736
        %v1778 = vpack.c.bf16 %v1747, %v1744
        %v1779 = vpack.c.bf16 %v1755, %v1752
        %v1780 = vpack.c.bf16 %v1763, %v1760
        %v1781 = vpack.c.bf16 %v1771, %v1768
        %s1782 = scalar_lea.vmem [#allocation7], 64
        %v1783 = vld [vmem:[%s1782] sm:$0xf]
        %v1784 = vld [vmem:[%s1782 + $0x4] sm:$0xf]
        %v1785 = vld [vmem:[%s1782 + $0x8] sm:$0xf]
        %v1786 = vld [vmem:[%s1782 + $0xc] sm:$0xf]
        %v1787 = vld [vmem:[%s1782 + $0x10] sm:$0xf]
        %v1788 = vld [vmem:[%s1782 + $0x14] sm:$0xf]
        %v1789 = vld [vmem:[%s1782 + $0x18] sm:$0xf]
        %v1790 = vld [vmem:[%s1782 + $0x1c] sm:$0xf]
        %v1791 = vld [vmem:[%s1782 + $0x20] sm:$0xf]
        %v1792 = vld [vmem:[%s1782 + $0x24] sm:$0xf]
        %v1793 = vld [vmem:[%s1782 + $0x28] sm:$0xf]
        %v1794 = vld [vmem:[%s1782 + $0x2c] sm:$0xf]
        %v1795 = vld [vmem:[%s1782 + $0x30] sm:$0xf]
        %v1796 = vld [vmem:[%s1782 + $0x34] sm:$0xf]
        %v1797 = vld [vmem:[%s1782 + $0x38] sm:$0xf]
        %v1798 = vld [vmem:[%s1782 + $0x3c] sm:$0xf]
        %s1799 = scalar_lea.vmem %s4, 1
        %v1800 = vld [vmem:[%s1799] sm:$0x1]
        %v1802 = vlaneseq
        %v1803 = vshrl.u32 %v1802, 7
        %v1804 = vsub.s32 0, %v1803
        %v1805 = vrot.slane %v1800, %v1804
        %v1823 = vunpack.c.l.b16 %v1783
        %v1824 = vunpack.c.l.b16 %v1784
        %v1825 = vunpack.c.l.b16 %v1785
        %v1826 = vunpack.c.l.b16 %v1786
        %v1827 = vunpack.c.l.b16 %v1787
        %v1828 = vunpack.c.l.b16 %v1788
        %v1829 = vunpack.c.l.b16 %v1789
        %v1830 = vunpack.c.l.b16 %v1790
        %v1831 = vunpack.c.l.b16 %v1791
        %v1832 = vunpack.c.l.b16 %v1792
        %v1833 = vunpack.c.l.b16 %v1793
        %v1834 = vunpack.c.l.b16 %v1794
        %v1835 = vunpack.c.l.b16 %v1795
        %v1836 = vunpack.c.l.b16 %v1796
        %v1837 = vunpack.c.l.b16 %v1797
        %v1838 = vunpack.c.l.b16 %v1798
        %v1839 = vpack.c.b16 %v1824, %v1823
        %v1840 = vpack.c.b16 %v1826, %v1825
        %v1841 = vpack.c.b16 %v1828, %v1827
        %v1842 = vpack.c.b16 %v1830, %v1829
        %v1843 = vpack.c.b16 %v1832, %v1831
        %v1844 = vpack.c.b16 %v1834, %v1833
        %v1845 = vpack.c.b16 %v1836, %v1835
        %v1846 = vpack.c.b16 %v1838, %v1837
        %1855 = vmatprep.subr.bf16.mxu0 0
        %1856 = vmatpush1.bf16.msra.mxu0 %v1839
        %1857 = vmatprep.subr.bf16.mxu0 0
        %1858 = vmatpush1.bf16.msra.mxu0 %v1840
        %1859 = vmatprep.subr.bf16.mxu0 0
        %1860 = vmatpush1.bf16.msra.mxu0 %v1841
        %1861 = vmatprep.subr.bf16.mxu0 0
        %1862 = vmatpush1.bf16.msra.mxu0 %v1842
        %1863 = vmatprep.subr.bf16.mxu0 0
        %1864 = vmatpush1.bf16.msra.mxu0 %v1843
        %1865 = vmatprep.subr.bf16.mxu0 0
        %1866 = vmatpush1.bf16.msra.mxu0 %v1844
        %1867 = vmatprep.subr.bf16.mxu0 0
        %1868 = vmatpush1.bf16.msra.mxu0 %v1845
        %1869 = vmatprep.subr.bf16.mxu0 0
        %1870 = vmatpush1.bf16.msra.mxu0 %v1846
        %1871 = vmatprep.subr.bf16.mxu0 0
        %1872 = vmatpush1.bf16.msra.mxu0 0
        %1873 = vmatprep.subr.bf16.mxu0 0
        %1874 = vmatpush1.bf16.msra.mxu0 0
        %1875 = vmatprep.subr.bf16.mxu0 0
        %1876 = vmatpush1.bf16.msra.mxu0 0
        %1877 = vmatprep.subr.bf16.mxu0 0
        %1878 = vmatpush1.bf16.msra.mxu0 0
        %1879 = vmatprep.subr.bf16.mxu0 0
        %1880 = vmatpush1.bf16.msra.mxu0 0
        %1881 = vmatprep.subr.bf16.mxu0 0
        %1882 = vmatpush1.bf16.msra.mxu0 0
        %1883 = vmatprep.subr.bf16.mxu0 0
        %1884 = vmatpush1.bf16.msra.mxu0 0
        %1885 = vmatprep.subr.bf16.mxu0 0
        %1886 = vmatpush1.bf16.msra.mxu0 0
        %1887 = vmatprep.mubr.bf16.mxu0 0
        %1888 = vmatmul.mubr.bf16.gmra.mrb[0].mxu0 %v1774
        %v1889 = vpop.f32.mrb[0].mxu0
        %v1890 = vadd.f32 %v1805, %v1889
        %v1891 = vpop.f32.mrb[0].mxu0
        %v1892 = vpop.f32.mrb[0].mxu0
        %v1893 = vadd.f32 %v1805, %v1892
        %v1894 = vpop.f32.mrb[0].mxu0
        %1895 = vmatprep.mubr.bf16.mxu0 0
        %1896 = vmatmul.mubr.bf16.gmra.mrb[0].mxu0 %v1775
        %v1897 = vpop.f32.mrb[0].mxu0
        %v1898 = vadd.f32 %v1805, %v1897
        %v1899 = vpop.f32.mrb[0].mxu0
        %v1900 = vpop.f32.mrb[0].mxu0
        %v1901 = vadd.f32 %v1805, %v1900
        %v1902 = vpop.f32.mrb[0].mxu0
        %1903 = vmatprep.mubr.bf16.mxu0 0
        %1904 = vmatmul.mubr.bf16.gmra.mrb[0].mxu0 %v1776
        %v1905 = vpop.f32.mrb[0].mxu0
        %v1906 = vadd.f32 %v1805, %v1905
        %v1907 = vpop.f32.mrb[0].mxu0
        %v1908 = vpop.f32.mrb[0].mxu0
        %v1909 = vadd.f32 %v1805, %v1908
        %v1910 = vpop.f32.mrb[0].mxu0
        %1911 = vmatprep.mubr.bf16.mxu0 0
        %1912 = vmatmul.mubr.bf16.gmra.mrb[0].mxu0 %v1777
        %v1913 = vpop.f32.mrb[0].mxu0
        %v1914 = vadd.f32 %v1805, %v1913
        %v1915 = vpop.f32.mrb[0].mxu0
        %v1916 = vpop.f32.mrb[0].mxu0
        %v1917 = vadd.f32 %v1805, %v1916
        %v1918 = vpop.f32.mrb[0].mxu0
        %1919 = vmatprep.mubr.bf16.mxu0 0
        %1920 = vmatmul.mubr.bf16.gmra.mrb[0].mxu0 %v1778
        %v1921 = vpop.f32.mrb[0].mxu0
        %v1922 = vadd.f32 %v1805, %v1921
        %v1923 = vpop.f32.mrb[0].mxu0
        %v1924 = vpop.f32.mrb[0].mxu0
        %v1925 = vadd.f32 %v1805, %v1924
        %v1926 = vpop.f32.mrb[0].mxu0
        %1927 = vmatprep.mubr.bf16.mxu0 0
        %1928 = vmatmul.mubr.bf16.gmra.mrb[0].mxu0 %v1779
        %v1929 = vpop.f32.mrb[0].mxu0
        %v1930 = vadd.f32 %v1805, %v1929
        %v1931 = vpop.f32.mrb[0].mxu0
        %v1932 = vpop.f32.mrb[0].mxu0
        %v1933 = vadd.f32 %v1805, %v1932
        %v1934 = vpop.f32.mrb[0].mxu0
        %1935 = vmatprep.mubr.bf16.mxu0 0
        %1936 = vmatmul.mubr.bf16.gmra.mrb[0].mxu0 %v1780
        %v1937 = vpop.f32.mrb[0].mxu0
        %v1938 = vadd.f32 %v1805, %v1937
        %v1939 = vpop.f32.mrb[0].mxu0
        %v1940 = vpop.f32.mrb[0].mxu0
        %v1941 = vadd.f32 %v1805, %v1940
        %v1942 = vpop.f32.mrb[0].mxu0
        %1943 = vmatprep.mubr.bf16.mxu0 0
        %1944 = vmatmul.mubr.bf16.gmra.mrb[0].mxu0 %v1781
        %v1945 = vpop.f32.mrb[0].mxu0
        %v1946 = vadd.f32 %v1805, %v1945
        %v1947 = vpop.f32.mrb[0].mxu0
        %v1948 = vpop.f32.mrb[0].mxu0
        %v1949 = vadd.f32 %v1805, %v1948
        %v1950 = vpop.f32.mrb[0].mxu0
        %1951 = vdwg.mxu0
        %s1952 = scalar_lea.vmem %s7, 1
        %v1953 = vld [vmem:[%s1952] sm:$0x1]
        %s1954 = scalar_lea.vmem %s8, 1
        %v1955 = vld [vmem:[%s1954] sm:$0x1]
        %s1956 = scalar_lea.vmem %s9, 1
        %v1957 = vld [vmem:[%s1956] sm:$0x1]
        %v1958 = vadd.f32 %v1890, %v1893
        %v1959 = vadd.f32 %v1958, %v1898
        %v1960 = vadd.f32 %v1959, %v1901
        %v1961 = vadd.f32 %v1960, %v1906
        %v1962 = vadd.f32 %v1961, %v1909
        %v1963 = vadd.f32 %v1962, %v1914
        %v1964 = vadd.f32 %v1963, %v1917
        %v1965 = vadd.f32 %v1964, %v1922
        %v1966 = vadd.f32 %v1965, %v1925
        %v1967 = vadd.f32 %v1966, %v1930
        %v1968 = vadd.f32 %v1967, %v1933
        %v1969 = vadd.f32 %v1968, %v1938
        %v1970 = vadd.f32 %v1969, %v1941
        %v1971 = vadd.f32 %v1970, %v1946
        %v1972 = vadd.f32 %v1971, %v1949
        %v1973 = vrot.slane %v1972, 4
        %v1974 = vadd.f32 %v1972, %v1973
        %v1975 = vrot.slane %v1974, 2
        %v1976 = vadd.f32 %v1974, %v1975
        %v1977 = vrot.slane %v1976, 1
        %v1978 = vadd.f32 %v1976, %v1977
        %v1979 = vmul.f32 %v1890, %v1890
        %v1980 = vmul.f32 %v1893, %v1893
        %v1981 = vmul.f32 %v1898, %v1898
        %v1982 = vmul.f32 %v1901, %v1901
        %v1983 = vmul.f32 %v1906, %v1906
        %v1984 = vmul.f32 %v1909, %v1909
        %v1985 = vmul.f32 %v1914, %v1914
        %v1986 = vmul.f32 %v1917, %v1917
        %v1987 = vmul.f32 %v1922, %v1922
        %v1988 = vmul.f32 %v1925, %v1925
        %v1989 = vmul.f32 %v1930, %v1930
        %v1990 = vmul.f32 %v1933, %v1933
        %v1991 = vmul.f32 %v1938, %v1938
        %v1992 = vmul.f32 %v1941, %v1941
        %v1993 = vmul.f32 %v1946, %v1946
        %v1994 = vmul.f32 %v1949, %v1949
        %v1995 = vadd.f32 %v1979, %v1980
        %v1996 = vadd.f32 %v1995, %v1981
        %v1997 = vadd.f32 %v1996, %v1982
        %v1998 = vadd.f32 %v1997, %v1983
        %v1999 = vadd.f32 %v1998, %v1984
        %v2000 = vadd.f32 %v1999, %v1985
        %v2001 = vadd.f32 %v2000, %v1986
        %v2002 = vadd.f32 %v2001, %v1987
        %v2003 = vadd.f32 %v2002, %v1988
        %v2004 = vadd.f32 %v2003, %v1989
        %v2005 = vadd.f32 %v2004, %v1990
        %v2006 = vadd.f32 %v2005, %v1991
        %v2007 = vadd.f32 %v2006, %v1992
        %v2008 = vadd.f32 %v2007, %v1993
        %v2009 = vadd.f32 %v2008, %v1994
        %v2010 = vrot.slane %v2009, 4
        %v2011 = vadd.f32 %v2009, %v2010
        %v2012 = vrot.slane %v2011, 2
        %v2013 = vadd.f32 %v2011, %v2012
        %v2014 = vrot.slane %v2013, 1
        %v2015 = vadd.f32 %v2013, %v2014
        %v2016 = vmul.f32 %v1978, 0.0078125
        %v2017 = vmul.f32 %v2015, 0.0078125
        %v2018 = vmul.f32 %v1957, 2.0
        %v2019 = vmul.f32 %v1957, %v1957
        %v2020 = vsub.f32 %v2018, %v2019
        %v2021 = vmul.f32 %v2016, %v2016
        %v2022 = vmul.f32 %v2020, %v2021
        %v2023 = vsub.f32 %v2017, %v2022
        %v2024 = vadd.f32 %v2023, 1e-05
        %v2025 = vrsqrt.pop %v2024
        %v2026 = vmul.f32 %v1953, %v2025
        %v2027 = vmul.f32 %v1957, %v2016
        %v2029 = vlaneseq
        %v2030 = vshrl.u32 %v2029, 7
        %v2031 = vsub.s32 0, %v2030
        %v2032 = vrot.slane %v2027, %v2031
        %v2034 = vsub.f32 %v1890, %v2032
        %v2035 = vsub.f32 %v1893, %v2032
        %v2036 = vsub.f32 %v1898, %v2032
        %v2037 = vsub.f32 %v1901, %v2032
        %v2038 = vsub.f32 %v1906, %v2032
        %v2039 = vsub.f32 %v1909, %v2032
        %v2040 = vsub.f32 %v1914, %v2032
        %v2041 = vsub.f32 %v1917, %v2032
        %v2042 = vsub.f32 %v1922, %v2032
        %v2043 = vsub.f32 %v1925, %v2032
        %v2044 = vsub.f32 %v1930, %v2032
        %v2045 = vsub.f32 %v1933, %v2032
        %v2046 = vsub.f32 %v1938, %v2032
        %v2047 = vsub.f32 %v1941, %v2032
        %v2048 = vsub.f32 %v1946, %v2032
        %v2049 = vsub.f32 %v1949, %v2032
        %v2051 = vlaneseq
        %v2052 = vshrl.u32 %v2051, 7
        %v2053 = vsub.s32 0, %v2052
        %v2054 = vrot.slane %v2026, %v2053
        %v2056 = vmul.f32 %v2034, %v2054
        %v2057 = vmul.f32 %v2035, %v2054
        %v2058 = vmul.f32 %v2036, %v2054
        %v2059 = vmul.f32 %v2037, %v2054
        %v2060 = vmul.f32 %v2038, %v2054
        %v2061 = vmul.f32 %v2039, %v2054
        %v2062 = vmul.f32 %v2040, %v2054
        %v2063 = vmul.f32 %v2041, %v2054
        %v2064 = vmul.f32 %v2042, %v2054
        %v2065 = vmul.f32 %v2043, %v2054
        %v2066 = vmul.f32 %v2044, %v2054
        %v2067 = vmul.f32 %v2045, %v2054
        %v2068 = vmul.f32 %v2046, %v2054
        %v2069 = vmul.f32 %v2047, %v2054
        %v2070 = vmul.f32 %v2048, %v2054
        %v2071 = vmul.f32 %v2049, %v2054
        %v2073 = vlaneseq
        %v2074 = vshrl.u32 %v2073, 7
        %v2075 = vsub.s32 0, %v2074
        %v2076 = vrot.slane %v1955, %v2075
        %v2078 = vadd.f32 %v2056, %v2076
        %v2079 = vadd.f32 %v2057, %v2076
        %v2080 = vadd.f32 %v2058, %v2076
        %v2081 = vadd.f32 %v2059, %v2076
        %v2082 = vadd.f32 %v2060, %v2076
        %v2083 = vadd.f32 %v2061, %v2076
        %v2084 = vadd.f32 %v2062, %v2076
        %v2085 = vadd.f32 %v2063, %v2076
        %v2086 = vadd.f32 %v2064, %v2076
        %v2087 = vadd.f32 %v2065, %v2076
        %v2088 = vadd.f32 %v2066, %v2076
        %v2089 = vadd.f32 %v2067, %v2076
        %v2090 = vadd.f32 %v2068, %v2076
        %v2091 = vadd.f32 %v2069, %v2076
        %v2092 = vadd.f32 %v2070, %v2076
        %v2093 = vadd.f32 %v2071, %v2076
        %vm2094 = vcmp.gt.f32.partialorder %v2078, 0.0
        %vm2095 = vcmp.gt.f32.partialorder %v2079, 0.0
        %vm2096 = vcmp.gt.f32.partialorder %v2080, 0.0
        %vm2097 = vcmp.gt.f32.partialorder %v2081, 0.0
        %vm2098 = vcmp.gt.f32.partialorder %v2082, 0.0
        %vm2099 = vcmp.gt.f32.partialorder %v2083, 0.0
        %vm2100 = vcmp.gt.f32.partialorder %v2084, 0.0
        %vm2101 = vcmp.gt.f32.partialorder %v2085, 0.0
        %vm2102 = vcmp.gt.f32.partialorder %v2086, 0.0
        %vm2103 = vcmp.gt.f32.partialorder %v2087, 0.0
        %vm2104 = vcmp.gt.f32.partialorder %v2088, 0.0
        %vm2105 = vcmp.gt.f32.partialorder %v2089, 0.0
        %vm2106 = vcmp.gt.f32.partialorder %v2090, 0.0
        %vm2107 = vcmp.gt.f32.partialorder %v2091, 0.0
        %vm2108 = vcmp.gt.f32.partialorder %v2092, 0.0
        %vm2109 = vcmp.gt.f32.partialorder %v2093, 0.0
        %v2110 = vmul.f32 %v2078, 0.01
        %v2111 = vmul.f32 %v2079, 0.01
        %v2112 = vmul.f32 %v2080, 0.01
        %v2113 = vmul.f32 %v2081, 0.01
        %v2114 = vmul.f32 %v2082, 0.01
        %v2115 = vmul.f32 %v2083, 0.01
        %v2116 = vmul.f32 %v2084, 0.01
        %v2117 = vmul.f32 %v2085, 0.01
        %v2118 = vmul.f32 %v2086, 0.01
        %v2119 = vmul.f32 %v2087, 0.01
        %v2120 = vmul.f32 %v2088, 0.01
        %v2121 = vmul.f32 %v2089, 0.01
        %v2122 = vmul.f32 %v2090, 0.01
        %v2123 = vmul.f32 %v2091, 0.01
        %v2124 = vmul.f32 %v2092, 0.01
        %v2125 = vmul.f32 %v2093, 0.01
        %v2126 = vsel %vm2094, %v2078, %v2110
        %v2127 = vsel %vm2095, %v2079, %v2111
        %v2128 = vsel %vm2096, %v2080, %v2112
        %v2129 = vsel %vm2097, %v2081, %v2113
        %v2130 = vsel %vm2098, %v2082, %v2114
        %v2131 = vsel %vm2099, %v2083, %v2115
        %v2132 = vsel %vm2100, %v2084, %v2116
        %v2133 = vsel %vm2101, %v2085, %v2117
        %v2134 = vsel %vm2102, %v2086, %v2118
        %v2135 = vsel %vm2103, %v2087, %v2119
        %v2136 = vsel %vm2104, %v2088, %v2120
        %v2137 = vsel %vm2105, %v2089, %v2121
        %v2138 = vsel %vm2106, %v2090, %v2122
        %v2139 = vsel %vm2107, %v2091, %v2123
        %v2140 = vsel %vm2108, %v2092, %v2124
        %v2141 = vsel %vm2109, %v2093, %v2125
        %v2142 = vpack.c.bf16 %v2127, %v2126
        %v2143 = vpack.c.bf16 %v2129, %v2128
        %v2144 = vpack.c.bf16 %v2131, %v2130
        %v2145 = vpack.c.bf16 %v2133, %v2132
        %v2146 = vpack.c.bf16 %v2135, %v2134
        %v2147 = vpack.c.bf16 %v2137, %v2136
        %v2148 = vpack.c.bf16 %v2139, %v2138
        %v2149 = vpack.c.bf16 %v2141, %v2140
        %s2150 = scalar_lea.vmem [#allocation9], 64
        %v2151 = vld [vmem:[%s2150] sm:$0xf]
        %v2152 = vld [vmem:[%s2150 + $0x4] sm:$0xf]
        %v2153 = vld [vmem:[%s2150 + $0x8] sm:$0xf]
        %v2154 = vld [vmem:[%s2150 + $0xc] sm:$0xf]
        %v2155 = vld [vmem:[%s2150 + $0x10] sm:$0xf]
        %v2156 = vld [vmem:[%s2150 + $0x14] sm:$0xf]
        %v2157 = vld [vmem:[%s2150 + $0x18] sm:$0xf]
        %v2158 = vld [vmem:[%s2150 + $0x1c] sm:$0xf]
        %v2159 = vld [vmem:[%s2150 + $0x20] sm:$0xf]
        %v2160 = vld [vmem:[%s2150 + $0x24] sm:$0xf]
        %v2161 = vld [vmem:[%s2150 + $0x28] sm:$0xf]
        %v2162 = vld [vmem:[%s2150 + $0x2c] sm:$0xf]
        %v2163 = vld [vmem:[%s2150 + $0x30] sm:$0xf]
        %v2164 = vld [vmem:[%s2150 + $0x34] sm:$0xf]
        %v2165 = vld [vmem:[%s2150 + $0x38] sm:$0xf]
        %v2166 = vld [vmem:[%s2150 + $0x3c] sm:$0xf]
        %s2167 = scalar_lea.vmem %s6, 1
        %v2168 = vld [vmem:[%s2167] sm:$0x1]
        %v2170 = vlaneseq
        %v2171 = vshrl.u32 %v2170, 7
        %v2172 = vsub.s32 0, %v2171
        %v2173 = vrot.slane %v2168, %v2172
        %v2191 = vunpack.c.l.b16 %v2151
        %v2192 = vunpack.c.l.b16 %v2152
        %v2193 = vunpack.c.l.b16 %v2153
        %v2194 = vunpack.c.l.b16 %v2154
        %v2195 = vunpack.c.l.b16 %v2155
        %v2196 = vunpack.c.l.b16 %v2156
        %v2197 = vunpack.c.l.b16 %v2157
        %v2198 = vunpack.c.l.b16 %v2158
        %v2199 = vunpack.c.l.b16 %v2159
        %v2200 = vunpack.c.l.b16 %v2160
        %v2201 = vunpack.c.l.b16 %v2161
        %v2202 = vunpack.c.l.b16 %v2162
        %v2203 = vunpack.c.l.b16 %v2163
        %v2204 = vunpack.c.l.b16 %v2164
        %v2205 = vunpack.c.l.b16 %v2165
        %v2206 = vunpack.c.l.b16 %v2166
        %v2207 = vpack.c.b16 %v2192, %v2191
        %v2208 = vpack.c.b16 %v2194, %v2193
        %v2209 = vpack.c.b16 %v2196, %v2195
        %v2210 = vpack.c.b16 %v2198, %v2197
        %v2211 = vpack.c.b16 %v2200, %v2199
        %v2212 = vpack.c.b16 %v2202, %v2201
        %v2213 = vpack.c.b16 %v2204, %v2203
        %v2214 = vpack.c.b16 %v2206, %v2205
        %2223 = vmatprep.subr.bf16.mxu0 0
        %2224 = vmatpush1.bf16.msra.mxu0 %v2207
        %2225 = vmatprep.subr.bf16.mxu0 0
        %2226 = vmatpush1.bf16.msra.mxu0 %v2208
        %2227 = vmatprep.subr.bf16.mxu0 0
        %2228 = vmatpush1.bf16.msra.mxu0 %v2209
        %2229 = vmatprep.subr.bf16.mxu0 0
        %2230 = vmatpush1.bf16.msra.mxu0 %v2210
        %2231 = vmatprep.subr.bf16.mxu0 0
        %2232 = vmatpush1.bf16.msra.mxu0 %v2211
        %2233 = vmatprep.subr.bf16.mxu0 0
        %2234 = vmatpush1.bf16.msra.mxu0 %v2212
        %2235 = vmatprep.subr.bf16.mxu0 0
        %2236 = vmatpush1.bf16.msra.mxu0 %v2213
        %2237 = vmatprep.subr.bf16.mxu0 0
        %2238 = vmatpush1.bf16.msra.mxu0 %v2214
        %2239 = vmatprep.subr.bf16.mxu0 0
        %2240 = vmatpush1.bf16.msra.mxu0 0
        %2241 = vmatprep.subr.bf16.mxu0 0
        %2242 = vmatpush1.bf16.msra.mxu0 0
        %2243 = vmatprep.subr.bf16.mxu0 0
        %2244 = vmatpush1.bf16.msra.mxu0 0
        %2245 = vmatprep.subr.bf16.mxu0 0
        %2246 = vmatpush1.bf16.msra.mxu0 0
        %2247 = vmatprep.subr.bf16.mxu0 0
        %2248 = vmatpush1.bf16.msra.mxu0 0
        %2249 = vmatprep.subr.bf16.mxu0 0
        %2250 = vmatpush1.bf16.msra.mxu0 0
        %2251 = vmatprep.subr.bf16.mxu0 0
        %2252 = vmatpush1.bf16.msra.mxu0 0
        %2253 = vmatprep.subr.bf16.mxu0 0
        %2254 = vmatpush1.bf16.msra.mxu0 0
        %2255 = vmatprep.mubr.bf16.mxu0 0
        %2256 = vmatmul.mubr.bf16.gmra.mrb[0].mxu0 %v2142
        %v2257 = vpop.f32.mrb[0].mxu0
        %v2258 = vadd.f32 %v2173, %v2257
        %v2259 = vpop.f32.mrb[0].mxu0
        %v2260 = vpop.f32.mrb[0].mxu0
        %v2261 = vadd.f32 %v2173, %v2260
        %v2262 = vpop.f32.mrb[0].mxu0
        %2263 = vmatprep.mubr.bf16.mxu0 0
        %2264 = vmatmul.mubr.bf16.gmra.mrb[0].mxu0 %v2143
        %v2265 = vpop.f32.mrb[0].mxu0
        %v2266 = vadd.f32 %v2173, %v2265
        %v2267 = vpop.f32.mrb[0].mxu0
        %v2268 = vpop.f32.mrb[0].mxu0
        %v2269 = vadd.f32 %v2173, %v2268
        %v2270 = vpop.f32.mrb[0].mxu0
        %2271 = vmatprep.mubr.bf16.mxu0 0
        %2272 = vmatmul.mubr.bf16.gmra.mrb[0].mxu0 %v2144
        %v2273 = vpop.f32.mrb[0].mxu0
        %v2274 = vadd.f32 %v2173, %v2273
        %v2275 = vpop.f32.mrb[0].mxu0
        %v2276 = vpop.f32.mrb[0].mxu0
        %v2277 = vadd.f32 %v2173, %v2276
        %v2278 = vpop.f32.mrb[0].mxu0
        %2279 = vmatprep.mubr.bf16.mxu0 0
        %2280 = vmatmul.mubr.bf16.gmra.mrb[0].mxu0 %v2145
        %v2281 = vpop.f32.mrb[0].mxu0
        %v2282 = vadd.f32 %v2173, %v2281
        %v2283 = vpop.f32.mrb[0].mxu0
        %v2284 = vpop.f32.mrb[0].mxu0
        %v2285 = vadd.f32 %v2173, %v2284
        %v2286 = vpop.f32.mrb[0].mxu0
        %2287 = vmatprep.mubr.bf16.mxu0 0
        %2288 = vmatmul.mubr.bf16.gmra.mrb[0].mxu0 %v2146
        %v2289 = vpop.f32.mrb[0].mxu0
        %v2290 = vadd.f32 %v2173, %v2289
        %v2291 = vpop.f32.mrb[0].mxu0
        %v2292 = vpop.f32.mrb[0].mxu0
        %v2293 = vadd.f32 %v2173, %v2292
        %v2294 = vpop.f32.mrb[0].mxu0
        %2295 = vmatprep.mubr.bf16.mxu0 0
        %2296 = vmatmul.mubr.bf16.gmra.mrb[0].mxu0 %v2147
        %v2297 = vpop.f32.mrb[0].mxu0
        %v2298 = vadd.f32 %v2173, %v2297
        %v2299 = vpop.f32.mrb[0].mxu0
        %v2300 = vpop.f32.mrb[0].mxu0
        %v2301 = vadd.f32 %v2173, %v2300
        %v2302 = vpop.f32.mrb[0].mxu0
        %2303 = vmatprep.mubr.bf16.mxu0 0
        %2304 = vmatmul.mubr.bf16.gmra.mrb[0].mxu0 %v2148
        %v2305 = vpop.f32.mrb[0].mxu0
        %v2306 = vadd.f32 %v2173, %v2305
        %v2307 = vpop.f32.mrb[0].mxu0
        %v2308 = vpop.f32.mrb[0].mxu0
        %v2309 = vadd.f32 %v2173, %v2308
        %v2310 = vpop.f32.mrb[0].mxu0
        %2311 = vmatprep.mubr.bf16.mxu0 0
        %2312 = vmatmul.mubr.bf16.gmra.mrb[0].mxu0 %v2149
        %v2313 = vpop.f32.mrb[0].mxu0
        %v2314 = vadd.f32 %v2173, %v2313
        %v2315 = vpop.f32.mrb[0].mxu0
        %v2316 = vpop.f32.mrb[0].mxu0
        %v2317 = vadd.f32 %v2173, %v2316
        %v2318 = vpop.f32.mrb[0].mxu0
        %2319 = vdwg.mxu0
        %s2320 = scalar_lea.vmem %s10, 1
        %v2321 = vld [vmem:[%s2320] sm:$0x1]
        %s2322 = scalar_lea.vmem %s11, 1
        %v2323 = vld [vmem:[%s2322] sm:$0x1]
        %s2324 = scalar_lea.vmem %s12, 1
        %v2325 = vld [vmem:[%s2324] sm:$0x1]
        %v2326 = vadd.f32 %v2258, %v2261
        %v2327 = vadd.f32 %v2326, %v2266
        %v2328 = vadd.f32 %v2327, %v2269
        %v2329 = vadd.f32 %v2328, %v2274
        %v2330 = vadd.f32 %v2329, %v2277
        %v2331 = vadd.f32 %v2330, %v2282
        %v2332 = vadd.f32 %v2331, %v2285
        %v2333 = vadd.f32 %v2332, %v2290
        %v2334 = vadd.f32 %v2333, %v2293
        %v2335 = vadd.f32 %v2334, %v2298
        %v2336 = vadd.f32 %v2335, %v2301
        %v2337 = vadd.f32 %v2336, %v2306
        %v2338 = vadd.f32 %v2337, %v2309
        %v2339 = vadd.f32 %v2338, %v2314
        %v2340 = vadd.f32 %v2339, %v2317
        %v2341 = vrot.slane %v2340, 4
        %v2342 = vadd.f32 %v2340, %v2341
        %v2343 = vrot.slane %v2342, 2
        %v2344 = vadd.f32 %v2342, %v2343
        %v2345 = vrot.slane %v2344, 1
        %v2346 = vadd.f32 %v2344, %v2345
        %v2347 = vmul.f32 %v2258, %v2258
        %v2348 = vmul.f32 %v2261, %v2261
        %v2349 = vmul.f32 %v2266, %v2266
        %v2350 = vmul.f32 %v2269, %v2269
        %v2351 = vmul.f32 %v2274, %v2274
        %v2352 = vmul.f32 %v2277, %v2277
        %v2353 = vmul.f32 %v2282, %v2282
        %v2354 = vmul.f32 %v2285, %v2285
        %v2355 = vmul.f32 %v2290, %v2290
        %v2356 = vmul.f32 %v2293, %v2293
        %v2357 = vmul.f32 %v2298, %v2298
        %v2358 = vmul.f32 %v2301, %v2301
        %v2359 = vmul.f32 %v2306, %v2306
        %v2360 = vmul.f32 %v2309, %v2309
        %v2361 = vmul.f32 %v2314, %v2314
        %v2362 = vmul.f32 %v2317, %v2317
        %v2363 = vadd.f32 %v2347, %v2348
        %v2364 = vadd.f32 %v2363, %v2349
        %v2365 = vadd.f32 %v2364, %v2350
        %v2366 = vadd.f32 %v2365, %v2351
        %v2367 = vadd.f32 %v2366, %v2352
        %v2368 = vadd.f32 %v2367, %v2353
        %v2369 = vadd.f32 %v2368, %v2354
        %v2370 = vadd.f32 %v2369, %v2355
        %v2371 = vadd.f32 %v2370, %v2356
        %v2372 = vadd.f32 %v2371, %v2357
        %v2373 = vadd.f32 %v2372, %v2358
        %v2374 = vadd.f32 %v2373, %v2359
        %v2375 = vadd.f32 %v2374, %v2360
        %v2376 = vadd.f32 %v2375, %v2361
        %v2377 = vadd.f32 %v2376, %v2362
        %v2378 = vrot.slane %v2377, 4
        %v2379 = vadd.f32 %v2377, %v2378
        %v2380 = vrot.slane %v2379, 2
        %v2381 = vadd.f32 %v2379, %v2380
        %v2382 = vrot.slane %v2381, 1
        %v2383 = vadd.f32 %v2381, %v2382
        %v2384 = vmul.f32 %v2346, 0.0078125
        %v2385 = vmul.f32 %v2383, 0.0078125
        %v2386 = vmul.f32 %v2325, 2.0
        %v2387 = vmul.f32 %v2325, %v2325
        %v2388 = vsub.f32 %v2386, %v2387
        %v2389 = vmul.f32 %v2384, %v2384
        %v2390 = vmul.f32 %v2388, %v2389
        %v2391 = vsub.f32 %v2385, %v2390
        %v2392 = vadd.f32 %v2391, 1e-05
        %v2393 = vrsqrt.pop %v2392
        %v2394 = vmul.f32 %v2321, %v2393
        %v2395 = vmul.f32 %v2325, %v2384
        %v2397 = vlaneseq
        %v2398 = vshrl.u32 %v2397, 7
        %v2399 = vsub.s32 0, %v2398
        %v2400 = vrot.slane %v2395, %v2399
        %v2402 = vsub.f32 %v2258, %v2400
        %v2403 = vsub.f32 %v2261, %v2400
        %v2404 = vsub.f32 %v2266, %v2400
        %v2405 = vsub.f32 %v2269, %v2400
        %v2406 = vsub.f32 %v2274, %v2400
        %v2407 = vsub.f32 %v2277, %v2400
        %v2408 = vsub.f32 %v2282, %v2400
        %v2409 = vsub.f32 %v2285, %v2400
        %v2410 = vsub.f32 %v2290, %v2400
        %v2411 = vsub.f32 %v2293, %v2400
        %v2412 = vsub.f32 %v2298, %v2400
        %v2413 = vsub.f32 %v2301, %v2400
        %v2414 = vsub.f32 %v2306, %v2400
        %v2415 = vsub.f32 %v2309, %v2400
        %v2416 = vsub.f32 %v2314, %v2400
        %v2417 = vsub.f32 %v2317, %v2400
        %v2419 = vlaneseq
        %v2420 = vshrl.u32 %v2419, 7
        %v2421 = vsub.s32 0, %v2420
        %v2422 = vrot.slane %v2394, %v2421
        %v2424 = vmul.f32 %v2402, %v2422
        %v2425 = vmul.f32 %v2403, %v2422
        %v2426 = vmul.f32 %v2404, %v2422
        %v2427 = vmul.f32 %v2405, %v2422
        %v2428 = vmul.f32 %v2406, %v2422
        %v2429 = vmul.f32 %v2407, %v2422
        %v2430 = vmul.f32 %v2408, %v2422
        %v2431 = vmul.f32 %v2409, %v2422
        %v2432 = vmul.f32 %v2410, %v2422
        %v2433 = vmul.f32 %v2411, %v2422
        %v2434 = vmul.f32 %v2412, %v2422
        %v2435 = vmul.f32 %v2413, %v2422
        %v2436 = vmul.f32 %v2414, %v2422
        %v2437 = vmul.f32 %v2415, %v2422
        %v2438 = vmul.f32 %v2416, %v2422
        %v2439 = vmul.f32 %v2417, %v2422
        %v2441 = vlaneseq
        %v2442 = vshrl.u32 %v2441, 7
        %v2443 = vsub.s32 0, %v2442
        %v2444 = vrot.slane %v2323, %v2443
        %v2446 = vadd.f32 %v2424, %v2444
        %v2447 = vadd.f32 %v2425, %v2444
        %v2448 = vadd.f32 %v2426, %v2444
        %v2449 = vadd.f32 %v2427, %v2444
        %v2450 = vadd.f32 %v2428, %v2444
        %v2451 = vadd.f32 %v2429, %v2444
        %v2452 = vadd.f32 %v2430, %v2444
        %v2453 = vadd.f32 %v2431, %v2444
        %v2454 = vadd.f32 %v2432, %v2444
        %v2455 = vadd.f32 %v2433, %v2444
        %v2456 = vadd.f32 %v2434, %v2444
        %v2457 = vadd.f32 %v2435, %v2444
        %v2458 = vadd.f32 %v2436, %v2444
        %v2459 = vadd.f32 %v2437, %v2444
        %v2460 = vadd.f32 %v2438, %v2444
        %v2461 = vadd.f32 %v2439, %v2444
        %vm2462 = vcmp.gt.f32.partialorder %v2446, 0.0
        %vm2463 = vcmp.gt.f32.partialorder %v2447, 0.0
        %vm2464 = vcmp.gt.f32.partialorder %v2448, 0.0
        %vm2465 = vcmp.gt.f32.partialorder %v2449, 0.0
        %vm2466 = vcmp.gt.f32.partialorder %v2450, 0.0
        %vm2467 = vcmp.gt.f32.partialorder %v2451, 0.0
        %vm2468 = vcmp.gt.f32.partialorder %v2452, 0.0
        %vm2469 = vcmp.gt.f32.partialorder %v2453, 0.0
        %vm2470 = vcmp.gt.f32.partialorder %v2454, 0.0
        %vm2471 = vcmp.gt.f32.partialorder %v2455, 0.0
        %vm2472 = vcmp.gt.f32.partialorder %v2456, 0.0
        %vm2473 = vcmp.gt.f32.partialorder %v2457, 0.0
        %vm2474 = vcmp.gt.f32.partialorder %v2458, 0.0
        %vm2475 = vcmp.gt.f32.partialorder %v2459, 0.0
        %vm2476 = vcmp.gt.f32.partialorder %v2460, 0.0
        %vm2477 = vcmp.gt.f32.partialorder %v2461, 0.0
        %v2478 = vmul.f32 %v2446, 0.01
        %v2479 = vmul.f32 %v2447, 0.01
        %v2480 = vmul.f32 %v2448, 0.01
        %v2481 = vmul.f32 %v2449, 0.01
        %v2482 = vmul.f32 %v2450, 0.01
        %v2483 = vmul.f32 %v2451, 0.01
        %v2484 = vmul.f32 %v2452, 0.01
        %v2485 = vmul.f32 %v2453, 0.01
        %v2486 = vmul.f32 %v2454, 0.01
        %v2487 = vmul.f32 %v2455, 0.01
        %v2488 = vmul.f32 %v2456, 0.01
        %v2489 = vmul.f32 %v2457, 0.01
        %v2490 = vmul.f32 %v2458, 0.01
        %v2491 = vmul.f32 %v2459, 0.01
        %v2492 = vmul.f32 %v2460, 0.01
        %v2493 = vmul.f32 %v2461, 0.01
        %v2494 = vsel %vm2462, %v2446, %v2478
        %v2495 = vsel %vm2463, %v2447, %v2479
        %v2496 = vsel %vm2464, %v2448, %v2480
        %v2497 = vsel %vm2465, %v2449, %v2481
        %v2498 = vsel %vm2466, %v2450, %v2482
        %v2499 = vsel %vm2467, %v2451, %v2483
        %v2500 = vsel %vm2468, %v2452, %v2484
        %v2501 = vsel %vm2469, %v2453, %v2485
        %v2502 = vsel %vm2470, %v2454, %v2486
        %v2503 = vsel %vm2471, %v2455, %v2487
        %v2504 = vsel %vm2472, %v2456, %v2488
        %v2505 = vsel %vm2473, %v2457, %v2489
        %v2506 = vsel %vm2474, %v2458, %v2490
        %v2507 = vsel %vm2475, %v2459, %v2491
        %v2508 = vsel %vm2476, %v2460, %v2492
        %v2509 = vsel %vm2477, %v2461, %v2493
        %v2510 = vpack.c.bf16 %v2495, %v2494
        %v2511 = vpack.c.bf16 %v2497, %v2496
        %v2512 = vpack.c.bf16 %v2499, %v2498
        %v2513 = vpack.c.bf16 %v2501, %v2500
        %v2514 = vpack.c.bf16 %v2503, %v2502
        %v2515 = vpack.c.bf16 %v2505, %v2504
        %v2516 = vpack.c.bf16 %v2507, %v2506
        %v2517 = vpack.c.bf16 %v2509, %v2508
        %2518 = vmatprep.subr.bf16.mxu0 0
        %2519 = vmatpush1.bf16.msra.mxu0 %v2510
        %2520 = vmatprep.subr.bf16.mxu0 0
        %2521 = vmatpush1.bf16.msra.mxu0 %v2511
        %2522 = vmatprep.subr.bf16.mxu0 0
        %2523 = vmatpush1.bf16.msra.mxu0 %v2512
        %2524 = vmatprep.subr.bf16.mxu0 0
        %2525 = vmatpush1.bf16.msra.mxu0 %v2513
        %2526 = vmatprep.subr.bf16.mxu0 0
        %2527 = vmatpush1.bf16.msra.mxu0 %v2514
        %2528 = vmatprep.subr.bf16.mxu0 0
        %2529 = vmatpush1.bf16.msra.mxu0 %v2515
        %2530 = vmatprep.subr.bf16.mxu0 0
        %2531 = vmatpush1.bf16.msra.mxu0 %v2516
        %2532 = vmatprep.subr.bf16.mxu0 0
        %2533 = vmatpush1.bf16.msra.mxu0 %v2517
        %2534 = vmatprep.subr.bf16.mxu0 0
        %2535 = vmatpush1.bf16.msra.mxu0 0
        %2536 = vmatprep.subr.bf16.mxu0 0
        %2537 = vmatpush1.bf16.msra.mxu0 0
        %2538 = vmatprep.subr.bf16.mxu0 0
        %2539 = vmatpush1.bf16.msra.mxu0 0
        %2540 = vmatprep.subr.bf16.mxu0 0
        %2541 = vmatpush1.bf16.msra.mxu0 0
        %2542 = vmatprep.subr.bf16.mxu0 0
        %2543 = vmatpush1.bf16.msra.mxu0 0
        %2544 = vmatprep.subr.bf16.mxu0 0
        %2545 = vmatpush1.bf16.msra.mxu0 0
        %2546 = vmatprep.subr.bf16.mxu0 0
        %2547 = vmatpush1.bf16.msra.mxu0 0
        %2548 = vmatprep.subr.bf16.mxu0 0
        %2549 = vmatpush1.bf16.msra.mxu0 0
        %2550 = vmatprep.mubr.bf16.mxu0 0
        %2551 = vmatmul.mubr.bf16.gmra.mrb[0].mxu0 %v782
        %v2552 = vpop.f32.mrb[0].mxu0
        %v2553 = vadd.f32 0.0, %v2552
        %v2554 = vpop.f32.mrb[0].mxu0
        %v2555 = vpop.f32.mrb[0].mxu0
        %v2556 = vadd.f32 0.0, %v2555
        %v2557 = vpop.f32.mrb[0].mxu0
        %2558 = vmatprep.mubr.bf16.mxu0 0
        %2559 = vmatmul.mubr.bf16.gmra.mrb[0].mxu0 %v783
        %v2560 = vpop.f32.mrb[0].mxu0
        %v2561 = vadd.f32 0.0, %v2560
        %v2562 = vpop.f32.mrb[0].mxu0
        %v2563 = vpop.f32.mrb[0].mxu0
        %v2564 = vadd.f32 0.0, %v2563
        %v2565 = vpop.f32.mrb[0].mxu0
        %2566 = vmatprep.mubr.bf16.mxu0 0
        %2567 = vmatmul.mubr.bf16.gmra.mrb[0].mxu0 %v784
        %v2568 = vpop.f32.mrb[0].mxu0
        %v2569 = vadd.f32 0.0, %v2568
        %v2570 = vpop.f32.mrb[0].mxu0
        %v2571 = vpop.f32.mrb[0].mxu0
        %v2572 = vadd.f32 0.0, %v2571
        %v2573 = vpop.f32.mrb[0].mxu0
        %2574 = vmatprep.mubr.bf16.mxu0 0
        %2575 = vmatmul.mubr.bf16.gmra.mrb[0].mxu0 %v785
        %v2576 = vpop.f32.mrb[0].mxu0
        %v2577 = vadd.f32 0.0, %v2576
        %v2578 = vpop.f32.mrb[0].mxu0
        %v2579 = vpop.f32.mrb[0].mxu0
        %v2580 = vadd.f32 0.0, %v2579
        %v2581 = vpop.f32.mrb[0].mxu0
        %2582 = vmatprep.mubr.bf16.mxu0 0
        %2583 = vmatmul.mubr.bf16.gmra.mrb[0].mxu0 %v786
        %v2584 = vpop.f32.mrb[0].mxu0
        %v2585 = vadd.f32 0.0, %v2584
        %v2586 = vpop.f32.mrb[0].mxu0
        %v2587 = vpop.f32.mrb[0].mxu0
        %v2588 = vadd.f32 0.0, %v2587
        %v2589 = vpop.f32.mrb[0].mxu0
        %2590 = vmatprep.mubr.bf16.mxu0 0
        %2591 = vmatmul.mubr.bf16.gmra.mrb[0].mxu0 %v787
        %v2592 = vpop.f32.mrb[0].mxu0
        %v2593 = vadd.f32 0.0, %v2592
        %v2594 = vpop.f32.mrb[0].mxu0
        %v2595 = vpop.f32.mrb[0].mxu0
        %v2596 = vadd.f32 0.0, %v2595
        %v2597 = vpop.f32.mrb[0].mxu0
        %2598 = vmatprep.mubr.bf16.mxu0 0
        %2599 = vmatmul.mubr.bf16.gmra.mrb[0].mxu0 %v788
        %v2600 = vpop.f32.mrb[0].mxu0
        %v2601 = vadd.f32 0.0, %v2600
        %v2602 = vpop.f32.mrb[0].mxu0
        %v2603 = vpop.f32.mrb[0].mxu0
        %v2604 = vadd.f32 0.0, %v2603
        %v2605 = vpop.f32.mrb[0].mxu0
        %2606 = vmatprep.mubr.bf16.mxu0 0
        %2607 = vmatmul.mubr.bf16.gmra.mrb[0].mxu0 %v789
        %v2608 = vpop.f32.mrb[0].mxu0
        %v2609 = vadd.f32 0.0, %v2608
        %v2610 = vpop.f32.mrb[0].mxu0
        %v2611 = vpop.f32.mrb[0].mxu0
        %v2612 = vadd.f32 0.0, %v2611
        %v2613 = vpop.f32.mrb[0].mxu0
        %2614 = vdwg.mxu0
        %v2615 = vpack.c.bf16 %v2556, %v2553
        %v2616 = vpack.c.bf16 %v2564, %v2561
        %v2617 = vpack.c.bf16 %v2572, %v2569
        %v2618 = vpack.c.bf16 %v2580, %v2577
        %v2619 = vpack.c.bf16 %v2588, %v2585
        %v2620 = vpack.c.bf16 %v2596, %v2593
        %v2621 = vpack.c.bf16 %v2604, %v2601
        %v2622 = vpack.c.bf16 %v2612, %v2609
        %s2623 = scalar_lea.vmem [#allocation7], 128
        %v2624 = vld [vmem:[%s2623] sm:$0xf]
        %v2625 = vld [vmem:[%s2623 + $0x4] sm:$0xf]
        %v2626 = vld [vmem:[%s2623 + $0x8] sm:$0xf]
        %v2627 = vld [vmem:[%s2623 + $0xc] sm:$0xf]
        %v2628 = vld [vmem:[%s2623 + $0x10] sm:$0xf]
        %v2629 = vld [vmem:[%s2623 + $0x14] sm:$0xf]
        %v2630 = vld [vmem:[%s2623 + $0x18] sm:$0xf]
        %v2631 = vld [vmem:[%s2623 + $0x1c] sm:$0xf]
        %v2632 = vld [vmem:[%s2623 + $0x20] sm:$0xf]
        %v2633 = vld [vmem:[%s2623 + $0x24] sm:$0xf]
        %v2634 = vld [vmem:[%s2623 + $0x28] sm:$0xf]
        %v2635 = vld [vmem:[%s2623 + $0x2c] sm:$0xf]
        %v2636 = vld [vmem:[%s2623 + $0x30] sm:$0xf]
        %v2637 = vld [vmem:[%s2623 + $0x34] sm:$0xf]
        %v2638 = vld [vmem:[%s2623 + $0x38] sm:$0xf]
        %v2639 = vld [vmem:[%s2623 + $0x3c] sm:$0xf]
        %s2640 = scalar_lea.vmem %s4, 2
        %v2641 = vld [vmem:[%s2640] sm:$0x1]
        %v2643 = vlaneseq
        %v2644 = vshrl.u32 %v2643, 7
        %v2645 = vsub.s32 0, %v2644
        %v2646 = vrot.slane %v2641, %v2645
        %v2664 = vunpack.c.l.b16 %v2624
        %v2665 = vunpack.c.l.b16 %v2625
        %v2666 = vunpack.c.l.b16 %v2626
        %v2667 = vunpack.c.l.b16 %v2627
        %v2668 = vunpack.c.l.b16 %v2628
        %v2669 = vunpack.c.l.b16 %v2629
        %v2670 = vunpack.c.l.b16 %v2630
        %v2671 = vunpack.c.l.b16 %v2631
        %v2672 = vunpack.c.l.b16 %v2632
        %v2673 = vunpack.c.l.b16 %v2633
        %v2674 = vunpack.c.l.b16 %v2634
        %v2675 = vunpack.c.l.b16 %v2635
        %v2676 = vunpack.c.l.b16 %v2636
        %v2677 = vunpack.c.l.b16 %v2637
        %v2678 = vunpack.c.l.b16 %v2638
        %v2679 = vunpack.c.l.b16 %v2639
        %v2680 = vpack.c.b16 %v2665, %v2664
        %v2681 = vpack.c.b16 %v2667, %v2666
        %v2682 = vpack.c.b16 %v2669, %v2668
        %v2683 = vpack.c.b16 %v2671, %v2670
        %v2684 = vpack.c.b16 %v2673, %v2672
        %v2685 = vpack.c.b16 %v2675, %v2674
        %v2686 = vpack.c.b16 %v2677, %v2676
        %v2687 = vpack.c.b16 %v2679, %v2678
        %2696 = vmatprep.subr.bf16.mxu0 0
        %2697 = vmatpush1.bf16.msra.mxu0 %v2680
        %2698 = vmatprep.subr.bf16.mxu0 0
        %2699 = vmatpush1.bf16.msra.mxu0 %v2681
        %2700 = vmatprep.subr.bf16.mxu0 0
        %2701 = vmatpush1.bf16.msra.mxu0 %v2682
        %2702 = vmatprep.subr.bf16.mxu0 0
        %2703 = vmatpush1.bf16.msra.mxu0 %v2683
        %2704 = vmatprep.subr.bf16.mxu0 0
        %2705 = vmatpush1.bf16.msra.mxu0 %v2684
        %2706 = vmatprep.subr.bf16.mxu0 0
        %2707 = vmatpush1.bf16.msra.mxu0 %v2685
        %2708 = vmatprep.subr.bf16.mxu0 0
        %2709 = vmatpush1.bf16.msra.mxu0 %v2686
        %2710 = vmatprep.subr.bf16.mxu0 0
        %2711 = vmatpush1.bf16.msra.mxu0 %v2687
        %2712 = vmatprep.subr.bf16.mxu0 0
        %2713 = vmatpush1.bf16.msra.mxu0 0
        %2714 = vmatprep.subr.bf16.mxu0 0
        %2715 = vmatpush1.bf16.msra.mxu0 0
        %2716 = vmatprep.subr.bf16.mxu0 0
        %2717 = vmatpush1.bf16.msra.mxu0 0
        %2718 = vmatprep.subr.bf16.mxu0 0
        %2719 = vmatpush1.bf16.msra.mxu0 0
        %2720 = vmatprep.subr.bf16.mxu0 0
        %2721 = vmatpush1.bf16.msra.mxu0 0
        %2722 = vmatprep.subr.bf16.mxu0 0
        %2723 = vmatpush1.bf16.msra.mxu0 0
        %2724 = vmatprep.subr.bf16.mxu0 0
        %2725 = vmatpush1.bf16.msra.mxu0 0
        %2726 = vmatprep.subr.bf16.mxu0 0
        %2727 = vmatpush1.bf16.msra.mxu0 0
        %2728 = vmatprep.mubr.bf16.mxu0 0
        %2729 = vmatmul.mubr.bf16.gmra.mrb[0].mxu0 %v2615
        %v2730 = vpop.f32.mrb[0].mxu0
        %v2731 = vadd.f32 %v2646, %v2730
        %v2732 = vpop.f32.mrb[0].mxu0
        %v2733 = vpop.f32.mrb[0].mxu0
        %v2734 = vadd.f32 %v2646, %v2733
        %v2735 = vpop.f32.mrb[0].mxu0
        %2736 = vmatprep.mubr.bf16.mxu0 0
        %2737 = vmatmul.mubr.bf16.gmra.mrb[0].mxu0 %v2616
        %v2738 = vpop.f32.mrb[0].mxu0
        %v2739 = vadd.f32 %v2646, %v2738
        %v2740 = vpop.f32.mrb[0].mxu0
        %v2741 = vpop.f32.mrb[0].mxu0
        %v2742 = vadd.f32 %v2646, %v2741
        %v2743 = vpop.f32.mrb[0].mxu0
        %2744 = vmatprep.mubr.bf16.mxu0 0
        %2745 = vmatmul.mubr.bf16.gmra.mrb[0].mxu0 %v2617
        %v2746 = vpop.f32.mrb[0].mxu0
        %v2747 = vadd.f32 %v2646, %v2746
        %v2748 = vpop.f32.mrb[0].mxu0
        %v2749 = vpop.f32.mrb[0].mxu0
        %v2750 = vadd.f32 %v2646, %v2749
        %v2751 = vpop.f32.mrb[0].mxu0
        %2752 = vmatprep.mubr.bf16.mxu0 0
        %2753 = vmatmul.mubr.bf16.gmra.mrb[0].mxu0 %v2618
        %v2754 = vpop.f32.mrb[0].mxu0
        %v2755 = vadd.f32 %v2646, %v2754
        %v2756 = vpop.f32.mrb[0].mxu0
        %v2757 = vpop.f32.mrb[0].mxu0
        %v2758 = vadd.f32 %v2646, %v2757
        %v2759 = vpop.f32.mrb[0].mxu0
        %2760 = vmatprep.mubr.bf16.mxu0 0
        %2761 = vmatmul.mubr.bf16.gmra.mrb[0].mxu0 %v2619
        %v2762 = vpop.f32.mrb[0].mxu0
        %v2763 = vadd.f32 %v2646, %v2762
        %v2764 = vpop.f32.mrb[0].mxu0
        %v2765 = vpop.f32.mrb[0].mxu0
        %v2766 = vadd.f32 %v2646, %v2765
        %v2767 = vpop.f32.mrb[0].mxu0
        %2768 = vmatprep.mubr.bf16.mxu0 0
        %2769 = vmatmul.mubr.bf16.gmra.mrb[0].mxu0 %v2620
        %v2770 = vpop.f32.mrb[0].mxu0
        %v2771 = vadd.f32 %v2646, %v2770
        %v2772 = vpop.f32.mrb[0].mxu0
        %v2773 = vpop.f32.mrb[0].mxu0
        %v2774 = vadd.f32 %v2646, %v2773
        %v2775 = vpop.f32.mrb[0].mxu0
        %2776 = vmatprep.mubr.bf16.mxu0 0
        %2777 = vmatmul.mubr.bf16.gmra.mrb[0].mxu0 %v2621
        %v2778 = vpop.f32.mrb[0].mxu0
        %v2779 = vadd.f32 %v2646, %v2778
        %v2780 = vpop.f32.mrb[0].mxu0
        %v2781 = vpop.f32.mrb[0].mxu0
        %v2782 = vadd.f32 %v2646, %v2781
        %v2783 = vpop.f32.mrb[0].mxu0
        %2784 = vmatprep.mubr.bf16.mxu0 0
        %2785 = vmatmul.mubr.bf16.gmra.mrb[0].mxu0 %v2622
        %v2786 = vpop.f32.mrb[0].mxu0
        %v2787 = vadd.f32 %v2646, %v2786
        %v2788 = vpop.f32.mrb[0].mxu0
        %v2789 = vpop.f32.mrb[0].mxu0
        %v2790 = vadd.f32 %v2646, %v2789
        %v2791 = vpop.f32.mrb[0].mxu0
        %2792 = vdwg.mxu0
        %s2793 = scalar_lea.vmem %s7, 2
        %v2794 = vld [vmem:[%s2793] sm:$0x1]
        %s2795 = scalar_lea.vmem %s8, 2
        %v2796 = vld [vmem:[%s2795] sm:$0x1]
        %s2797 = scalar_lea.vmem %s9, 2
        %v2798 = vld [vmem:[%s2797] sm:$0x1]
        %v2799 = vadd.f32 %v2731, %v2734
        %v2800 = vadd.f32 %v2799, %v2739
        %v2801 = vadd.f32 %v2800, %v2742
        %v2802 = vadd.f32 %v2801, %v2747
        %v2803 = vadd.f32 %v2802, %v2750
        %v2804 = vadd.f32 %v2803, %v2755
        %v2805 = vadd.f32 %v2804, %v2758
        %v2806 = vadd.f32 %v2805, %v2763
        %v2807 = vadd.f32 %v2806, %v2766
        %v2808 = vadd.f32 %v2807, %v2771
        %v2809 = vadd.f32 %v2808, %v2774
        %v2810 = vadd.f32 %v2809, %v2779
        %v2811 = vadd.f32 %v2810, %v2782
        %v2812 = vadd.f32 %v2811, %v2787
        %v2813 = vadd.f32 %v2812, %v2790
        %v2814 = vrot.slane %v2813, 4
        %v2815 = vadd.f32 %v2813, %v2814
        %v2816 = vrot.slane %v2815, 2
        %v2817 = vadd.f32 %v2815, %v2816
        %v2818 = vrot.slane %v2817, 1
        %v2819 = vadd.f32 %v2817, %v2818
        %v2820 = vmul.f32 %v2731, %v2731
        %v2821 = vmul.f32 %v2734, %v2734
        %v2822 = vmul.f32 %v2739, %v2739
        %v2823 = vmul.f32 %v2742, %v2742
        %v2824 = vmul.f32 %v2747, %v2747
        %v2825 = vmul.f32 %v2750, %v2750
        %v2826 = vmul.f32 %v2755, %v2755
        %v2827 = vmul.f32 %v2758, %v2758
        %v2828 = vmul.f32 %v2763, %v2763
        %v2829 = vmul.f32 %v2766, %v2766
        %v2830 = vmul.f32 %v2771, %v2771
        %v2831 = vmul.f32 %v2774, %v2774
        %v2832 = vmul.f32 %v2779, %v2779
        %v2833 = vmul.f32 %v2782, %v2782
        %v2834 = vmul.f32 %v2787, %v2787
        %v2835 = vmul.f32 %v2790, %v2790
        %v2836 = vadd.f32 %v2820, %v2821
        %v2837 = vadd.f32 %v2836, %v2822
        %v2838 = vadd.f32 %v2837, %v2823
        %v2839 = vadd.f32 %v2838, %v2824
        %v2840 = vadd.f32 %v2839, %v2825
        %v2841 = vadd.f32 %v2840, %v2826
        %v2842 = vadd.f32 %v2841, %v2827
        %v2843 = vadd.f32 %v2842, %v2828
        %v2844 = vadd.f32 %v2843, %v2829
        %v2845 = vadd.f32 %v2844, %v2830
        %v2846 = vadd.f32 %v2845, %v2831
        %v2847 = vadd.f32 %v2846, %v2832
        %v2848 = vadd.f32 %v2847, %v2833
        %v2849 = vadd.f32 %v2848, %v2834
        %v2850 = vadd.f32 %v2849, %v2835
        %v2851 = vrot.slane %v2850, 4
        %v2852 = vadd.f32 %v2850, %v2851
        %v2853 = vrot.slane %v2852, 2
        %v2854 = vadd.f32 %v2852, %v2853
        %v2855 = vrot.slane %v2854, 1
        %v2856 = vadd.f32 %v2854, %v2855
        %v2857 = vmul.f32 %v2819, 0.0078125
        %v2858 = vmul.f32 %v2856, 0.0078125
        %v2859 = vmul.f32 %v2798, 2.0
        %v2860 = vmul.f32 %v2798, %v2798
        %v2861 = vsub.f32 %v2859, %v2860
        %v2862 = vmul.f32 %v2857, %v2857
        %v2863 = vmul.f32 %v2861, %v2862
        %v2864 = vsub.f32 %v2858, %v2863
        %v2865 = vadd.f32 %v2864, 1e-05
        %v2866 = vrsqrt.pop %v2865
        %v2867 = vmul.f32 %v2794, %v2866
        %v2868 = vmul.f32 %v2798, %v2857
        %v2870 = vlaneseq
        %v2871 = vshrl.u32 %v2870, 7
        %v2872 = vsub.s32 0, %v2871
        %v2873 = vrot.slane %v2868, %v2872
        %v2875 = vsub.f32 %v2731, %v2873
        %v2876 = vsub.f32 %v2734, %v2873
        %v2877 = vsub.f32 %v2739, %v2873
        %v2878 = vsub.f32 %v2742, %v2873
        %v2879 = vsub.f32 %v2747, %v2873
        %v2880 = vsub.f32 %v2750, %v2873
        %v2881 = vsub.f32 %v2755, %v2873
        %v2882 = vsub.f32 %v2758, %v2873
        %v2883 = vsub.f32 %v2763, %v2873
        %v2884 = vsub.f32 %v2766, %v2873
        %v2885 = vsub.f32 %v2771, %v2873
        %v2886 = vsub.f32 %v2774, %v2873
        %v2887 = vsub.f32 %v2779, %v2873
        %v2888 = vsub.f32 %v2782, %v2873
        %v2889 = vsub.f32 %v2787, %v2873
        %v2890 = vsub.f32 %v2790, %v2873
        %v2892 = vlaneseq
        %v2893 = vshrl.u32 %v2892, 7
        %v2894 = vsub.s32 0, %v2893
        %v2895 = vrot.slane %v2867, %v2894
        %v2897 = vmul.f32 %v2875, %v2895
        %v2898 = vmul.f32 %v2876, %v2895
        %v2899 = vmul.f32 %v2877, %v2895
        %v2900 = vmul.f32 %v2878, %v2895
        %v2901 = vmul.f32 %v2879, %v2895
        %v2902 = vmul.f32 %v2880, %v2895
        %v2903 = vmul.f32 %v2881, %v2895
        %v2904 = vmul.f32 %v2882, %v2895
        %v2905 = vmul.f32 %v2883, %v2895
        %v2906 = vmul.f32 %v2884, %v2895
        %v2907 = vmul.f32 %v2885, %v2895
        %v2908 = vmul.f32 %v2886, %v2895
        %v2909 = vmul.f32 %v2887, %v2895
        %v2910 = vmul.f32 %v2888, %v2895
        %v2911 = vmul.f32 %v2889, %v2895
        %v2912 = vmul.f32 %v2890, %v2895
        %v2914 = vlaneseq
        %v2915 = vshrl.u32 %v2914, 7
        %v2916 = vsub.s32 0, %v2915
        %v2917 = vrot.slane %v2796, %v2916
        %v2919 = vadd.f32 %v2897, %v2917
        %v2920 = vadd.f32 %v2898, %v2917
        %v2921 = vadd.f32 %v2899, %v2917
        %v2922 = vadd.f32 %v2900, %v2917
        %v2923 = vadd.f32 %v2901, %v2917
        %v2924 = vadd.f32 %v2902, %v2917
        %v2925 = vadd.f32 %v2903, %v2917
        %v2926 = vadd.f32 %v2904, %v2917
        %v2927 = vadd.f32 %v2905, %v2917
        %v2928 = vadd.f32 %v2906, %v2917
        %v2929 = vadd.f32 %v2907, %v2917
        %v2930 = vadd.f32 %v2908, %v2917
        %v2931 = vadd.f32 %v2909, %v2917
        %v2932 = vadd.f32 %v2910, %v2917
        %v2933 = vadd.f32 %v2911, %v2917
        %v2934 = vadd.f32 %v2912, %v2917
        %vm2935 = vcmp.gt.f32.partialorder %v2919, 0.0
        %vm2936 = vcmp.gt.f32.partialorder %v2920, 0.0
        %vm2937 = vcmp.gt.f32.partialorder %v2921, 0.0
        %vm2938 = vcmp.gt.f32.partialorder %v2922, 0.0
        %vm2939 = vcmp.gt.f32.partialorder %v2923, 0.0
        %vm2940 = vcmp.gt.f32.partialorder %v2924, 0.0
        %vm2941 = vcmp.gt.f32.partialorder %v2925, 0.0
        %vm2942 = vcmp.gt.f32.partialorder %v2926, 0.0
        %vm2943 = vcmp.gt.f32.partialorder %v2927, 0.0
        %vm2944 = vcmp.gt.f32.partialorder %v2928, 0.0
        %vm2945 = vcmp.gt.f32.partialorder %v2929, 0.0
        %vm2946 = vcmp.gt.f32.partialorder %v2930, 0.0
        %vm2947 = vcmp.gt.f32.partialorder %v2931, 0.0
        %vm2948 = vcmp.gt.f32.partialorder %v2932, 0.0
        %vm2949 = vcmp.gt.f32.partialorder %v2933, 0.0
        %vm2950 = vcmp.gt.f32.partialorder %v2934, 0.0
        %v2951 = vmul.f32 %v2919, 0.01
        %v2952 = vmul.f32 %v2920, 0.01
        %v2953 = vmul.f32 %v2921, 0.01
        %v2954 = vmul.f32 %v2922, 0.01
        %v2955 = vmul.f32 %v2923, 0.01
        %v2956 = vmul.f32 %v2924, 0.01
        %v2957 = vmul.f32 %v2925, 0.01
        %v2958 = vmul.f32 %v2926, 0.01
        %v2959 = vmul.f32 %v2927, 0.01
        %v2960 = vmul.f32 %v2928, 0.01
        %v2961 = vmul.f32 %v2929, 0.01
        %v2962 = vmul.f32 %v2930, 0.01
        %v2963 = vmul.f32 %v2931, 0.01
        %v2964 = vmul.f32 %v2932, 0.01
        %v2965 = vmul.f32 %v2933, 0.01
        %v2966 = vmul.f32 %v2934, 0.01
        %v2967 = vsel %vm2935, %v2919, %v2951
        %v2968 = vsel %vm2936, %v2920, %v2952
        %v2969 = vsel %vm2937, %v2921, %v2953
        %v2970 = vsel %vm2938, %v2922, %v2954
        %v2971 = vsel %vm2939, %v2923, %v2955
        %v2972 = vsel %vm2940, %v2924, %v2956
        %v2973 = vsel %vm2941, %v2925, %v2957
        %v2974 = vsel %vm2942, %v2926, %v2958
        %v2975 = vsel %vm2943, %v2927, %v2959
        %v2976 = vsel %vm2944, %v2928, %v2960
        %v2977 = vsel %vm2945, %v2929, %v2961
        %v2978 = vsel %vm2946, %v2930, %v2962
        %v2979 = vsel %vm2947, %v2931, %v2963
        %v2980 = vsel %vm2948, %v2932, %v2964
        %v2981 = vsel %vm2949, %v2933, %v2965
        %v2982 = vsel %vm2950, %v2934, %v2966
        %v2983 = vpack.c.bf16 %v2968, %v2967
        %v2984 = vpack.c.bf16 %v2970, %v2969
        %v2985 = vpack.c.bf16 %v2972, %v2971
        %v2986 = vpack.c.bf16 %v2974, %v2973
        %v2987 = vpack.c.bf16 %v2976, %v2975
        %v2988 = vpack.c.bf16 %v2978, %v2977
        %v2989 = vpack.c.bf16 %v2980, %v2979
        %v2990 = vpack.c.bf16 %v2982, %v2981
        %s2991 = scalar_lea.vmem [#allocation9], 128
        %v2992 = vld [vmem:[%s2991] sm:$0xf]
        %v2993 = vld [vmem:[%s2991 + $0x4] sm:$0xf]
        %v2994 = vld [vmem:[%s2991 + $0x8] sm:$0xf]
        %v2995 = vld [vmem:[%s2991 + $0xc] sm:$0xf]
        %v2996 = vld [vmem:[%s2991 + $0x10] sm:$0xf]
        %v2997 = vld [vmem:[%s2991 + $0x14] sm:$0xf]
        %v2998 = vld [vmem:[%s2991 + $0x18] sm:$0xf]
        %v2999 = vld [vmem:[%s2991 + $0x1c] sm:$0xf]
        %v3000 = vld [vmem:[%s2991 + $0x20] sm:$0xf]
        %v3001 = vld [vmem:[%s2991 + $0x24] sm:$0xf]
        %v3002 = vld [vmem:[%s2991 + $0x28] sm:$0xf]
        %v3003 = vld [vmem:[%s2991 + $0x2c] sm:$0xf]
        %v3004 = vld [vmem:[%s2991 + $0x30] sm:$0xf]
        %v3005 = vld [vmem:[%s2991 + $0x34] sm:$0xf]
        %v3006 = vld [vmem:[%s2991 + $0x38] sm:$0xf]
        %v3007 = vld [vmem:[%s2991 + $0x3c] sm:$0xf]
        %s3008 = scalar_lea.vmem %s6, 2
        %v3009 = vld [vmem:[%s3008] sm:$0x1]
        %v3011 = vlaneseq
        %v3012 = vshrl.u32 %v3011, 7
        %v3013 = vsub.s32 0, %v3012
        %v3014 = vrot.slane %v3009, %v3013
        %v3032 = vunpack.c.l.b16 %v2992
        %v3033 = vunpack.c.l.b16 %v2993
        %v3034 = vunpack.c.l.b16 %v2994
        %v3035 = vunpack.c.l.b16 %v2995
        %v3036 = vunpack.c.l.b16 %v2996
        %v3037 = vunpack.c.l.b16 %v2997
        %v3038 = vunpack.c.l.b16 %v2998
        %v3039 = vunpack.c.l.b16 %v2999
        %v3040 = vunpack.c.l.b16 %v3000
        %v3041 = vunpack.c.l.b16 %v3001
        %v3042 = vunpack.c.l.b16 %v3002
        %v3043 = vunpack.c.l.b16 %v3003
        %v3044 = vunpack.c.l.b16 %v3004
        %v3045 = vunpack.c.l.b16 %v3005
        %v3046 = vunpack.c.l.b16 %v3006
        %v3047 = vunpack.c.l.b16 %v3007
        %v3048 = vpack.c.b16 %v3033, %v3032
        %v3049 = vpack.c.b16 %v3035, %v3034
        %v3050 = vpack.c.b16 %v3037, %v3036
        %v3051 = vpack.c.b16 %v3039, %v3038
        %v3052 = vpack.c.b16 %v3041, %v3040
        %v3053 = vpack.c.b16 %v3043, %v3042
        %v3054 = vpack.c.b16 %v3045, %v3044
        %v3055 = vpack.c.b16 %v3047, %v3046
        %3064 = vmatprep.subr.bf16.mxu0 0
        %3065 = vmatpush1.bf16.msra.mxu0 %v3048
        %3066 = vmatprep.subr.bf16.mxu0 0
        %3067 = vmatpush1.bf16.msra.mxu0 %v3049
        %3068 = vmatprep.subr.bf16.mxu0 0
        %3069 = vmatpush1.bf16.msra.mxu0 %v3050
        %3070 = vmatprep.subr.bf16.mxu0 0
        %3071 = vmatpush1.bf16.msra.mxu0 %v3051
        %3072 = vmatprep.subr.bf16.mxu0 0
        %3073 = vmatpush1.bf16.msra.mxu0 %v3052
        %3074 = vmatprep.subr.bf16.mxu0 0
        %3075 = vmatpush1.bf16.msra.mxu0 %v3053
        %3076 = vmatprep.subr.bf16.mxu0 0
        %3077 = vmatpush1.bf16.msra.mxu0 %v3054
        %3078 = vmatprep.subr.bf16.mxu0 0
        %3079 = vmatpush1.bf16.msra.mxu0 %v3055
        %3080 = vmatprep.subr.bf16.mxu0 0
        %3081 = vmatpush1.bf16.msra.mxu0 0
        %3082 = vmatprep.subr.bf16.mxu0 0
        %3083 = vmatpush1.bf16.msra.mxu0 0
        %3084 = vmatprep.subr.bf16.mxu0 0
        %3085 = vmatpush1.bf16.msra.mxu0 0
        %3086 = vmatprep.subr.bf16.mxu0 0
        %3087 = vmatpush1.bf16.msra.mxu0 0
        %3088 = vmatprep.subr.bf16.mxu0 0
        %3089 = vmatpush1.bf16.msra.mxu0 0
        %3090 = vmatprep.subr.bf16.mxu0 0
        %3091 = vmatpush1.bf16.msra.mxu0 0
        %3092 = vmatprep.subr.bf16.mxu0 0
        %3093 = vmatpush1.bf16.msra.mxu0 0
        %3094 = vmatprep.subr.bf16.mxu0 0
        %3095 = vmatpush1.bf16.msra.mxu0 0
        %3096 = vmatprep.mubr.bf16.mxu0 0
        %3097 = vmatmul.mubr.bf16.gmra.mrb[0].mxu0 %v2983
        %v3098 = vpop.f32.mrb[0].mxu0
        %v3099 = vadd.f32 %v3014, %v3098
        %v3100 = vpop.f32.mrb[0].mxu0
        %v3101 = vpop.f32.mrb[0].mxu0
        %v3102 = vadd.f32 %v3014, %v3101
        %v3103 = vpop.f32.mrb[0].mxu0
        %3104 = vmatprep.mubr.bf16.mxu0 0
        %3105 = vmatmul.mubr.bf16.gmra.mrb[0].mxu0 %v2984
        %v3106 = vpop.f32.mrb[0].mxu0
        %v3107 = vadd.f32 %v3014, %v3106
        %v3108 = vpop.f32.mrb[0].mxu0
        %v3109 = vpop.f32.mrb[0].mxu0
        %v3110 = vadd.f32 %v3014, %v3109
        %v3111 = vpop.f32.mrb[0].mxu0
        %3112 = vmatprep.mubr.bf16.mxu0 0
        %3113 = vmatmul.mubr.bf16.gmra.mrb[0].mxu0 %v2985
        %v3114 = vpop.f32.mrb[0].mxu0
        %v3115 = vadd.f32 %v3014, %v3114
        %v3116 = vpop.f32.mrb[0].mxu0
        %v3117 = vpop.f32.mrb[0].mxu0
        %v3118 = vadd.f32 %v3014, %v3117
        %v3119 = vpop.f32.mrb[0].mxu0
        %3120 = vmatprep.mubr.bf16.mxu0 0
        %3121 = vmatmul.mubr.bf16.gmra.mrb[0].mxu0 %v2986
        %v3122 = vpop.f32.mrb[0].mxu0
        %v3123 = vadd.f32 %v3014, %v3122
        %v3124 = vpop.f32.mrb[0].mxu0
        %v3125 = vpop.f32.mrb[0].mxu0
        %v3126 = vadd.f32 %v3014, %v3125
        %v3127 = vpop.f32.mrb[0].mxu0
        %3128 = vmatprep.mubr.bf16.mxu0 0
        %3129 = vmatmul.mubr.bf16.gmra.mrb[0].mxu0 %v2987
        %v3130 = vpop.f32.mrb[0].mxu0
        %v3131 = vadd.f32 %v3014, %v3130
        %v3132 = vpop.f32.mrb[0].mxu0
        %v3133 = vpop.f32.mrb[0].mxu0
        %v3134 = vadd.f32 %v3014, %v3133
        %v3135 = vpop.f32.mrb[0].mxu0
        %3136 = vmatprep.mubr.bf16.mxu0 0
        %3137 = vmatmul.mubr.bf16.gmra.mrb[0].mxu0 %v2988
        %v3138 = vpop.f32.mrb[0].mxu0
        %v3139 = vadd.f32 %v3014, %v3138
        %v3140 = vpop.f32.mrb[0].mxu0
        %v3141 = vpop.f32.mrb[0].mxu0
        %v3142 = vadd.f32 %v3014, %v3141
        %v3143 = vpop.f32.mrb[0].mxu0
        %3144 = vmatprep.mubr.bf16.mxu0 0
        %3145 = vmatmul.mubr.bf16.gmra.mrb[0].mxu0 %v2989
        %v3146 = vpop.f32.mrb[0].mxu0
        %v3147 = vadd.f32 %v3014, %v3146
        %v3148 = vpop.f32.mrb[0].mxu0
        %v3149 = vpop.f32.mrb[0].mxu0
        %v3150 = vadd.f32 %v3014, %v3149
        %v3151 = vpop.f32.mrb[0].mxu0
        %3152 = vmatprep.mubr.bf16.mxu0 0
        %3153 = vmatmul.mubr.bf16.gmra.mrb[0].mxu0 %v2990
        %v3154 = vpop.f32.mrb[0].mxu0
        %v3155 = vadd.f32 %v3014, %v3154
        %v3156 = vpop.f32.mrb[0].mxu0
        %v3157 = vpop.f32.mrb[0].mxu0
        %v3158 = vadd.f32 %v3014, %v3157
        %v3159 = vpop.f32.mrb[0].mxu0
        %3160 = vdwg.mxu0
        %v3161 = vpack.c.bf16 %v3102, %v3099
        %v3162 = vpack.c.bf16 %v3110, %v3107
        %v3163 = vpack.c.bf16 %v3118, %v3115
        %v3164 = vpack.c.bf16 %v3126, %v3123
        %v3165 = vpack.c.bf16 %v3134, %v3131
        %v3166 = vpack.c.bf16 %v3142, %v3139
        %v3167 = vpack.c.bf16 %v3150, %v3147
        %v3168 = vpack.c.bf16 %v3158, %v3155
        %v3169 = vld [vmem:[%s631] sm:$0xf]
        %v3170 = vld [vmem:[%s631 + $0x4] sm:$0xf]
        %v3173 = vunpack.c.l.b16 %v3169
        %v3174 = vunpack.c.l.b16 %v3170
        %v3175 = vpack.c.b16 %v3174, %v3173
        %3177 = vmatprep.subr.bf16.mxu0 0
        %3178 = vmatpush1.bf16.msra.mxu0 %v3161
        %3179 = vmatprep.subr.bf16.mxu0 0
        %3180 = vmatpush1.bf16.msra.mxu0 %v3162
        %3181 = vmatprep.subr.bf16.mxu0 0
        %3182 = vmatpush1.bf16.msra.mxu0 %v3163
        %3183 = vmatprep.subr.bf16.mxu0 0
        %3184 = vmatpush1.bf16.msra.mxu0 %v3164
        %3185 = vmatprep.subr.bf16.mxu0 0
        %3186 = vmatpush1.bf16.msra.mxu0 %v3165
        %3187 = vmatprep.subr.bf16.mxu0 0
        %3188 = vmatpush1.bf16.msra.mxu0 %v3166
        %3189 = vmatprep.subr.bf16.mxu0 0
        %3190 = vmatpush1.bf16.msra.mxu0 %v3167
        %3191 = vmatprep.subr.bf16.mxu0 0
        %3192 = vmatpush1.bf16.msra.mxu0 %v3168
        %3193 = vmatprep.subr.bf16.mxu0 0
        %3194 = vmatpush1.bf16.msra.mxu0 0
        %3195 = vmatprep.subr.bf16.mxu0 0
        %3196 = vmatpush1.bf16.msra.mxu0 0
        %3197 = vmatprep.subr.bf16.mxu0 0
        %3198 = vmatpush1.bf16.msra.mxu0 0
        %3199 = vmatprep.subr.bf16.mxu0 0
        %3200 = vmatpush1.bf16.msra.mxu0 0
        %3201 = vmatprep.subr.bf16.mxu0 0
        %3202 = vmatpush1.bf16.msra.mxu0 0
        %3203 = vmatprep.subr.bf16.mxu0 0
        %3204 = vmatpush1.bf16.msra.mxu0 0
        %3205 = vmatprep.subr.bf16.mxu0 0
        %3206 = vmatpush1.bf16.msra.mxu0 0
        %3207 = vmatprep.subr.bf16.mxu0 0
        %3208 = vmatpush1.bf16.msra.mxu0 0
        %3209 = vmatprep.mubr.bf16.mxu0 0
        %3210 = vmatmul.mubr.bf16.gmra.mrb[0].mxu0 %v3175
        %v3211 = vpop.f32.mrb[0].mxu0
        %v3212 = vadd.f32 0.0, %v3211
        %v3213 = vpop.f32.mrb[0].mxu0
        %v3214 = vpop.f32.mrb[0].mxu0
        %v3215 = vadd.f32 0.0, %v3214
        %v3216 = vpop.f32.mrb[0].mxu0
        %3217 = vdwg.mxu0
        %v3218 = vpack.c.bf16 %v3215, %v3212
        %v3219 = vld [vmem:[#allocation10] sm:$0xf]
        %v3220 = vld [vmem:[#allocation10 + $0x4] sm:$0xf]
        %v3221 = vld [vmem:[#allocation10 + $0x8] sm:$0xf]
        %v3222 = vld [vmem:[#allocation10 + $0xc] sm:$0xf]
        %v3223 = vld [vmem:[#allocation10 + $0x10] sm:$0xf]
        %v3224 = vld [vmem:[#allocation10 + $0x14] sm:$0xf]
        %v3225 = vld [vmem:[#allocation10 + $0x18] sm:$0xf]
        %v3226 = vld [vmem:[#allocation10 + $0x1c] sm:$0xf]
        %v3227 = vld [vmem:[#allocation10 + $0x20] sm:$0xf]
        %v3228 = vld [vmem:[#allocation10 + $0x24] sm:$0xf]
        %v3229 = vld [vmem:[#allocation10 + $0x28] sm:$0xf]
        %v3230 = vld [vmem:[#allocation10 + $0x2c] sm:$0xf]
        %v3231 = vld [vmem:[#allocation10 + $0x30] sm:$0xf]
        %v3232 = vld [vmem:[#allocation10 + $0x34] sm:$0xf]
        %v3233 = vld [vmem:[#allocation10 + $0x38] sm:$0xf]
        %v3234 = vld [vmem:[#allocation10 + $0x3c] sm:$0xf]
        %v3235 = vld [vmem:[%s14] sm:$0x1]
        %v3237 = vlaneseq
        %v3238 = vshrl.u32 %v3237, 7
        %v3239 = vsub.s32 0, %v3238
        %v3240 = vrot.slane %v3235, %v3239
        %v3258 = vunpack.c.l.b16 %v3219
        %v3259 = vunpack.c.l.b16 %v3220
        %v3260 = vunpack.c.l.b16 %v3221
        %v3261 = vunpack.c.l.b16 %v3222
        %v3262 = vunpack.c.l.b16 %v3223
        %v3263 = vunpack.c.l.b16 %v3224
        %v3264 = vunpack.c.l.b16 %v3225
        %v3265 = vunpack.c.l.b16 %v3226
        %v3266 = vunpack.c.l.b16 %v3227
        %v3267 = vunpack.c.l.b16 %v3228
        %v3268 = vunpack.c.l.b16 %v3229
        %v3269 = vunpack.c.l.b16 %v3230
        %v3270 = vunpack.c.l.b16 %v3231
        %v3271 = vunpack.c.l.b16 %v3232
        %v3272 = vunpack.c.l.b16 %v3233
        %v3273 = vunpack.c.l.b16 %v3234
        %v3274 = vpack.c.b16 %v3259, %v3258
        %v3275 = vpack.c.b16 %v3261, %v3260
        %v3276 = vpack.c.b16 %v3263, %v3262
        %v3277 = vpack.c.b16 %v3265, %v3264
        %v3278 = vpack.c.b16 %v3267, %v3266
        %v3279 = vpack.c.b16 %v3269, %v3268
        %v3280 = vpack.c.b16 %v3271, %v3270
        %v3281 = vpack.c.b16 %v3273, %v3272
        %3290 = vmatprep.subr.bf16.mxu0 0
        %3291 = vmatpush1.bf16.msra.mxu0 %v3274
        %3292 = vmatprep.subr.bf16.mxu0 0
        %3293 = vmatpush1.bf16.msra.mxu0 %v3275
        %3294 = vmatprep.subr.bf16.mxu0 0
        %3295 = vmatpush1.bf16.msra.mxu0 %v3276
        %3296 = vmatprep.subr.bf16.mxu0 0
        %3297 = vmatpush1.bf16.msra.mxu0 %v3277
        %3298 = vmatprep.subr.bf16.mxu0 0
        %3299 = vmatpush1.bf16.msra.mxu0 %v3278
        %3300 = vmatprep.subr.bf16.mxu0 0
        %3301 = vmatpush1.bf16.msra.mxu0 %v3279
        %3302 = vmatprep.subr.bf16.mxu0 0
        %3303 = vmatpush1.bf16.msra.mxu0 %v3280
        %3304 = vmatprep.subr.bf16.mxu0 0
        %3305 = vmatpush1.bf16.msra.mxu0 %v3281
        %3306 = vmatprep.subr.bf16.mxu0 0
        %3307 = vmatpush1.bf16.msra.mxu0 0
        %3308 = vmatprep.subr.bf16.mxu0 0
        %3309 = vmatpush1.bf16.msra.mxu0 0
        %3310 = vmatprep.subr.bf16.mxu0 0
        %3311 = vmatpush1.bf16.msra.mxu0 0
        %3312 = vmatprep.subr.bf16.mxu0 0
        %3313 = vmatpush1.bf16.msra.mxu0 0
        %3314 = vmatprep.subr.bf16.mxu0 0
        %3315 = vmatpush1.bf16.msra.mxu0 0
        %3316 = vmatprep.subr.bf16.mxu0 0
        %3317 = vmatpush1.bf16.msra.mxu0 0
        %3318 = vmatprep.subr.bf16.mxu0 0
        %3319 = vmatpush1.bf16.msra.mxu0 0
        %3320 = vmatprep.subr.bf16.mxu0 0
        %3321 = vmatpush1.bf16.msra.mxu0 0
        %3322 = vmatprep.mubr.bf16.mxu0 0
        %3323 = vmatmul.mubr.bf16.gmra.mrb[0].mxu0 %v3218
        %v3324 = vpop.f32.mrb[0].mxu0
        %v3325 = vadd.f32 %v3240, %v3324
        %v3326 = vpop.f32.mrb[0].mxu0
        %v3327 = vpop.f32.mrb[0].mxu0
        %v3328 = vadd.f32 %v3240, %v3327
        %v3329 = vpop.f32.mrb[0].mxu0
        %3330 = vdwg.mxu0
        %vm3331 = vcmp.gt.f32.partialorder %v3325, 0.0
        %vm3332 = vcmp.gt.f32.partialorder %v3328, 0.0
        %v3333 = vmul.f32 %v3325, 0.01
        %v3334 = vmul.f32 %v3328, 0.01
        %v3335 = vsel %vm3331, %v3325, %v3333
        %v3336 = vsel %vm3332, %v3328, %v3334
        %v3337 = vpack.c.bf16 %v3336, %v3335
        %v3338 = vld [vmem:[#allocation12] sm:$0xf]
        %v3339 = vld [vmem:[#allocation12 + $0x4] sm:$0xf]
        %v3340 = vld [vmem:[#allocation12 + $0x8] sm:$0xf]
        %v3341 = vld [vmem:[#allocation12 + $0xc] sm:$0xf]
        %v3342 = vld [vmem:[#allocation12 + $0x10] sm:$0xf]
        %v3343 = vld [vmem:[#allocation12 + $0x14] sm:$0xf]
        %v3344 = vld [vmem:[#allocation12 + $0x18] sm:$0xf]
        %v3345 = vld [vmem:[#allocation12 + $0x1c] sm:$0xf]
        %v3346 = vld [vmem:[#allocation12 + $0x20] sm:$0xf]
        %v3347 = vld [vmem:[#allocation12 + $0x24] sm:$0xf]
        %v3348 = vld [vmem:[#allocation12 + $0x28] sm:$0xf]
        %v3349 = vld [vmem:[#allocation12 + $0x2c] sm:$0xf]
        %v3350 = vld [vmem:[#allocation12 + $0x30] sm:$0xf]
        %v3351 = vld [vmem:[#allocation12 + $0x34] sm:$0xf]
        %v3352 = vld [vmem:[#allocation12 + $0x38] sm:$0xf]
        %v3353 = vld [vmem:[#allocation12 + $0x3c] sm:$0xf]
        %v3354 = vld [vmem:[#allocation13] sm:$0x1]
        %v3356 = vlaneseq
        %v3357 = vshrl.u32 %v3356, 7
        %v3358 = vsub.s32 0, %v3357
        %v3359 = vrot.slane %v3354, %v3358
        %v3377 = vunpack.c.l.b16 %v3338
        %v3378 = vunpack.c.l.b16 %v3339
        %v3379 = vunpack.c.l.b16 %v3340
        %v3380 = vunpack.c.l.b16 %v3341
        %v3381 = vunpack.c.l.b16 %v3342
        %v3382 = vunpack.c.l.b16 %v3343
        %v3383 = vunpack.c.l.b16 %v3344
        %v3384 = vunpack.c.l.b16 %v3345
        %v3385 = vunpack.c.l.b16 %v3346
        %v3386 = vunpack.c.l.b16 %v3347
        %v3387 = vunpack.c.l.b16 %v3348
        %v3388 = vunpack.c.l.b16 %v3349
        %v3389 = vunpack.c.l.b16 %v3350
        %v3390 = vunpack.c.l.b16 %v3351
        %v3391 = vunpack.c.l.b16 %v3352
        %v3392 = vunpack.c.l.b16 %v3353
        %v3393 = vpack.c.b16 %v3378, %v3377
        %v3394 = vpack.c.b16 %v3380, %v3379
        %v3395 = vpack.c.b16 %v3382, %v3381
        %v3396 = vpack.c.b16 %v3384, %v3383
        %v3397 = vpack.c.b16 %v3386, %v3385
        %v3398 = vpack.c.b16 %v3388, %v3387
        %v3399 = vpack.c.b16 %v3390, %v3389
        %v3400 = vpack.c.b16 %v3392, %v3391
        %3409 = vmatprep.subr.bf16.mxu0 0
        %3410 = vmatpush1.bf16.msra.mxu0 %v3393
        %3411 = vmatprep.subr.bf16.mxu0 0
        %3412 = vmatpush1.bf16.msra.mxu0 %v3394
        %3413 = vmatprep.subr.bf16.mxu0 0
        %3414 = vmatpush1.bf16.msra.mxu0 %v3395
        %3415 = vmatprep.subr.bf16.mxu0 0
        %3416 = vmatpush1.bf16.msra.mxu0 %v3396
        %3417 = vmatprep.subr.bf16.mxu0 0
        %3418 = vmatpush1.bf16.msra.mxu0 %v3397
        %3419 = vmatprep.subr.bf16.mxu0 0
        %3420 = vmatpush1.bf16.msra.mxu0 %v3398
        %3421 = vmatprep.subr.bf16.mxu0 0
        %3422 = vmatpush1.bf16.msra.mxu0 %v3399
        %3423 = vmatprep.subr.bf16.mxu0 0
        %3424 = vmatpush1.bf16.msra.mxu0 %v3400
        %3425 = vmatprep.subr.bf16.mxu0 0
        %3426 = vmatpush1.bf16.msra.mxu0 0
        %3427 = vmatprep.subr.bf16.mxu0 0
        %3428 = vmatpush1.bf16.msra.mxu0 0
        %3429 = vmatprep.subr.bf16.mxu0 0
        %3430 = vmatpush1.bf16.msra.mxu0 0
        %3431 = vmatprep.subr.bf16.mxu0 0
        %3432 = vmatpush1.bf16.msra.mxu0 0
        %3433 = vmatprep.subr.bf16.mxu0 0
        %3434 = vmatpush1.bf16.msra.mxu0 0
        %3435 = vmatprep.subr.bf16.mxu0 0
        %3436 = vmatpush1.bf16.msra.mxu0 0
        %3437 = vmatprep.subr.bf16.mxu0 0
        %3438 = vmatpush1.bf16.msra.mxu0 0
        %3439 = vmatprep.subr.bf16.mxu0 0
        %3440 = vmatpush1.bf16.msra.mxu0 0
        %3441 = vmatprep.mubr.bf16.mxu0 0
        %3442 = vmatmul.mubr.bf16.gmra.mrb[0].mxu0 %v3337
        %v3443 = vpop.f32.mrb[0].mxu0
        %v3444 = vadd.f32 %v3359, %v3443
        %v3445 = vpop.f32.mrb[0].mxu0
        %v3446 = vpop.f32.mrb[0].mxu0
        %v3447 = vadd.f32 %v3359, %v3446
        %v3448 = vpop.f32.mrb[0].mxu0
        %3449 = vdwg.mxu0
        %3450 = vst [vmem:[%s716] sm:$0xff] %v3444
        %3451 = vst [vmem:[%s716 + $0x8] sm:$0xff] %v3447
        %p3452 = scmp.lt.s32.totalorder %s37, 3
        %s3453 = scalar_select %p3452, %s37, 3
        %s3454 = smul.addr %s3453, 2
        %s3455 = smul.addr %s3454, 8
        %s3456 = scalar_lea.vmem %s17, %s3455
        // Predicated region
        $region121: #{forward.1} parent=87 // pred_check
          %p3457 = pneg %p427
        $region122: #{forward.1} parent=87 // pred_check_branch
          %3459 = sbr.rel (%p3457) target = $region124
        $region123: #{forward.1} parent=87 // pred_region
          _
        $region124: #{forward.1} parent=87 // pred_fallthru
          _
      $region88: #{forward.1} parent=5 // pred_fallthru
        _
      %p3460 = scmp.le.s32.totalorder 2, %s32
      // Predicated region
      $region125: #{forward.1} parent=5 // pred_check
        %p3461 = pneg %p3460
      $region126: #{forward.1} parent=5 // pred_check_branch
        %3463 = sbr.rel (%p3461) target = $region128
      $region127: #{forward.1} parent=5 // pred_region
        %s3464 = ssub.s32 %s32, 2
        // Predicated region
        $region129: #{forward.1} parent=127 // pred_check
          %p3465 = pneg %p433
        $region130: #{forward.1} parent=127 // pred_check_branch
          %3467 = sbr.rel (%p3465) target = $region132
        $region131: #{forward.1} parent=127 // pred_region
          %p3468 = scmp.lt.s32.totalorder %s38, 3
          %s3469 = scalar_select %p3468, %s38, 3
          %s3470 = smul.addr %s3469, 2
          %s3471 = smul.addr %s3470, 8
          %s3472 = scalar_lea.vmem %s17, %s3471
        $region132: #{forward.1} parent=127 // pred_fallthru
          _
      $region128: #{forward.1} parent=5 // pred_fallthru
        _
    $region6: #{forward.1} parent=1 // loop_footer
      %s36 = sadd.s32 1, %s32
    $region7: #{forward.1} parent=1 // loop_footer_branch
      %31 = sbr.rel target = $region3
    $region8: #{forward.1} parent=1 // loop_exit
      _
    %3473 = vsyncpa [#allocation3], 1
    %s3474 = scalar_lea.sflag [#allocation3], 1
    %3475 = vsyncpa %s3474, 1
    %3476 = vsyncpa [#allocation5], 1
    %s3477 = scalar_lea.sflag [#allocation5], 1
    %3478 = vsyncpa %s3477, 1
    %3479 = vsyncpa [#allocation8], 1
    %3480 = vsyncpa [#allocation11], 1
    %3481 = vsyncpa [#allocation14], 1

</llo_original>
